<compile_context>
chip_gen: v5e
topology: v5e:2x2
jax: 0.10.0
libtpu: 0.0.40
codegen_flags: <defaults>
</compile_context>

<pallas_src>
import functools

import jax
import jax.numpy as jnp
from jax.experimental import pallas as pl
from jax.experimental.pallas import tpu as pltpu


# ----------------------------------------------------------------------------
# Pallas kernels
# ----------------------------------------------------------------------------
def _gemm_fused_kernel(*refs, activation, has_bias, compute_stats):
    """Per (parity, M-tile): Y^T = W^T @ P, fused bias/activation, BN partials."""
    if has_bias:
        w_ref, p_ref, b_ref = refs[:3]
        outs = refs[3:]
    else:
        w_ref, p_ref = refs[:2]
        b_ref = None
        outs = refs[2:]
    if compute_stats:
        o_ref, sum_ref, sq_ref = outs
    else:
        (o_ref,) = outs

    # (Cp, Kp) @ (Kp, TM) -> (Cp, TM); f32 operands, f32 accumulation.
    y = jnp.dot(w_ref[0], p_ref[0], preferred_element_type=jnp.float32)
    if has_bias:
        y = y + b_ref[...]                       # (Cp, 1) broadcast over lanes
    if activation == "relu":
        y = jnp.maximum(y, 0.0)
    elif activation == "tanh":
        y = jnp.tanh(y)
    o_ref[0] = y.astype(o_ref.dtype)

    if compute_stats:
        # Per-tile partials (each grid point owns its output block) keep both
        # grid axes "parallel".  Padded channels / lanes are exact zeros (no
        # bias on BN layers), so they contribute nothing.
        sum_ref[0, 0] = jnp.sum(y, axis=1, keepdims=True)
        sq_ref[0, 0] = jnp.sum(y * y, axis=1, keepdims=True)


def _bn_relu_kernel(y_ref, scale_ref, shift_ref, o_ref):
    y = y_ref[0]
    o_ref[0] = jnp.maximum(y * scale_ref[...] + shift_ref[...], 0.0
                           ).astype(o_ref.dtype)


# ----------------------------------------------------------------------------
# Pallas wrappers
# ----------------------------------------------------------------------------
def _ceil_to(x, m):
    return ((x + m - 1) // m) * m


_VMEM_LIMIT = 32 * 1024 * 1024   # explicit: v5e's scoped default is only 16 MiB


def fused_gemm_parity(wT, patches, bias=None, *, activation="none",
                      compute_stats=False, tm_cap=2048):
    """Parity-fused GEMM: Y[p] = act(W[p]^T @ P[p] + b), optional BN partials.

    wT: (P, C, K), patches: (P, K, M).  Returns y (P, Cp, Mp) f32 (padded) and,
    if compute_stats, per-channel sum and sum-of-squares of shape (Cp,).
    """
    P, C, Kd = wT.shape
    P2, K2, M = patches.shape
    assert P == P2 and Kd == K2
    Cp = _ceil_to(C, 8)                  # channels on sublanes (pad to 8)
    Kp = _ceil_to(Kd, 8)
    TM = min(_ceil_to(M, 128), tm_cap)   # lane-dense M tiles
    Mp = _ceil_to(M, TM)
    n_m = Mp // TM

    wTp = jnp.pad(wT, ((0, 0), (0, Cp - C), (0, Kp - Kd))).astype(jnp.float32)
    pp = jnp.pad(patches, ((0, 0), (0, Kp - Kd), (0, Mp - M))).astype(jnp.float32)

    inputs = [wTp, pp]
    in_specs = [
        pl.BlockSpec((1, Cp, Kp), lambda p, j: (p, 0, 0)),   # full-K resident
        pl.BlockSpec((1, Kp, TM), lambda p, j: (p, 0, j)),
    ]
    has_bias = bias is not None
    if has_bias:
        bp = jnp.pad(bias, ((0, Cp - C),)).reshape(Cp, 1).astype(jnp.float32)
        inputs.append(bp)
        in_specs.append(pl.BlockSpec((Cp, 1), lambda p, j: (0, 0)))

    out_shape = [jax.ShapeDtypeStruct((P, Cp, Mp), jnp.float32)]
    out_specs = [pl.BlockSpec((1, Cp, TM), lambda p, j: (p, 0, j))]
    if compute_stats:
        out_shape += [jax.ShapeDtypeStruct((P, n_m, Cp, 1), jnp.float32)] * 2
        out_specs += [pl.BlockSpec((1, 1, Cp, 1), lambda p, j: (p, j, 0, 0))] * 2

    kernel = functools.partial(_gemm_fused_kernel, activation=activation,
                               has_bias=has_bias, compute_stats=compute_stats)
    res = pl.pallas_call(
        kernel,
        out_shape=tuple(out_shape),
        grid_spec=pltpu.PrefetchScalarGridSpec(
            num_scalar_prefetch=0,
            grid=(P, n_m),
            in_specs=in_specs,
            out_specs=tuple(out_specs),
        ),
        compiler_params=pltpu.CompilerParams(
            dimension_semantics=("parallel", "parallel"),
            vmem_limit_bytes=_VMEM_LIMIT),
    )(*inputs)

    if compute_stats:
        y, s, q = res
        return y, jnp.sum(s, axis=(0, 1))[:, 0], jnp.sum(q, axis=(0, 1))[:, 0]
    return res[0]


def bn_relu_apply_parity(y, scale, shift):
    """y: (P, Cp, Mp) parity-major; per-channel scale/shift on sublanes."""
    P, Cp, Mp = y.shape
    TM = Mp if Mp <= 2048 else 2048          # Mp is a multiple of 2048 beyond cap
    return pl.pallas_call(
        _bn_relu_kernel,
        out_shape=jax.ShapeDtypeStruct((P, Cp, Mp), y.dtype),
        grid_spec=pltpu.PrefetchScalarGridSpec(
            num_scalar_prefetch=0,
            grid=(P, Mp // TM),
            in_specs=[pl.BlockSpec((1, Cp, TM), lambda p, j: (p, 0, j)),
                      pl.BlockSpec((Cp, 1), lambda p, j: (0, 0)),
                      pl.BlockSpec((Cp, 1), lambda p, j: (0, 0))],
            out_specs=pl.BlockSpec((1, Cp, TM), lambda p, j: (p, 0, j)),
        ),
        compiler_params=pltpu.CompilerParams(
            dimension_semantics=("parallel", "parallel"),
            vmem_limit_bytes=_VMEM_LIMIT),
    )(y, scale.reshape(Cp, 1).astype(jnp.float32),
      shift.reshape(Cp, 1).astype(jnp.float32))


# ----------------------------------------------------------------------------
# Glue: sub-pixel ConvTranspose2d decomposition (pure data movement)
# ----------------------------------------------------------------------------
def _parity_taps(K, stride, pad, H, W):
    """Per output parity (dy, dx): kernel taps (strided sets) and input shifts."""
    Ho = (H - 1) * stride - 2 * pad + K
    Wo = (W - 1) * stride - 2 * pad + K
    taps = []
    for dy in range(stride):
        kh = list(range((dy + pad) % stride, K, stride))
        eh = [(dy + pad - k) // stride for k in kh]
        Hp = -(-(Ho - dy) // stride)
        for dx in range(stride):
            kw = list(range((dx + pad) % stride, K, stride))
            ew = [(dx + pad - k) // stride for k in kw]
            Wp = -(-(Wo - dx) // stride)
            taps.append((dy, dx, kh, kw, eh, ew, Hp, Wp))
    return taps, Ho, Wo


def _build_patches_all(x, taps):
    """x: (Cp_in, N, H, W) -> stacked per-parity patches (P, ntaps*Cp_in, M).

    All parities of a layer share (ntaps, Hp, Wp).
    TODO(synk): fold this im2col gather into the GEMM kernel (activation
    resident in VMEM, shifted views via in-kernel static slices).
    """
    Cp, N, H, W = x.shape
    Hp, Wp = taps[0][6], taps[0][7]
    all_eh = [e for t in taps for e in t[4]]
    all_ew = [e for t in taps for e in t[5]]
    lo_h = max(0, -min(all_eh))
    hi_h = max(0, max(all_eh) + Hp - H)
    lo_w = max(0, -min(all_ew))
    hi_w = max(0, max(all_ew) + Wp - W)
    xp = jnp.pad(x, ((0, 0), (0, 0), (lo_h, hi_h), (lo_w, hi_w)))
    per_parity = []
    for (_dy, _dx, _kh, _kw, eh, ew, _Hp, _Wp) in taps:
        slabs = [xp[:, :, lo_h + a:lo_h + a + Hp, lo_w + b:lo_w + b + Wp]
                 for a in eh for b in ew]
        per_parity.append(
            jnp.concatenate([s.reshape(Cp, N * Hp * Wp) for s in slabs], axis=0))
    return jnp.stack(per_parity, axis=0)


def _parity_weights_all(wp, taps, stride):
    """wp: (Cp_in, Cp_out, K, K) -> stacked GEMM LHS W^T (P, Cp_out, ntaps*Cp_in)."""
    Cp_out = wp.shape[1]
    mats = []
    for (_dy, _dx, kh, kw, _eh, _ew, _Hp, _Wp) in taps:
        ws = wp[:, :, kh[0]::stride, kw[0]::stride]     # (Cin_p, Cout_p, nth, ntw)
        ws = jnp.transpose(ws, (2, 3, 0, 1))            # (nth, ntw, Cin_p, Cout_p)
        mats.append(ws.reshape(-1, Cp_out).T)           # (Cout_p, Kdim)
    return jnp.stack(mats, axis=0)


# (stride, padding, has_batchnorm, activation) for the 5 ConvTranspose2d layers
CONV_CFG = [
    (1, 0, False, "relu"),
    (2, 1, True, "relu"),
    (2, 1, True, "relu"),
    (2, 1, True, "relu"),
    (2, 1, False, "tanh"),
]
_BN_EPS = 1e-5


def _convt_layer(x, layer, stride, pad, has_bn, act):
    """x channel-major (Cp_in, N, H, W) f32, channels zero-padded to mult-of-8."""
    Cp_in, N, H, W = x.shape
    w = layer["w"]                                  # (Cin, Cout, K, K)
    Cin, Cout, K, _ = w.shape
    Cp_out = _ceil_to(Cout, 8)
    wp = jnp.pad(w, ((0, Cp_in - Cin), (0, Cp_out - Cout), (0, 0), (0, 0)))

    taps, Ho, Wo = _parity_taps(K, stride, pad, H, W)
    Hp, Wp = taps[0][6], taps[0][7]
    M = N * Hp * Wp

    wT = _parity_weights_all(wp, taps, stride)      # (P, Cp_out, Kdim)
    patches = _build_patches_all(x, taps)           # (P, Kdim, M)

    if has_bn:
        # Conv bias dropped: cancelled exactly by training-mode BN mean subtraction.
        y, ssum, ssq = fused_gemm_parity(wT, patches, None,
                                         activation="none", compute_stats=True)
        count = float(N * Ho * Wo)
        mean = ssum / count
        # TODO(synk): one-pass E[x^2]-E[x]^2 can cancel for large per-channel
        # means; switch to a two-pass variance if activation scales grow.
        var = ssq / count - mean * mean
        inv_std = jax.lax.rsqrt(var + _BN_EPS)
        gamma = jnp.pad(layer["gamma"], ((0, Cp_out - Cout),))
        beta = jnp.pad(layer["beta"], ((0, Cp_out - Cout),))
        scale = gamma * inv_std
        shift = beta - mean * scale
        y = bn_relu_apply_parity(y, scale, shift)   # still parity-major / padded
    else:
        bias = jnp.pad(layer["b"], ((0, Cp_out - Cout),))
        y = fused_gemm_parity(wT, patches, bias,
                              activation=act, compute_stats=False)

    y = y[:, :, :M]                                 # drop lane padding once
    if stride == 1:
        return y.reshape(Cp_out, N, Ho, Wo)
    # Single interleave (replaces 4 strided scatter updates):
    # (dy, dx, Cp, N, Hp, Wp) -> (Cp, N, Hp, dy, Wp, dx) -> (Cp, N, Ho, Wo).
    y = y.reshape(stride, stride, Cp_out, N, Hp, Wp)
    y = jnp.transpose(y, (2, 3, 4, 0, 5, 1))
    return y.reshape(Cp_out, N, Ho, Wo)


def generator_forward(x_nchw, params):
    # NCHW -> channel-major (C, N, H, W); channels zero-padded to mult-of-8.
    x = jnp.transpose(x_nchw, (1, 0, 2, 3)).astype(jnp.float32)
    Cp = _ceil_to(x.shape[0], 8)
    x = jnp.pad(x, ((0, Cp - x.shape[0]), (0, 0), (0, 0), (0, 0)))
    for (stride, pad, has_bn, act), layer in zip(CONV_CFG, params):
        x = _convt_layer(x, layer, stride, pad, has_bn, act)
    Cout = params[-1]["w"].shape[1]
    # Single final channel slice / transpose back to NCHW.
    return jnp.transpose(x[:Cout], (1, 0, 2, 3))


# ----------------------------------------------------------------------------
# Pure-JAX f32 reference (PyTorch module semantics, training-mode BN)
# ----------------------------------------------------------------------------
def reference_forward(x_nchw, params):
    x = x_nchw
    for (stride, pad, has_bn, act), layer in zip(CONV_CFG, params):
        w = layer["w"]
        K = w.shape[-1]
        w_conv = jnp.transpose(w[:, :, ::-1, ::-1], (1, 0, 2, 3))  # OIHW
        y = jax.lax.conv_general_dilated(
            x, w_conv, window_strides=(1, 1),
            padding=[(K - 1 - pad, K - 1 - pad)] * 2,
            lhs_dilation=(stride, stride),
            dimension_numbers=("NCHW", "OIHW", "NCHW"))
        y = y + layer["b"][None, :, None, None]
        if has_bn:
            mean = jnp.mean(y, axis=(0, 2, 3), keepdims=True)
            var = jnp.mean((y - mean) ** 2, axis=(0, 2, 3), keepdims=True)
            y = (y - mean) / jnp.sqrt(var + _BN_EPS)
            y = y * layer["gamma"][None, :, None, None] \
                + layer["beta"][None, :, None, None]
            y = jnp.maximum(y, 0.0)
        elif act == "relu":
            y = jnp.maximum(y, 0.0)
        else:
            y = jnp.tanh(y)
        x = y
    return x


# ----------------------------------------------------------------------------
# Deterministic parameter init (shapes implied by Generator.__init__)
# ----------------------------------------------------------------------------
def init_params(key, noise_ch, img_ch, feat):
    chans = [noise_ch, feat * 16, feat * 8, feat * 4, feat * 2, img_ch]
    params = []
    for li in range(5):
        key, kw, kb = jax.random.split(key, 3)
        cin, cout = chans[li], chans[li + 1]
        layer = {
            "w": jax.random.normal(kw, (cin, cout, 4, 4), jnp.float32) * 0.05,
            "b": jax.random.normal(kb, (cout,), jnp.float32) * 0.05,
        }
        if CONV_CFG[li][2]:
            layer["gamma"] = jnp.ones((cout,), jnp.float32)
            layer["beta"] = jnp.zeros((cout,), jnp.float32)
        params.append(layer)
    return params


if __name__ == "__main__":
    noise_ch, img_ch, feat = 8, 3, 4
    key = jax.random.PRNGKey(0)
    kx, kp = jax.random.split(key)
    x = jax.random.normal(kx, (2, noise_ch, 1, 1), jnp.float32)
    params = init_params(kp, noise_ch, img_ch, feat)

    forward = jax.jit(generator_forward)
    out = jax.block_until_ready(forward(x, params))
    assert out.shape == (2, img_ch, 64, 64), out.shape

    ref = jax.block_until_ready(reference_forward(x, params))
    assert jnp.allclose(out, ref, rtol=2e-2, atol=2e-2), \
        float(jnp.max(jnp.abs(out - ref)))

    print("KERNEL_OK")
</pallas_src>

<mosaic_0001>
module attributes {stable_mosaic.version = 11 : i64} {
  func.func @_gemm_fused_kernel(%arg0: i32, %arg1: i32, %arg2: memref<1x64x128xf32, #tpu.memory_space<vmem>>, %arg3: memref<1x128x128xf32, #tpu.memory_space<vmem>>, %arg4: memref<64x1xf32, #tpu.memory_space<vmem>>, %arg5: memref<1x64x128xf32, #tpu.memory_space<vmem>>) attributes {dimension_semantics = [#tpu.dimension_semantics<parallel>, #tpu.dimension_semantics<parallel>], iteration_bounds = array<i64: 1, 1>, scalar_prefetch = 0 : i64, scratch_operands = 0 : i64, tpu.core_type = #tpu.core_type<tc>, window_params = [{transform_indices = @transform_0, window_bounds = array<i64: 1, 64, 128>}, {transform_indices = @transform_1, window_bounds = array<i64: 1, 128, 128>}, {pipeline_mode = #tpu.pipeline_mode<synchronous>, transform_indices = @transform_2, window_bounds = array<i64: 64, 1>}, {transform_indices = @transform_3, window_bounds = array<i64: 1, 64, 128>}]} {
    %c0 = arith.constant 0 : index
    %c0_0 = arith.constant 0 : index
    %c0_1 = arith.constant 0 : index
    %0 = vector.load %arg2[%c0, %c0_0, %c0_1] : memref<1x64x128xf32, #tpu.memory_space<vmem>>, vector<1x64x128xf32>
    %1 = vector.shape_cast %0 : vector<1x64x128xf32> to vector<64x128xf32>
    %c0_2 = arith.constant 0 : index
    %c0_3 = arith.constant 0 : index
    %c0_4 = arith.constant 0 : index
    %2 = vector.load %arg3[%c0_2, %c0_3, %c0_4] : memref<1x128x128xf32, #tpu.memory_space<vmem>>, vector<1x128x128xf32>
    %3 = vector.shape_cast %2 : vector<1x128x128xf32> to vector<128x128xf32>
    %cst = arith.constant dense<0.000000e+00> : vector<64x128xf32>
    %4 = tpu.matmul %1, %3, %cst {dimension_numbers = #tpu.dot_dimension_numbers<[1], [0], [0], [1], [0, 0, 1, 1], [], []>} : vector<64x128xf32>, vector<128x128xf32>, vector<64x128xf32> -> vector<64x128xf32>
    %c0_5 = arith.constant 0 : index
    %c0_6 = arith.constant 0 : index
    %5 = vector.load %arg4[%c0_5, %c0_6] : memref<64x1xf32, #tpu.memory_space<vmem>>, vector<64x1xf32>
    %6 = vector.broadcast %5 : vector<64x1xf32> to vector<64x128xf32>
    %7 = arith.addf %4, %6 : vector<64x128xf32>
    %cst_7 = arith.constant 0.000000e+00 : f32
    %8 = vector.broadcast %cst_7 : f32 to vector<64x128xf32>
    %9 = arith.maximumf %7, %8 : vector<64x128xf32>
    %c0_8 = arith.constant 0 : index
    %c0_9 = arith.constant 0 : index
    %c0_10 = arith.constant 0 : index
    %10 = vector.load %arg5[%c0_8, %c0_9, %c0_10] : memref<1x64x128xf32, #tpu.memory_space<vmem>>, vector<1x64x128xf32>
    %11 = vector.shape_cast %10 : vector<1x64x128xf32> to vector<64x128xf32>
    %12 = vector.shape_cast %9 : vector<64x128xf32> to vector<1x64x128xf32>
    tpu.vector_store %arg5[%c0_8, %c0_9, %c0_10], %12 {strides = array<i32>} : memref<1x64x128xf32, #tpu.memory_space<vmem>>, vector<1x64x128xf32>,
    return
  }
  func.func @transform_0(%arg0: i32, %arg1: i32) -> (i32, i32, i32) {
    %c0_i32 = arith.constant 0 : i32
    %c0_i32_0 = arith.constant 0 : i32
    %c0_i32_1 = arith.constant 0 : i32
    return %arg0, %c0_i32, %c0_i32_0 : i32, i32, i32
  }
  func.func @transform_1(%arg0: i32, %arg1: i32) -> (i32, i32, i32) {
    %c0_i32 = arith.constant 0 : i32
    %c0_i32_0 = arith.constant 0 : i32
    return %arg0, %c0_i32, %arg1 : i32, i32, i32
  }
  func.func @transform_2(%arg0: i32, %arg1: i32) -> (i32, i32) {
    %c0_i32 = arith.constant 0 : i32
    %c0_i32_0 = arith.constant 0 : i32
    %c0_i32_1 = arith.constant 0 : i32
    return %c0_i32, %c0_i32_0 : i32, i32
  }
  func.func @transform_3(%arg0: i32, %arg1: i32) -> (i32, i32, i32) {
    %c0_i32 = arith.constant 0 : i32
    %c0_i32_0 = arith.constant 0 : i32
    return %arg0, %c0_i32, %arg1 : i32, i32, i32
  }
}

module attributes {stable_mosaic.version = 11 : i64} {
  func.func @_gemm_fused_kernel(%arg0: i32, %arg1: i32, %arg2: memref<1x32x256xf32, #tpu.memory_space<vmem>>, %arg3: memref<1x256x128xf32, #tpu.memory_space<vmem>>, %arg4: memref<1x32x128xf32, #tpu.memory_space<vmem>>, %arg5: memref<1x1x32x1xf32, #tpu.memory_space<vmem>>, %arg6: memref<1x1x32x1xf32, #tpu.memory_space<vmem>>) attributes {dimension_semantics = [#tpu.dimension_semantics<parallel>, #tpu.dimension_semantics<parallel>], iteration_bounds = array<i64: 4, 1>, scalar_prefetch = 0 : i64, scratch_operands = 0 : i64, tpu.core_type = #tpu.core_type<tc>, window_params = [{transform_indices = @transform_0, window_bounds = array<i64: 1, 32, 256>}, {transform_indices = @transform_1, window_bounds = array<i64: 1, 256, 128>}, {transform_indices = @transform_2, window_bounds = array<i64: 1, 32, 128>}, {transform_indices = @transform_3, window_bounds = array<i64: 1, 1, 32, 1>}, {transform_indices = @transform_4, window_bounds = array<i64: 1, 1, 32, 1>}]} {
    %c0 = arith.constant 0 : index
    %c0_0 = arith.constant 0 : index
    %c0_1 = arith.constant 0 : index
    %0 = vector.load %arg2[%c0, %c0_0, %c0_1] : memref<1x32x256xf32, #tpu.memory_space<vmem>>, vector<1x32x256xf32>
    %1 = vector.shape_cast %0 : vector<1x32x256xf32> to vector<32x256xf32>
    %c0_2 = arith.constant 0 : index
    %c0_3 = arith.constant 0 : index
    %c0_4 = arith.constant 0 : index
    %2 = vector.load %arg3[%c0_2, %c0_3, %c0_4] : memref<1x256x128xf32, #tpu.memory_space<vmem>>, vector<1x256x128xf32>
    %3 = vector.shape_cast %2 : vector<1x256x128xf32> to vector<256x128xf32>
    %cst = arith.constant dense<0.000000e+00> : vector<32x128xf32>
    %4 = tpu.matmul %1, %3, %cst {dimension_numbers = #tpu.dot_dimension_numbers<[1], [0], [0], [1], [0, 0, 1, 1], [], []>} : vector<32x256xf32>, vector<256x128xf32>, vector<32x128xf32> -> vector<32x128xf32>
    %c0_5 = arith.constant 0 : index
    %c0_6 = arith.constant 0 : index
    %c0_7 = arith.constant 0 : index
    %5 = vector.load %arg4[%c0_5, %c0_6, %c0_7] : memref<1x32x128xf32, #tpu.memory_space<vmem>>, vector<1x32x128xf32>
    %6 = vector.shape_cast %5 : vector<1x32x128xf32> to vector<32x128xf32>
    %7 = vector.shape_cast %4 : vector<32x128xf32> to vector<1x32x128xf32>
    tpu.vector_store %arg4[%c0_5, %c0_6, %c0_7], %7 {strides = array<i32>} : memref<1x32x128xf32, #tpu.memory_space<vmem>>, vector<1x32x128xf32>,
    %cst_8 = arith.constant dense<0.000000e+00> : vector<32xf32>
    %8 = vector.multi_reduction <add>, %4, %cst_8 [1] : vector<32x128xf32> to vector<32xf32>
    %9 = vector.shape_cast %8 : vector<32xf32> to vector<32x1xf32>
    %c0_9 = arith.constant 0 : index
    %c0_10 = arith.constant 0 : index
    %c0_11 = arith.constant 0 : index
    %c0_12 = arith.constant 0 : index
    %10 = vector.load %arg5[%c0_9, %c0_10, %c0_11, %c0_12] : memref<1x1x32x1xf32, #tpu.memory_space<vmem>>, vector<1x1x32x1xf32>
    %11 = vector.shape_cast %10 : vector<1x1x32x1xf32> to vector<32x1xf32>
    %12 = vector.shape_cast %9 : vector<32x1xf32> to vector<1x1x32x1xf32>
    tpu.vector_store %arg5[%c0_9, %c0_10, %c0_11, %c0_12], %12 {strides = array<i32>} : memref<1x1x32x1xf32, #tpu.memory_space<vmem>>, vector<1x1x32x1xf32>,
    %13 = arith.mulf %4, %4 : vector<32x128xf32>
    %cst_13 = arith.constant dense<0.000000e+00> : vector<32xf32>
    %14 = vector.multi_reduction <add>, %13, %cst_13 [1] : vector<32x128xf32> to vector<32xf32>
    %15 = vector.shape_cast %14 : vector<32xf32> to vector<32x1xf32>
    %c0_14 = arith.constant 0 : index
    %c0_15 = arith.constant 0 : index
    %c0_16 = arith.constant 0 : index
    %c0_17 = arith.constant 0 : index
    %16 = vector.load %arg6[%c0_14, %c0_15, %c0_16, %c0_17] : memref<1x1x32x1xf32, #tpu.memory_space<vmem>>, vector<1x1x32x1xf32>
    %17 = vector.shape_cast %16 : vector<1x1x32x1xf32> to vector<32x1xf32>
    %18 = vector.shape_cast %15 : vector<32x1xf32> to vector<1x1x32x1xf32>
    tpu.vector_store %arg6[%c0_14, %c0_15, %c0_16, %c0_17], %18 {strides = array<i32>} : memref<1x1x32x1xf32, #tpu.memory_space<vmem>>, vector<1x1x32x1xf32>,
    return
  }
  func.func @transform_0(%arg0: i32, %arg1: i32) -> (i32, i32, i32) {
    %c0_i32 = arith.constant 0 : i32
    %c0_i32_0 = arith.constant 0 : i32
    %c0_i32_1 = arith.constant 0 : i32
    return %arg0, %c0_i32, %c0_i32_0 : i32, i32, i32
  }
  func.func @transform_1(%arg0: i32, %arg1: i32) -> (i32, i32, i32) {
    %c0_i32 = arith.constant 0 : i32
    %c0_i32_0 = arith.constant 0 : i32
    return %arg0, %c0_i32, %arg1 : i32, i32, i32
  }
  func.func @transform_2(%arg0: i32, %arg1: i32) -> (i32, i32, i32) {
    %c0_i32 = arith.constant 0 : i32
    %c0_i32_0 = arith.constant 0 : i32
    return %arg0, %c0_i32, %arg1 : i32, i32, i32
  }
  func.func @transform_3(%arg0: i32, %arg1: i32) -> (i32, i32, i32, i32) {
    %c0_i32 = arith.constant 0 : i32
    %c0_i32_0 = arith.constant 0 : i32
    %c0_i32_1 = arith.constant 0 : i32
    return %arg0, %arg1, %c0_i32, %c0_i32_0 : i32, i32, i32, i32
  }
  func.func @transform_4(%arg0: i32, %arg1: i32) -> (i32, i32, i32, i32) {
    %c0_i32 = arith.constant 0 : i32
    %c0_i32_0 = arith.constant 0 : i32
    %c0_i32_1 = arith.constant 0 : i32
    return %arg0, %arg1, %c0_i32, %c0_i32_0 : i32, i32, i32, i32
  }
}

module attributes {stable_mosaic.version = 11 : i64} {
  func.func @_bn_relu_kernel(%arg0: i32, %arg1: i32, %arg2: memref<1x32x128xf32, #tpu.memory_space<vmem>>, %arg3: memref<32x1xf32, #tpu.memory_space<vmem>>, %arg4: memref<32x1xf32, #tpu.memory_space<vmem>>, %arg5: memref<1x32x128xf32, #tpu.memory_space<vmem>>) attributes {dimension_semantics = [#tpu.dimension_semantics<parallel>, #tpu.dimension_semantics<parallel>], iteration_bounds = array<i64: 4, 1>, scalar_prefetch = 0 : i64, scratch_operands = 0 : i64, tpu.core_type = #tpu.core_type<tc>, window_params = [{transform_indices = @transform_0, window_bounds = array<i64: 1, 32, 128>}, {pipeline_mode = #tpu.pipeline_mode<synchronous>, transform_indices = @transform_1, window_bounds = array<i64: 32, 1>}, {pipeline_mode = #tpu.pipeline_mode<synchronous>, transform_indices = @transform_2, window_bounds = array<i64: 32, 1>}, {transform_indices = @transform_3, window_bounds = array<i64: 1, 32, 128>}]} {
    %c0 = arith.constant 0 : index
    %c0_0 = arith.constant 0 : index
    %c0_1 = arith.constant 0 : index
    %0 = vector.load %arg2[%c0, %c0_0, %c0_1] : memref<1x32x128xf32, #tpu.memory_space<vmem>>, vector<1x32x128xf32>
    %1 = vector.shape_cast %0 : vector<1x32x128xf32> to vector<32x128xf32>
    %c0_2 = arith.constant 0 : index
    %c0_3 = arith.constant 0 : index
    %2 = vector.load %arg3[%c0_2, %c0_3] : memref<32x1xf32, #tpu.memory_space<vmem>>, vector<32x1xf32>
    %3 = vector.broadcast %2 : vector<32x1xf32> to vector<32x128xf32>
    %4 = arith.mulf %1, %3 : vector<32x128xf32>
    %c0_4 = arith.constant 0 : index
    %c0_5 = arith.constant 0 : index
    %5 = vector.load %arg4[%c0_4, %c0_5] : memref<32x1xf32, #tpu.memory_space<vmem>>, vector<32x1xf32>
    %6 = vector.broadcast %5 : vector<32x1xf32> to vector<32x128xf32>
    %7 = arith.addf %4, %6 : vector<32x128xf32>
    %cst = arith.constant 0.000000e+00 : f32
    %8 = vector.broadcast %cst : f32 to vector<32x128xf32>
    %9 = arith.maximumf %7, %8 : vector<32x128xf32>
    %c0_6 = arith.constant 0 : index
    %c0_7 = arith.constant 0 : index
    %c0_8 = arith.constant 0 : index
    %10 = vector.load %arg5[%c0_6, %c0_7, %c0_8] : memref<1x32x128xf32, #tpu.memory_space<vmem>>, vector<1x32x128xf32>
    %11 = vector.shape_cast %10 : vector<1x32x128xf32> to vector<32x128xf32>
    %12 = vector.shape_cast %9 : vector<32x128xf32> to vector<1x32x128xf32>
    tpu.vector_store %arg5[%c0_6, %c0_7, %c0_8], %12 {strides = array<i32>} : memref<1x32x128xf32, #tpu.memory_space<vmem>>, vector<1x32x128xf32>,
    return
  }
  func.func @transform_0(%arg0: i32, %arg1: i32) -> (i32, i32, i32) {
    %c0_i32 = arith.constant 0 : i32
    %c0_i32_0 = arith.constant 0 : i32
    return %arg0, %c0_i32, %arg1 : i32, i32, i32
  }
  func.func @transform_1(%arg0: i32, %arg1: i32) -> (i32, i32) {
    %c0_i32 = arith.constant 0 : i32
    %c0_i32_0 = arith.constant 0 : i32
    %c0_i32_1 = arith.constant 0 : i32
    return %c0_i32, %c0_i32_0 : i32, i32
  }
  func.func @transform_2(%arg0: i32, %arg1: i32) -> (i32, i32) {
    %c0_i32 = arith.constant 0 : i32
    %c0_i32_0 = arith.constant 0 : i32
    %c0_i32_1 = arith.constant 0 : i32
    return %c0_i32, %c0_i32_0 : i32, i32
  }
  func.func @transform_3(%arg0: i32, %arg1: i32) -> (i32, i32, i32) {
    %c0_i32 = arith.constant 0 : i32
    %c0_i32_0 = arith.constant 0 : i32
    return %arg0, %c0_i32, %arg1 : i32, i32, i32
  }
}

module attributes {stable_mosaic.version = 11 : i64} {
  func.func @_bn_relu_kernel(%arg0: i32, %arg1: i32, %arg2: memref<1x16x128xf32, #tpu.memory_space<vmem>>, %arg3: memref<16x1xf32, #tpu.memory_space<vmem>>, %arg4: memref<16x1xf32, #tpu.memory_space<vmem>>, %arg5: memref<1x16x128xf32, #tpu.memory_space<vmem>>) attributes {dimension_semantics = [#tpu.dimension_semantics<parallel>, #tpu.dimension_semantics<parallel>], iteration_bounds = array<i64: 4, 1>, scalar_prefetch = 0 : i64, scratch_operands = 0 : i64, tpu.core_type = #tpu.core_type<tc>, window_params = [{transform_indices = @transform_0, window_bounds = array<i64: 1, 16, 128>}, {pipeline_mode = #tpu.pipeline_mode<synchronous>, transform_indices = @transform_1, window_bounds = array<i64: 16, 1>}, {pipeline_mode = #tpu.pipeline_mode<synchronous>, transform_indices = @transform_2, window_bounds = array<i64: 16, 1>}, {transform_indices = @transform_3, window_bounds = array<i64: 1, 16, 128>}]} {
    %c0 = arith.constant 0 : index
    %c0_0 = arith.constant 0 : index
    %c0_1 = arith.constant 0 : index
    %0 = vector.load %arg2[%c0, %c0_0, %c0_1] : memref<1x16x128xf32, #tpu.memory_space<vmem>>, vector<1x16x128xf32>
    %1 = vector.shape_cast %0 : vector<1x16x128xf32> to vector<16x128xf32>
    %c0_2 = arith.constant 0 : index
    %c0_3 = arith.constant 0 : index
    %2 = vector.load %arg3[%c0_2, %c0_3] : memref<16x1xf32, #tpu.memory_space<vmem>>, vector<16x1xf32>
    %3 = vector.broadcast %2 : vector<16x1xf32> to vector<16x128xf32>
    %4 = arith.mulf %1, %3 : vector<16x128xf32>
    %c0_4 = arith.constant 0 : index
    %c0_5 = arith.constant 0 : index
    %5 = vector.load %arg4[%c0_4, %c0_5] : memref<16x1xf32, #tpu.memory_space<vmem>>, vector<16x1xf32>
    %6 = vector.broadcast %5 : vector<16x1xf32> to vector<16x128xf32>
    %7 = arith.addf %4, %6 : vector<16x128xf32>
    %cst = arith.constant 0.000000e+00 : f32
    %8 = vector.broadcast %cst : f32 to vector<16x128xf32>
    %9 = arith.maximumf %7, %8 : vector<16x128xf32>
    %c0_6 = arith.constant 0 : index
    %c0_7 = arith.constant 0 : index
    %c0_8 = arith.constant 0 : index
    %10 = vector.load %arg5[%c0_6, %c0_7, %c0_8] : memref<1x16x128xf32, #tpu.memory_space<vmem>>, vector<1x16x128xf32>
    %11 = vector.shape_cast %10 : vector<1x16x128xf32> to vector<16x128xf32>
    %12 = vector.shape_cast %9 : vector<16x128xf32> to vector<1x16x128xf32>
    tpu.vector_store %arg5[%c0_6, %c0_7, %c0_8], %12 {strides = array<i32>} : memref<1x16x128xf32, #tpu.memory_space<vmem>>, vector<1x16x128xf32>,
    return
  }
  func.func @transform_0(%arg0: i32, %arg1: i32) -> (i32, i32, i32) {
    %c0_i32 = arith.constant 0 : i32
    %c0_i32_0 = arith.constant 0 : i32
    return %arg0, %c0_i32, %arg1 : i32, i32, i32
  }
  func.func @transform_1(%arg0: i32, %arg1: i32) -> (i32, i32) {
    %c0_i32 = arith.constant 0 : i32
    %c0_i32_0 = arith.constant 0 : i32
    %c0_i32_1 = arith.constant 0 : i32
    return %c0_i32, %c0_i32_0 : i32, i32
  }
  func.func @transform_2(%arg0: i32, %arg1: i32) -> (i32, i32) {
    %c0_i32 = arith.constant 0 : i32
    %c0_i32_0 = arith.constant 0 : i32
    %c0_i32_1 = arith.constant 0 : i32
    return %c0_i32, %c0_i32_0 : i32, i32
  }
  func.func @transform_3(%arg0: i32, %arg1: i32) -> (i32, i32, i32) {
    %c0_i32 = arith.constant 0 : i32
    %c0_i32_0 = arith.constant 0 : i32
    return %arg0, %c0_i32, %arg1 : i32, i32, i32
  }
}

module attributes {stable_mosaic.version = 11 : i64} {
  func.func @_gemm_fused_kernel(%arg0: i32, %arg1: i32, %arg2: memref<1x16x128xf32, #tpu.memory_space<vmem>>, %arg3: memref<1x128x128xf32, #tpu.memory_space<vmem>>, %arg4: memref<1x16x128xf32, #tpu.memory_space<vmem>>, %arg5: memref<1x1x16x1xf32, #tpu.memory_space<vmem>>, %arg6: memref<1x1x16x1xf32, #tpu.memory_space<vmem>>) attributes {dimension_semantics = [#tpu.dimension_semantics<parallel>, #tpu.dimension_semantics<parallel>], iteration_bounds = array<i64: 4, 1>, scalar_prefetch = 0 : i64, scratch_operands = 0 : i64, tpu.core_type = #tpu.core_type<tc>, window_params = [{transform_indices = @transform_0, window_bounds = array<i64: 1, 16, 128>}, {transform_indices = @transform_1, window_bounds = array<i64: 1, 128, 128>}, {transform_indices = @transform_2, window_bounds = array<i64: 1, 16, 128>}, {transform_indices = @transform_3, window_bounds = array<i64: 1, 1, 16, 1>}, {transform_indices = @transform_4, window_bounds = array<i64: 1, 1, 16, 1>}]} {
    %c0 = arith.constant 0 : index
    %c0_0 = arith.constant 0 : index
    %c0_1 = arith.constant 0 : index
    %0 = vector.load %arg2[%c0, %c0_0, %c0_1] : memref<1x16x128xf32, #tpu.memory_space<vmem>>, vector<1x16x128xf32>
    %1 = vector.shape_cast %0 : vector<1x16x128xf32> to vector<16x128xf32>
    %c0_2 = arith.constant 0 : index
    %c0_3 = arith.constant 0 : index
    %c0_4 = arith.constant 0 : index
    %2 = vector.load %arg3[%c0_2, %c0_3, %c0_4] : memref<1x128x128xf32, #tpu.memory_space<vmem>>, vector<1x128x128xf32>
    %3 = vector.shape_cast %2 : vector<1x128x128xf32> to vector<128x128xf32>
    %cst = arith.constant dense<0.000000e+00> : vector<16x128xf32>
    %4 = tpu.matmul %1, %3, %cst {dimension_numbers = #tpu.dot_dimension_numbers<[1], [0], [0], [1], [0, 0, 1, 1], [], []>} : vector<16x128xf32>, vector<128x128xf32>, vector<16x128xf32> -> vector<16x128xf32>
    %c0_5 = arith.constant 0 : index
    %c0_6 = arith.constant 0 : index
    %c0_7 = arith.constant 0 : index
    %5 = vector.load %arg4[%c0_5, %c0_6, %c0_7] : memref<1x16x128xf32, #tpu.memory_space<vmem>>, vector<1x16x128xf32>
    %6 = vector.shape_cast %5 : vector<1x16x128xf32> to vector<16x128xf32>
    %7 = vector.shape_cast %4 : vector<16x128xf32> to vector<1x16x128xf32>
    tpu.vector_store %arg4[%c0_5, %c0_6, %c0_7], %7 {strides = array<i32>} : memref<1x16x128xf32, #tpu.memory_space<vmem>>, vector<1x16x128xf32>,
    %cst_8 = arith.constant dense<0.000000e+00> : vector<16xf32>
    %8 = vector.multi_reduction <add>, %4, %cst_8 [1] : vector<16x128xf32> to vector<16xf32>
    %9 = vector.shape_cast %8 : vector<16xf32> to vector<16x1xf32>
    %c0_9 = arith.constant 0 : index
    %c0_10 = arith.constant 0 : index
    %c0_11 = arith.constant 0 : index
    %c0_12 = arith.constant 0 : index
    %10 = vector.load %arg5[%c0_9, %c0_10, %c0_11, %c0_12] : memref<1x1x16x1xf32, #tpu.memory_space<vmem>>, vector<1x1x16x1xf32>
    %11 = vector.shape_cast %10 : vector<1x1x16x1xf32> to vector<16x1xf32>
    %12 = vector.shape_cast %9 : vector<16x1xf32> to vector<1x1x16x1xf32>
    tpu.vector_store %arg5[%c0_9, %c0_10, %c0_11, %c0_12], %12 {strides = array<i32>} : memref<1x1x16x1xf32, #tpu.memory_space<vmem>>, vector<1x1x16x1xf32>,
    %13 = arith.mulf %4, %4 : vector<16x128xf32>
    %cst_13 = arith.constant dense<0.000000e+00> : vector<16xf32>
    %14 = vector.multi_reduction <add>, %13, %cst_13 [1] : vector<16x128xf32> to vector<16xf32>
    %15 = vector.shape_cast %14 : vector<16xf32> to vector<16x1xf32>
    %c0_14 = arith.constant 0 : index
    %c0_15 = arith.constant 0 : index
    %c0_16 = arith.constant 0 : index
    %c0_17 = arith.constant 0 : index
    %16 = vector.load %arg6[%c0_14, %c0_15, %c0_16, %c0_17] : memref<1x1x16x1xf32, #tpu.memory_space<vmem>>, vector<1x1x16x1xf32>
    %17 = vector.shape_cast %16 : vector<1x1x16x1xf32> to vector<16x1xf32>
    %18 = vector.shape_cast %15 : vector<16x1xf32> to vector<1x1x16x1xf32>
    tpu.vector_store %arg6[%c0_14, %c0_15, %c0_16, %c0_17], %18 {strides = array<i32>} : memref<1x1x16x1xf32, #tpu.memory_space<vmem>>, vector<1x1x16x1xf32>,
    return
  }
  func.func @transform_0(%arg0: i32, %arg1: i32) -> (i32, i32, i32) {
    %c0_i32 = arith.constant 0 : i32
    %c0_i32_0 = arith.constant 0 : i32
    %c0_i32_1 = arith.constant 0 : i32
    return %arg0, %c0_i32, %c0_i32_0 : i32, i32, i32
  }
  func.func @transform_1(%arg0: i32, %arg1: i32) -> (i32, i32, i32) {
    %c0_i32 = arith.constant 0 : i32
    %c0_i32_0 = arith.constant 0 : i32
    return %arg0, %c0_i32, %arg1 : i32, i32, i32
  }
  func.func @transform_2(%arg0: i32, %arg1: i32) -> (i32, i32, i32) {
    %c0_i32 = arith.constant 0 : i32
    %c0_i32_0 = arith.constant 0 : i32
    return %arg0, %c0_i32, %arg1 : i32, i32, i32
  }
  func.func @transform_3(%arg0: i32, %arg1: i32) -> (i32, i32, i32, i32) {
    %c0_i32 = arith.constant 0 : i32
    %c0_i32_0 = arith.constant 0 : i32
    %c0_i32_1 = arith.constant 0 : i32
    return %arg0, %arg1, %c0_i32, %c0_i32_0 : i32, i32, i32, i32
  }
  func.func @transform_4(%arg0: i32, %arg1: i32) -> (i32, i32, i32, i32) {
    %c0_i32 = arith.constant 0 : i32
    %c0_i32_0 = arith.constant 0 : i32
    %c0_i32_1 = arith.constant 0 : i32
    return %arg0, %arg1, %c0_i32, %c0_i32_0 : i32, i32, i32, i32
  }
}

module attributes {stable_mosaic.version = 11 : i64} {
  func.func @_gemm_fused_kernel(%arg0: i32, %arg1: i32, %arg2: memref<1x8x64xf32, #tpu.memory_space<vmem>>, %arg3: memref<1x64x512xf32, #tpu.memory_space<vmem>>, %arg4: memref<1x8x512xf32, #tpu.memory_space<vmem>>, %arg5: memref<1x1x8x1xf32, #tpu.memory_space<vmem>>, %arg6: memref<1x1x8x1xf32, #tpu.memory_space<vmem>>) attributes {dimension_semantics = [#tpu.dimension_semantics<parallel>, #tpu.dimension_semantics<parallel>], iteration_bounds = array<i64: 4, 1>, scalar_prefetch = 0 : i64, scratch_operands = 0 : i64, tpu.core_type = #tpu.core_type<tc>, window_params = [{transform_indices = @transform_0, window_bounds = array<i64: 1, 8, 64>}, {transform_indices = @transform_1, window_bounds = array<i64: 1, 64, 512>}, {transform_indices = @transform_2, window_bounds = array<i64: 1, 8, 512>}, {transform_indices = @transform_3, window_bounds = array<i64: 1, 1, 8, 1>}, {transform_indices = @transform_4, window_bounds = array<i64: 1, 1, 8, 1>}]} {
    %c0 = arith.constant 0 : index
    %c0_0 = arith.constant 0 : index
    %c0_1 = arith.constant 0 : index
    %0 = vector.load %arg2[%c0, %c0_0, %c0_1] : memref<1x8x64xf32, #tpu.memory_space<vmem>>, vector<1x8x64xf32>
    %1 = vector.shape_cast %0 : vector<1x8x64xf32> to vector<8x64xf32>
    %c0_2 = arith.constant 0 : index
    %c0_3 = arith.constant 0 : index
    %c0_4 = arith.constant 0 : index
    %2 = vector.load %arg3[%c0_2, %c0_3, %c0_4] : memref<1x64x512xf32, #tpu.memory_space<vmem>>, vector<1x64x512xf32>
    %3 = vector.shape_cast %2 : vector<1x64x512xf32> to vector<64x512xf32>
    %cst = arith.constant dense<0.000000e+00> : vector<8x512xf32>
    %4 = tpu.matmul %1, %3, %cst {dimension_numbers = #tpu.dot_dimension_numbers<[1], [0], [0], [1], [0, 0, 1, 1], [], []>} : vector<8x64xf32>, vector<64x512xf32>, vector<8x512xf32> -> vector<8x512xf32>
    %c0_5 = arith.constant 0 : index
    %c0_6 = arith.constant 0 : index
    %c0_7 = arith.constant 0 : index
    %5 = vector.load %arg4[%c0_5, %c0_6, %c0_7] : memref<1x8x512xf32, #tpu.memory_space<vmem>>, vector<1x8x512xf32>
    %6 = vector.shape_cast %5 : vector<1x8x512xf32> to vector<8x512xf32>
    %7 = vector.shape_cast %4 : vector<8x512xf32> to vector<1x8x512xf32>
    tpu.vector_store %arg4[%c0_5, %c0_6, %c0_7], %7 {strides = array<i32>} : memref<1x8x512xf32, #tpu.memory_space<vmem>>, vector<1x8x512xf32>,
    %cst_8 = arith.constant dense<0.000000e+00> : vector<8xf32>
    %8 = vector.multi_reduction <add>, %4, %cst_8 [1] : vector<8x512xf32> to vector<8xf32>
    %9 = vector.shape_cast %8 : vector<8xf32> to vector<8x1xf32>
    %c0_9 = arith.constant 0 : index
    %c0_10 = arith.constant 0 : index
    %c0_11 = arith.constant 0 : index
    %c0_12 = arith.constant 0 : index
    %10 = vector.load %arg5[%c0_9, %c0_10, %c0_11, %c0_12] : memref<1x1x8x1xf32, #tpu.memory_space<vmem>>, vector<1x1x8x1xf32>
    %11 = vector.shape_cast %10 : vector<1x1x8x1xf32> to vector<8x1xf32>
    %12 = vector.shape_cast %9 : vector<8x1xf32> to vector<1x1x8x1xf32>
    tpu.vector_store %arg5[%c0_9, %c0_10, %c0_11, %c0_12], %12 {strides = array<i32>} : memref<1x1x8x1xf32, #tpu.memory_space<vmem>>, vector<1x1x8x1xf32>,
    %13 = arith.mulf %4, %4 : vector<8x512xf32>
    %cst_13 = arith.constant dense<0.000000e+00> : vector<8xf32>
    %14 = vector.multi_reduction <add>, %13, %cst_13 [1] : vector<8x512xf32> to vector<8xf32>
    %15 = vector.shape_cast %14 : vector<8xf32> to vector<8x1xf32>
    %c0_14 = arith.constant 0 : index
    %c0_15 = arith.constant 0 : index
    %c0_16 = arith.constant 0 : index
    %c0_17 = arith.constant 0 : index
    %16 = vector.load %arg6[%c0_14, %c0_15, %c0_16, %c0_17] : memref<1x1x8x1xf32, #tpu.memory_space<vmem>>, vector<1x1x8x1xf32>
    %17 = vector.shape_cast %16 : vector<1x1x8x1xf32> to vector<8x1xf32>
    %18 = vector.shape_cast %15 : vector<8x1xf32> to vector<1x1x8x1xf32>
    tpu.vector_store %arg6[%c0_14, %c0_15, %c0_16, %c0_17], %18 {strides = array<i32>} : memref<1x1x8x1xf32, #tpu.memory_space<vmem>>, vector<1x1x8x1xf32>,
    return
  }
  func.func @transform_0(%arg0: i32, %arg1: i32) -> (i32, i32, i32) {
    %c0_i32 = arith.constant 0 : i32
    %c0_i32_0 = arith.constant 0 : i32
    %c0_i32_1 = arith.constant 0 : i32
    return %arg0, %c0_i32, %c0_i32_0 : i32, i32, i32
  }
  func.func @transform_1(%arg0: i32, %arg1: i32) -> (i32, i32, i32) {
    %c0_i32 = arith.constant 0 : i32
    %c0_i32_0 = arith.constant 0 : i32
    return %arg0, %c0_i32, %arg1 : i32, i32, i32
  }
  func.func @transform_2(%arg0: i32, %arg1: i32) -> (i32, i32, i32) {
    %c0_i32 = arith.constant 0 : i32
    %c0_i32_0 = arith.constant 0 : i32
    return %arg0, %c0_i32, %arg1 : i32, i32, i32
  }
  func.func @transform_3(%arg0: i32, %arg1: i32) -> (i32, i32, i32, i32) {
    %c0_i32 = arith.constant 0 : i32
    %c0_i32_0 = arith.constant 0 : i32
    %c0_i32_1 = arith.constant 0 : i32
    return %arg0, %arg1, %c0_i32, %c0_i32_0 : i32, i32, i32, i32
  }
  func.func @transform_4(%arg0: i32, %arg1: i32) -> (i32, i32, i32, i32) {
    %c0_i32 = arith.constant 0 : i32
    %c0_i32_0 = arith.constant 0 : i32
    %c0_i32_1 = arith.constant 0 : i32
    return %arg0, %arg1, %c0_i32, %c0_i32_0 : i32, i32, i32, i32
  }
}

module attributes {stable_mosaic.version = 11 : i64} {
  func.func @_bn_relu_kernel(%arg0: i32, %arg1: i32, %arg2: memref<1x8x512xf32, #tpu.memory_space<vmem>>, %arg3: memref<8x1xf32, #tpu.memory_space<vmem>>, %arg4: memref<8x1xf32, #tpu.memory_space<vmem>>, %arg5: memref<1x8x512xf32, #tpu.memory_space<vmem>>) attributes {dimension_semantics = [#tpu.dimension_semantics<parallel>, #tpu.dimension_semantics<parallel>], iteration_bounds = array<i64: 4, 1>, scalar_prefetch = 0 : i64, scratch_operands = 0 : i64, tpu.core_type = #tpu.core_type<tc>, window_params = [{transform_indices = @transform_0, window_bounds = array<i64: 1, 8, 512>}, {pipeline_mode = #tpu.pipeline_mode<synchronous>, transform_indices = @transform_1, window_bounds = array<i64: 8, 1>}, {pipeline_mode = #tpu.pipeline_mode<synchronous>, transform_indices = @transform_2, window_bounds = array<i64: 8, 1>}, {transform_indices = @transform_3, window_bounds = array<i64: 1, 8, 512>}]} {
    %c0 = arith.constant 0 : index
    %c0_0 = arith.constant 0 : index
    %c0_1 = arith.constant 0 : index
    %0 = vector.load %arg2[%c0, %c0_0, %c0_1] : memref<1x8x512xf32, #tpu.memory_space<vmem>>, vector<1x8x512xf32>
    %1 = vector.shape_cast %0 : vector<1x8x512xf32> to vector<8x512xf32>
    %c0_2 = arith.constant 0 : index
    %c0_3 = arith.constant 0 : index
    %2 = vector.load %arg3[%c0_2, %c0_3] : memref<8x1xf32, #tpu.memory_space<vmem>>, vector<8x1xf32>
    %3 = vector.broadcast %2 : vector<8x1xf32> to vector<8x512xf32>
    %4 = arith.mulf %1, %3 : vector<8x512xf32>
    %c0_4 = arith.constant 0 : index
    %c0_5 = arith.constant 0 : index
    %5 = vector.load %arg4[%c0_4, %c0_5] : memref<8x1xf32, #tpu.memory_space<vmem>>, vector<8x1xf32>
    %6 = vector.broadcast %5 : vector<8x1xf32> to vector<8x512xf32>
    %7 = arith.addf %4, %6 : vector<8x512xf32>
    %cst = arith.constant 0.000000e+00 : f32
    %8 = vector.broadcast %cst : f32 to vector<8x512xf32>
    %9 = arith.maximumf %7, %8 : vector<8x512xf32>
    %c0_6 = arith.constant 0 : index
    %c0_7 = arith.constant 0 : index
    %c0_8 = arith.constant 0 : index
    %10 = vector.load %arg5[%c0_6, %c0_7, %c0_8] : memref<1x8x512xf32, #tpu.memory_space<vmem>>, vector<1x8x512xf32>
    %11 = vector.shape_cast %10 : vector<1x8x512xf32> to vector<8x512xf32>
    %12 = vector.shape_cast %9 : vector<8x512xf32> to vector<1x8x512xf32>
    tpu.vector_store %arg5[%c0_6, %c0_7, %c0_8], %12 {strides = array<i32>} : memref<1x8x512xf32, #tpu.memory_space<vmem>>, vector<1x8x512xf32>,
    return
  }
  func.func @transform_0(%arg0: i32, %arg1: i32) -> (i32, i32, i32) {
    %c0_i32 = arith.constant 0 : i32
    %c0_i32_0 = arith.constant 0 : i32
    return %arg0, %c0_i32, %arg1 : i32, i32, i32
  }
  func.func @transform_1(%arg0: i32, %arg1: i32) -> (i32, i32) {
    %c0_i32 = arith.constant 0 : i32
    %c0_i32_0 = arith.constant 0 : i32
    %c0_i32_1 = arith.constant 0 : i32
    return %c0_i32, %c0_i32_0 : i32, i32
  }
  func.func @transform_2(%arg0: i32, %arg1: i32) -> (i32, i32) {
    %c0_i32 = arith.constant 0 : i32
    %c0_i32_0 = arith.constant 0 : i32
    %c0_i32_1 = arith.constant 0 : i32
    return %c0_i32, %c0_i32_0 : i32, i32
  }
  func.func @transform_3(%arg0: i32, %arg1: i32) -> (i32, i32, i32) {
    %c0_i32 = arith.constant 0 : i32
    %c0_i32_0 = arith.constant 0 : i32
    return %arg0, %c0_i32, %arg1 : i32, i32, i32
  }
}

module attributes {stable_mosaic.version = 11 : i64} {
  func.func @_gemm_fused_kernel(%arg0: i32, %arg1: i32, %arg2: memref<1x8x32xf32, #tpu.memory_space<vmem>>, %arg3: memref<1x32x2048xf32, #tpu.memory_space<vmem>>, %arg4: memref<8x1xf32, #tpu.memory_space<vmem>>, %arg5: memref<1x8x2048xf32, #tpu.memory_space<vmem>>) attributes {dimension_semantics = [#tpu.dimension_semantics<parallel>, #tpu.dimension_semantics<parallel>], iteration_bounds = array<i64: 4, 1>, scalar_prefetch = 0 : i64, scratch_operands = 0 : i64, tpu.core_type = #tpu.core_type<tc>, window_params = [{transform_indices = @transform_0, window_bounds = array<i64: 1, 8, 32>}, {transform_indices = @transform_1, window_bounds = array<i64: 1, 32, 2048>}, {pipeline_mode = #tpu.pipeline_mode<synchronous>, transform_indices = @transform_2, window_bounds = array<i64: 8, 1>}, {transform_indices = @transform_3, window_bounds = array<i64: 1, 8, 2048>}]} {
    %c0 = arith.constant 0 : index
    %c0_0 = arith.constant 0 : index
    %c0_1 = arith.constant 0 : index
    %0 = vector.load %arg2[%c0, %c0_0, %c0_1] : memref<1x8x32xf32, #tpu.memory_space<vmem>>, vector<1x8x32xf32>
    %1 = vector.shape_cast %0 : vector<1x8x32xf32> to vector<8x32xf32>
    %c0_2 = arith.constant 0 : index
    %c0_3 = arith.constant 0 : index
    %c0_4 = arith.constant 0 : index
    %2 = vector.load %arg3[%c0_2, %c0_3, %c0_4] : memref<1x32x2048xf32, #tpu.memory_space<vmem>>, vector<1x32x2048xf32>
    %3 = vector.shape_cast %2 : vector<1x32x2048xf32> to vector<32x2048xf32>
    %cst = arith.constant dense<0.000000e+00> : vector<8x2048xf32>
    %4 = tpu.matmul %1, %3, %cst {dimension_numbers = #tpu.dot_dimension_numbers<[1], [0], [0], [1], [0, 0, 1, 1], [], []>} : vector<8x32xf32>, vector<32x2048xf32>, vector<8x2048xf32> -> vector<8x2048xf32>
    %c0_5 = arith.constant 0 : index
    %c0_6 = arith.constant 0 : index
    %5 = vector.load %arg4[%c0_5, %c0_6] : memref<8x1xf32, #tpu.memory_space<vmem>>, vector<8x1xf32>
    %6 = vector.broadcast %5 : vector<8x1xf32> to vector<8x2048xf32>
    %7 = arith.addf %4, %6 : vector<8x2048xf32>
    %8 = math.tanh %7 : vector<8x2048xf32>
    %c0_7 = arith.constant 0 : index
    %c0_8 = arith.constant 0 : index
    %c0_9 = arith.constant 0 : index
    %9 = vector.load %arg5[%c0_7, %c0_8, %c0_9] : memref<1x8x2048xf32, #tpu.memory_space<vmem>>, vector<1x8x2048xf32>
    %10 = vector.shape_cast %9 : vector<1x8x2048xf32> to vector<8x2048xf32>
    %11 = vector.shape_cast %8 : vector<8x2048xf32> to vector<1x8x2048xf32>
    tpu.vector_store %arg5[%c0_7, %c0_8, %c0_9], %11 {strides = array<i32>} : memref<1x8x2048xf32, #tpu.memory_space<vmem>>, vector<1x8x2048xf32>,
    return
  }
  func.func @transform_0(%arg0: i32, %arg1: i32) -> (i32, i32, i32) {
    %c0_i32 = arith.constant 0 : i32
    %c0_i32_0 = arith.constant 0 : i32
    %c0_i32_1 = arith.constant 0 : i32
    return %arg0, %c0_i32, %c0_i32_0 : i32, i32, i32
  }
  func.func @transform_1(%arg0: i32, %arg1: i32) -> (i32, i32, i32) {
    %c0_i32 = arith.constant 0 : i32
    %c0_i32_0 = arith.constant 0 : i32
    return %arg0, %c0_i32, %arg1 : i32, i32, i32
  }
  func.func @transform_2(%arg0: i32, %arg1: i32) -> (i32, i32) {
    %c0_i32 = arith.constant 0 : i32
    %c0_i32_0 = arith.constant 0 : i32
    %c0_i32_1 = arith.constant 0 : i32
    return %c0_i32, %c0_i32_0 : i32, i32
  }
  func.func @transform_3(%arg0: i32, %arg1: i32) -> (i32, i32, i32) {
    %c0_i32 = arith.constant 0 : i32
    %c0_i32_0 = arith.constant 0 : i32
    return %arg0, %c0_i32, %arg1 : i32, i32, i32
  }
}

</mosaic_0001>

<llo_original>
// kernel: generator_forward.8
$region0: #{generator_forward.8}
  #allocation0 [shape = 'u32[]', space=smem, size = 0x4, offset = 0x4, fixed_abs, tag = 'smem constant byte address 0x4 - core index']
  #allocation1 [shape = 'u32[72,128]{1,0:T(1,128)}', space=vmem, size = 0x9000, scoped, tag = 'internal scratch']
  %s0 = inlined_call_operand.vmem [shape: f32[1,64,128], index: 0, kind: input, shape index: {}]
  %s1 = inlined_call_operand.vmem [shape: f32[1,128,128], index: 1, kind: input, shape index: {}]
  %s2 = inlined_call_operand.vmem [shape: f32[64,1], index: 2, kind: input, shape index: {}]
  %s3 = inlined_call_operand.vmem [shape: f32[1,64,128], index: 3, kind: output, shape index: {}]
  %s4 = sld [smem:[#allocation0]]
  $region22: #{generator_forward.8} parent=0
    _
  %s6 = ssub.s32 1, %s4
  %s7 = scalar_select 0, %s6, %s4
  // Predicated region
  $region2: #{generator_forward.8} parent=0 // pred_check
    _
  $region3: #{generator_forward.8} parent=0 // pred_check_branch
    %9 = sbr.rel (0) target = $region5
  $region4: #{generator_forward.8} parent=0 // pred_region
    _
  $region5: #{generator_forward.8} parent=0 // pred_fallthru
    _
  // Predicated region
  $region6: #{generator_forward.8} parent=0 // pred_check
    _
  $region7: #{generator_forward.8} parent=0 // pred_check_branch
    %11 = sbr.rel (0) target = $region9
  $region8: #{generator_forward.8} parent=0 // pred_region
    _
  $region9: #{generator_forward.8} parent=0 // pred_fallthru
    _
  // Predicated region
  $region10: #{generator_forward.8} parent=0 // pred_check
    _
  $region11: #{generator_forward.8} parent=0 // pred_check_branch
    %13 = sbr.rel (0) target = $region13
  $region12: #{generator_forward.8} parent=0 // pred_region
    _
  $region13: #{generator_forward.8} parent=0 // pred_fallthru
    _
  %v14 = vld [vmem:[%s0] sm:$0xff]
  %v15 = vld [vmem:[%s0 + $0x8] sm:$0xff]
  %v16 = vld [vmem:[%s0 + $0x10] sm:$0xff]
  %v17 = vld [vmem:[%s0 + $0x18] sm:$0xff]
  %v18 = vld [vmem:[%s0 + $0x20] sm:$0xff]
  %v19 = vld [vmem:[%s0 + $0x28] sm:$0xff]
  %v20 = vld [vmem:[%s0 + $0x30] sm:$0xff]
  %v21 = vld [vmem:[%s0 + $0x38] sm:$0xff]
  %v22 = vld [vmem:[%s1] sm:$0xff]
  %v23 = vld [vmem:[%s1 + $0x8] sm:$0xff]
  %v24 = vld [vmem:[%s1 + $0x10] sm:$0xff]
  %v25 = vld [vmem:[%s1 + $0x18] sm:$0xff]
  %v26 = vld [vmem:[%s1 + $0x20] sm:$0xff]
  %v27 = vld [vmem:[%s1 + $0x28] sm:$0xff]
  %v28 = vld [vmem:[%s1 + $0x30] sm:$0xff]
  %v29 = vld [vmem:[%s1 + $0x38] sm:$0xff]
  %v30 = vld [vmem:[%s1 + $0x40] sm:$0xff]
  %v31 = vld [vmem:[%s1 + $0x48] sm:$0xff]
  %v32 = vld [vmem:[%s1 + $0x50] sm:$0xff]
  %v33 = vld [vmem:[%s1 + $0x58] sm:$0xff]
  %v34 = vld [vmem:[%s1 + $0x60] sm:$0xff]
  %v35 = vld [vmem:[%s1 + $0x68] sm:$0xff]
  %v36 = vld [vmem:[%s1 + $0x70] sm:$0xff]
  %v37 = vld [vmem:[%s1 + $0x78] sm:$0xff]
  %v38 = vld [vmem:[%s2] sm:$0xff]
  %v39 = vld [vmem:[%s2 + $0x8] sm:$0xff]
  %v40 = vld [vmem:[%s2 + $0x10] sm:$0xff]
  %v41 = vld [vmem:[%s2 + $0x18] sm:$0xff]
  %v42 = vld [vmem:[%s2 + $0x20] sm:$0xff]
  %v43 = vld [vmem:[%s2 + $0x28] sm:$0xff]
  %v44 = vld [vmem:[%s2 + $0x30] sm:$0xff]
  %v45 = vld [vmem:[%s2 + $0x38] sm:$0xff]
  %47 = vset.pattern.permute.xlu0 0
  %48 = vperm.xlu0 %47, %v38
  %v49 = vpop.permute.xlu0 %48
  %52 = vset.pattern.permute.xlu0 0
  %53 = vperm.xlu0 %52, %v39
  %v54 = vpop.permute.xlu0 %53
  %57 = vset.pattern.permute.xlu0 0
  %58 = vperm.xlu0 %57, %v40
  %v59 = vpop.permute.xlu0 %58
  %62 = vset.pattern.permute.xlu0 0
  %63 = vperm.xlu0 %62, %v41
  %v64 = vpop.permute.xlu0 %63
  %67 = vset.pattern.permute.xlu0 0
  %68 = vperm.xlu0 %67, %v42
  %v69 = vpop.permute.xlu0 %68
  %72 = vset.pattern.permute.xlu0 0
  %73 = vperm.xlu0 %72, %v43
  %v74 = vpop.permute.xlu0 %73
  %77 = vset.pattern.permute.xlu0 0
  %78 = vperm.xlu0 %77, %v44
  %v79 = vpop.permute.xlu0 %78
  %82 = vset.pattern.permute.xlu0 0
  %83 = vperm.xlu0 %82, %v45
  %v84 = vpop.permute.xlu0 %83
  %86 = vmatpush.msra.mxu0 %v37
  %87 = vmatpush.msra.mxu0 %v36
  %88 = vmatpush.msra.mxu0 %v35
  %89 = vmatpush.msra.mxu0 %v34
  %90 = vmatpush.msra.mxu0 %v33
  %91 = vmatpush.msra.mxu0 %v32
  %92 = vmatpush.msra.mxu0 %v31
  %93 = vmatpush.msra.mxu0 %v30
  %94 = vmatpush.msra.mxu0 %v29
  %95 = vmatpush.msra.mxu0 %v28
  %96 = vmatpush.msra.mxu0 %v27
  %97 = vmatpush.msra.mxu0 %v26
  %98 = vmatpush.msra.mxu0 %v25
  %99 = vmatpush.msra.mxu0 %v24
  %100 = vmatpush.msra.mxu0 %v23
  %101 = vmatpush.msra.mxu0 %v22
  %102 = vmatmul.f32.gmra.mxu0 %v14
  %v103 = vpop.f32.mrf.mxu0
  %v104 = vadd.f32 %v49, %v103
  %105 = vmatmul.f32.gmra.mxu0 %v15
  %v106 = vpop.f32.mrf.mxu0
  %v107 = vadd.f32 %v54, %v106
  %108 = vmatmul.f32.gmra.mxu0 %v16
  %v109 = vpop.f32.mrf.mxu0
  %v110 = vadd.f32 %v59, %v109
  %111 = vmatmul.f32.gmra.mxu0 %v17
  %v112 = vpop.f32.mrf.mxu0
  %v113 = vadd.f32 %v64, %v112
  %114 = vmatmul.f32.gmra.mxu0 %v18
  %v115 = vpop.f32.mrf.mxu0
  %v116 = vadd.f32 %v69, %v115
  %117 = vmatmul.f32.gmra.mxu0 %v19
  %v118 = vpop.f32.mrf.mxu0
  %v119 = vadd.f32 %v74, %v118
  %120 = vmatmul.f32.gmra.mxu0 %v20
  %v121 = vpop.f32.mrf.mxu0
  %v122 = vadd.f32 %v79, %v121
  %123 = vmatmul.f32.gmra.mxu0 %v21
  %v124 = vpop.f32.mrf.mxu0
  %v125 = vadd.f32 %v84, %v124
  %126 = vdwg.mxu0
  %v127 = vmax.f32 %v104, 0.0
  %v128 = vmax.f32 %v107, 0.0
  %v129 = vmax.f32 %v110, 0.0
  %v130 = vmax.f32 %v113, 0.0
  %v131 = vmax.f32 %v116, 0.0
  %v132 = vmax.f32 %v119, 0.0
  %v133 = vmax.f32 %v122, 0.0
  %v134 = vmax.f32 %v125, 0.0
  %135 = vst [vmem:[%s3] sm:$0xff] %v127
  %136 = vst [vmem:[%s3 + $0x8] sm:$0xff] %v128
  %137 = vst [vmem:[%s3 + $0x10] sm:$0xff] %v129
  %138 = vst [vmem:[%s3 + $0x18] sm:$0xff] %v130
  %139 = vst [vmem:[%s3 + $0x20] sm:$0xff] %v131
  %140 = vst [vmem:[%s3 + $0x28] sm:$0xff] %v132
  %141 = vst [vmem:[%s3 + $0x30] sm:$0xff] %v133
  %142 = vst [vmem:[%s3 + $0x38] sm:$0xff] %v134
  // Predicated region
  $region14: #{generator_forward.8} parent=0 // pred_check
    _
  $region15: #{generator_forward.8} parent=0 // pred_check_branch
    %144 = sbr.rel (0) target = $region17
  $region16: #{generator_forward.8} parent=0 // pred_region
    _
  $region17: #{generator_forward.8} parent=0 // pred_fallthru
    _
  // Predicated region
  $region18: #{generator_forward.8} parent=0 // pred_check
    _
  $region19: #{generator_forward.8} parent=0 // pred_check_branch
    %146 = sbr.rel (0) target = $region21
  $region20: #{generator_forward.8} parent=0 // pred_region
    _
  $region21: #{generator_forward.8} parent=0 // pred_fallthru
    _

// kernel: generator_forward.9
$region0: #{generator_forward.9}
  #allocation0 [shape = 'u32[]', space=smem, size = 0x4, offset = 0x4, fixed_abs, tag = 'smem constant byte address 0x4 - core index']
  #allocation1 [shape = 'u32[72,128]{1,0:T(1,128)}', space=vmem, size = 0x9000, scoped, tag = 'internal scratch']
  %s0 = inlined_call_operand.vmem [shape: f32[4,32,256], index: 0, kind: input, shape index: {}]
  %s1 = inlined_call_operand.vmem [shape: f32[4,256,128], index: 1, kind: input, shape index: {}]
  %s2 = inlined_call_operand.vmem [shape: f32[4,32,128], index: 2, kind: output, shape index: {0}]
  %s3 = inlined_call_operand.vmem [shape: f32[4,1,32,1], index: 3, kind: output, shape index: {1}]
  %s4 = inlined_call_operand.vmem [shape: f32[4,1,32,1], index: 4, kind: output, shape index: {2}]
  %5 = xla_tuple %s2, %s3, %s4
  %s6 = sld [smem:[#allocation0]]
  $region57: #{generator_forward.9} parent=0
    _
  %s8 = ssub.s32 1, %s6
  %s9 = scalar_select 0, %s8, %s6
  loop: start=0, step=1, limit=6
  $region2: #{generator_forward.9} parent=0 // loop_pre_header
    _
  $region3: #{generator_forward.9} parent=0 // loop_header
    %s11 = sphi 0, %s15
    %p12 = scmp.ge.s32.totalorder %s11, 6
    %s18 = sphi 0, %s30
    %s19 = sphi 0, %s26
    %s20 = sphi 0, %s18
    %s21 = sphi 0, %s19
    %s22 = sphi 0, %s20
    %s23 = sphi 0, %s21
    %s33 = sphi 0, %s35
    %s36 = sphi 0, %s33
    %s37 = sphi 0, %s36
    %s53 = sphi 0, %s37
    %s61 = sphi 0, %s63
    %s64 = sphi 0, %s61
    %s65 = sphi 0, %s64
    %s81 = sphi 0, %s65
    %s89 = sphi 0, %s91
    %s92 = sphi 0, %s89
    %s93 = sphi 0, %s92
    %s109 = sphi 0, %s93
    %s117 = sphi 0, %s119
    %s120 = sphi 0, %s117
    %s121 = sphi 0, %s120
    %s137 = sphi 0, %s121
    %s145 = sphi 0, %s147
    %s148 = sphi 0, %s145
    %s149 = sphi 0, %s148
    %s165 = sphi 0, %s149
  $region4: #{generator_forward.9} parent=0 // loop_header_branch
    %14 = sbr.rel (%p12) target = $region8
  $region5: #{generator_forward.9} parent=0 // loop_body
    %s16 = ssub.s32 %s11, 1
    %s17 = ssub.s32 %s11, 2
    %s24 = sadd.s32 1, %s19
    %p25 = scmp.ge.s32.totalorder %s24, 1
    %s26 = scalar_select %p25, 0, %s24
    %s27 = sadd.s32 1, %s18
    %s28 = scalar_select %p25, %s27, %s18
    %p29 = scmp.ge.s32.totalorder %s28, 4
    %s30 = scalar_select %p29, 0, %s28
    %s31 = ssub.s32 %s18, %s30
    %p32 = scmp.eq.s32.totalorder %s31, 0
    %s34 = sadd.s32 %s33, 1
    %s35 = scalar_select %p32, %s33, %s34
    %p38 = pneg %p32
    %p39 = scmp.eq.s32.totalorder %s11, 3
    %p40 = por %p38, %p39
    %p41 = scmp.ne.s32.totalorder %s33, %s36
    %p42 = scmp.eq.s32.totalorder %s11, 0
    %p43 = por %p41, %p42
    %p44 = scmp.ne.s32.totalorder %s33, %s36
    %p45 = scmp.eq.s32.totalorder %s16, 3
    %p46 = por %p44, %p45
    %p47 = scmp.ne.s32.totalorder %s36, %s37
    %p48 = scmp.eq.s32.totalorder %s16, 0
    %p49 = por %p47, %p48
    %p50 = scmp.ne.s32.totalorder %s36, %s37
    %p51 = scmp.eq.s32.totalorder %s17, 3
    %p52 = por %p50, %p51
    %p54 = scmp.ne.s32.totalorder %s37, %s53
    %p55 = scmp.eq.s32.totalorder %s17, 0
    %p56 = por %p54, %p55
    %s57 = ssub.s32 %s18, %s30
    %s58 = ssub.s32 %s19, %s26
    %s59 = sor.u32 %s57, %s58
    %p60 = scmp.eq.s32.totalorder %s59, 0
    %s62 = sadd.s32 %s61, 1
    %s63 = scalar_select %p60, %s61, %s62
    %p66 = pneg %p60
    %p67 = scmp.eq.s32.totalorder %s11, 3
    %p68 = por %p66, %p67
    %p69 = scmp.ne.s32.totalorder %s61, %s64
    %p70 = scmp.eq.s32.totalorder %s11, 0
    %p71 = por %p69, %p70
    %p72 = scmp.ne.s32.totalorder %s61, %s64
    %p73 = scmp.eq.s32.totalorder %s16, 3
    %p74 = por %p72, %p73
    %p75 = scmp.ne.s32.totalorder %s64, %s65
    %p76 = scmp.eq.s32.totalorder %s16, 0
    %p77 = por %p75, %p76
    %p78 = scmp.ne.s32.totalorder %s64, %s65
    %p79 = scmp.eq.s32.totalorder %s17, 3
    %p80 = por %p78, %p79
    %p82 = scmp.ne.s32.totalorder %s65, %s81
    %p83 = scmp.eq.s32.totalorder %s17, 0
    %p84 = por %p82, %p83
    %s85 = ssub.s32 %s18, %s30
    %s86 = ssub.s32 %s19, %s26
    %s87 = sor.u32 %s85, %s86
    %p88 = scmp.eq.s32.totalorder %s87, 0
    %s90 = sadd.s32 %s89, 1
    %s91 = scalar_select %p88, %s89, %s90
    %p94 = pneg %p88
    %p95 = scmp.eq.s32.totalorder %s11, 3
    %p96 = por %p94, %p95
    %p97 = scmp.ne.s32.totalorder %s89, %s92
    %p98 = scmp.eq.s32.totalorder %s11, 0
    %p99 = por %p97, %p98
    %p100 = scmp.ne.s32.totalorder %s89, %s92
    %p101 = scmp.eq.s32.totalorder %s16, 3
    %p102 = por %p100, %p101
    %p103 = scmp.ne.s32.totalorder %s92, %s93
    %p104 = scmp.eq.s32.totalorder %s16, 0
    %p105 = por %p103, %p104
    %p106 = scmp.ne.s32.totalorder %s92, %s93
    %p107 = scmp.eq.s32.totalorder %s17, 3
    %p108 = por %p106, %p107
    %p110 = scmp.ne.s32.totalorder %s93, %s109
    %p111 = scmp.eq.s32.totalorder %s17, 0
    %p112 = por %p110, %p111
    %s113 = ssub.s32 %s18, %s30
    %s114 = ssub.s32 %s19, %s26
    %s115 = sor.u32 %s113, %s114
    %p116 = scmp.eq.s32.totalorder %s115, 0
    %s118 = sadd.s32 %s117, 1
    %s119 = scalar_select %p116, %s117, %s118
    %p122 = pneg %p116
    %p123 = scmp.eq.s32.totalorder %s11, 3
    %p124 = por %p122, %p123
    %p125 = scmp.ne.s32.totalorder %s117, %s120
    %p126 = scmp.eq.s32.totalorder %s11, 0
    %p127 = por %p125, %p126
    %p128 = scmp.ne.s32.totalorder %s117, %s120
    %p129 = scmp.eq.s32.totalorder %s16, 3
    %p130 = por %p128, %p129
    %p131 = scmp.ne.s32.totalorder %s120, %s121
    %p132 = scmp.eq.s32.totalorder %s16, 0
    %p133 = por %p131, %p132
    %p134 = scmp.ne.s32.totalorder %s120, %s121
    %p135 = scmp.eq.s32.totalorder %s17, 3
    %p136 = por %p134, %p135
    %p138 = scmp.ne.s32.totalorder %s121, %s137
    %p139 = scmp.eq.s32.totalorder %s17, 0
    %p140 = por %p138, %p139
    %s141 = ssub.s32 %s18, %s30
    %s142 = ssub.s32 %s19, %s26
    %s143 = sor.u32 %s141, %s142
    %p144 = scmp.eq.s32.totalorder %s143, 0
    %s146 = sadd.s32 %s145, 1
    %s147 = scalar_select %p144, %s145, %s146
    %p150 = pneg %p144
    %p151 = scmp.eq.s32.totalorder %s11, 3
    %p152 = por %p150, %p151
    %p153 = scmp.ne.s32.totalorder %s145, %s148
    %p154 = scmp.eq.s32.totalorder %s11, 0
    %p155 = por %p153, %p154
    %p156 = scmp.ne.s32.totalorder %s145, %s148
    %p157 = scmp.eq.s32.totalorder %s16, 3
    %p158 = por %p156, %p157
    %p159 = scmp.ne.s32.totalorder %s148, %s149
    %p160 = scmp.eq.s32.totalorder %s16, 0
    %p161 = por %p159, %p160
    %p162 = scmp.ne.s32.totalorder %s148, %s149
    %p163 = scmp.eq.s32.totalorder %s17, 3
    %p164 = por %p162, %p163
    %p166 = scmp.ne.s32.totalorder %s149, %s165
    %p167 = scmp.eq.s32.totalorder %s17, 0
    %p168 = por %p166, %p167
    %p169 = scmp.le.s32.totalorder 1, %s11
    %p170 = scmp.lt.s32.totalorder %s11, 5
    %p171 = pnand %p169, %p170
    %p172 = pneg %p171
    // Predicated region
    $region9: #{generator_forward.9} parent=5 // pred_check
      _
    $region10: #{generator_forward.9} parent=5 // pred_check_branch
      %174 = sbr.rel (%p171) target = $region12
    $region11: #{generator_forward.9} parent=5 // pred_region
      %s175 = ssub.s32 %s11, 1
    $region12: #{generator_forward.9} parent=5 // pred_fallthru
      _
    %p176 = scmp.lt.s32.totalorder %s11, 4
    // Predicated region
    $region13: #{generator_forward.9} parent=5 // pred_check
      %p177 = pneg %p176
    $region14: #{generator_forward.9} parent=5 // pred_check_branch
      %179 = sbr.rel (%p177) target = $region16
    $region15: #{generator_forward.9} parent=5 // pred_region
      // Predicated region
      $region17: #{generator_forward.9} parent=15 // pred_check
        %p180 = pneg %p43
      $region18: #{generator_forward.9} parent=15 // pred_check_branch
        %182 = sbr.rel (%p180) target = $region20
      $region19: #{generator_forward.9} parent=15 // pred_region
        %p183 = scmp.lt.s32.totalorder %s18, 3
        %s184 = scalar_select %p183, %s18, 3
        %s185 = smul.addr %s184, 8
        %s186 = smul.addr %s185, 8
        %s187 = scalar_lea.vmem %s0, %s186
      $region20: #{generator_forward.9} parent=15 // pred_fallthru
        _
      // Predicated region
      $region21: #{generator_forward.9} parent=15 // pred_check
        %p188 = pneg %p71
      $region22: #{generator_forward.9} parent=15 // pred_check_branch
        %190 = sbr.rel (%p188) target = $region24
      $region23: #{generator_forward.9} parent=15 // pred_region
        %p191 = scmp.lt.s32.totalorder %s18, 3
        %s192 = scalar_select %p191, %s18, 3
        %p193 = scmp.lt.s32.totalorder %s19, 0
        %s194 = scalar_select %p193, %s19, 0
        %s195 = smul.addr %s192, 32
        %s196 = sadd.s32 %s194, %s195
        %s197 = smul.addr %s196, 8
        %s198 = scalar_lea.vmem %s1, %s197
      $region24: #{generator_forward.9} parent=15 // pred_fallthru
        _
    $region16: #{generator_forward.9} parent=5 // pred_fallthru
      _
    %p199 = scmp.le.s32.totalorder 1, %s11
    %p200 = scmp.lt.s32.totalorder %s11, 5
    %p201 = pnand %p199, %p200
    %p202 = pneg %p201
    // Predicated region
    $region25: #{generator_forward.9} parent=5 // pred_check
      _
    $region26: #{generator_forward.9} parent=5 // pred_check_branch
      %204 = sbr.rel (%p201) target = $region28
    $region27: #{generator_forward.9} parent=5 // pred_region
      %s205 = ssub.s32 %s11, 1
      %p206 = scmp.lt.s32.totalorder %s20, 3
      %s207 = scalar_select %p206, %s20, 3
      %s208 = smul.addr %s207, 8
      %s209 = smul.addr %s208, 8
      %s210 = scalar_lea.vmem %s0, %s209
      %p211 = pneg %p49
      %p212 = pneg %p46
      %p213 = scmp.lt.s32.totalorder %s20, 3
      %s214 = scalar_select %p213, %s20, 3
      %p215 = scmp.lt.s32.totalorder %s21, 0
      %s216 = scalar_select %p215, %s21, 0
      %s217 = smul.addr %s214, 32
      %s218 = sadd.s32 %s216, %s217
      %s219 = smul.addr %s218, 8
      %s220 = scalar_lea.vmem %s1, %s219
      %p221 = pneg %p77
      %p222 = pneg %p74
      %p223 = pneg %p105
      %p224 = pneg %p102
      %p225 = scmp.lt.s32.totalorder %s20, 3
      %s226 = scalar_select %p225, %s20, 3
      %p227 = scmp.lt.s32.totalorder %s21, 0
      %s228 = scalar_select %p227, %s21, 0
      %s229 = smul.addr %s226, 4
      %s230 = sadd.s32 %s228, %s229
      %s231 = smul.addr %s230, 8
      %s232 = scalar_lea.vmem %s2, %s231
      %p233 = pneg %p133
      %p234 = pneg %p130
      %p235 = scmp.lt.s32.totalorder %s20, 3
      %s236 = scalar_select %p235, %s20, 3
      %p237 = scmp.lt.s32.totalorder %s21, 0
      %s238 = scalar_select %p237, %s21, 0
      %s239 = smul.addr %s238, 4
      %s240 = smul.addr %s236, 4
      %s241 = sadd.s32 %s239, %s240
      %s242 = smul.addr %s241, 8
      %s243 = scalar_lea.vmem %s3, %s242
      %p244 = pneg %p161
      %p245 = pneg %p158
      %p246 = scmp.lt.s32.totalorder %s20, 3
      %s247 = scalar_select %p246, %s20, 3
      %p248 = scmp.lt.s32.totalorder %s21, 0
      %s249 = scalar_select %p248, %s21, 0
      %s250 = smul.addr %s249, 4
      %s251 = smul.addr %s247, 4
      %s252 = sadd.s32 %s250, %s251
      %s253 = smul.addr %s252, 8
      %s254 = scalar_lea.vmem %s4, %s253
      %p255 = scmp.lt.s32.totalorder %s20, 3
      %s256 = scalar_select %p255, %s20, 3
      %s257 = smul.addr %s256, 8
      %s258 = smul.addr %s257, 8
      %s259 = scalar_lea.vmem %s0, %s258
      %p260 = scmp.lt.s32.totalorder %s20, 3
      %s261 = scalar_select %p260, %s20, 3
      %p262 = scmp.lt.s32.totalorder %s21, 0
      %s263 = scalar_select %p262, %s21, 0
      %s264 = smul.addr %s261, 32
      %s265 = sadd.s32 %s263, %s264
      %s266 = smul.addr %s265, 8
      %s267 = scalar_lea.vmem %s1, %s266
      %p268 = scmp.lt.s32.totalorder %s20, 3
      %s269 = scalar_select %p268, %s20, 3
      %p270 = scmp.lt.s32.totalorder %s21, 0
      %s271 = scalar_select %p270, %s21, 0
      %s272 = smul.addr %s269, 4
      %s273 = sadd.s32 %s271, %s272
      %s274 = smul.addr %s273, 8
      %s275 = scalar_lea.vmem %s2, %s274
      %p276 = scmp.lt.s32.totalorder %s20, 3
      %s277 = scalar_select %p276, %s20, 3
      %p278 = scmp.lt.s32.totalorder %s21, 0
      %s279 = scalar_select %p278, %s21, 0
      %s280 = smul.addr %s279, 4
      %s281 = smul.addr %s277, 4
      %s282 = sadd.s32 %s280, %s281
      %s283 = smul.addr %s282, 8
      %s284 = scalar_lea.vmem %s3, %s283
      %p285 = scmp.lt.s32.totalorder %s20, 3
      %s286 = scalar_select %p285, %s20, 3
      %p287 = scmp.lt.s32.totalorder %s21, 0
      %s288 = scalar_select %p287, %s21, 0
      %s289 = smul.addr %s288, 4
      %s290 = smul.addr %s286, 4
      %s291 = sadd.s32 %s289, %s290
      %s292 = smul.addr %s291, 8
      %s293 = scalar_lea.vmem %s4, %s292
      %v294 = vld [vmem:[%s259] sm:$0xff]
      %v295 = vld [vmem:[%s259 + $0x8] sm:$0xff]
      %v296 = vld [vmem:[%s259 + $0x10] sm:$0xff]
      %v297 = vld [vmem:[%s259 + $0x18] sm:$0xff]
      %v298 = vld [vmem:[%s259 + $0x20] sm:$0xff]
      %v299 = vld [vmem:[%s259 + $0x28] sm:$0xff]
      %v300 = vld [vmem:[%s259 + $0x30] sm:$0xff]
      %v301 = vld [vmem:[%s259 + $0x38] sm:$0xff]
      %v302 = vld [vmem:[%s267] sm:$0xff]
      %v303 = vld [vmem:[%s267 + $0x8] sm:$0xff]
      %v304 = vld [vmem:[%s267 + $0x10] sm:$0xff]
      %v305 = vld [vmem:[%s267 + $0x18] sm:$0xff]
      %v306 = vld [vmem:[%s267 + $0x20] sm:$0xff]
      %v307 = vld [vmem:[%s267 + $0x28] sm:$0xff]
      %v308 = vld [vmem:[%s267 + $0x30] sm:$0xff]
      %v309 = vld [vmem:[%s267 + $0x38] sm:$0xff]
      %v310 = vld [vmem:[%s267 + $0x40] sm:$0xff]
      %v311 = vld [vmem:[%s267 + $0x48] sm:$0xff]
      %v312 = vld [vmem:[%s267 + $0x50] sm:$0xff]
      %v313 = vld [vmem:[%s267 + $0x58] sm:$0xff]
      %v314 = vld [vmem:[%s267 + $0x60] sm:$0xff]
      %v315 = vld [vmem:[%s267 + $0x68] sm:$0xff]
      %v316 = vld [vmem:[%s267 + $0x70] sm:$0xff]
      %v317 = vld [vmem:[%s267 + $0x78] sm:$0xff]
      %v318 = vld [vmem:[%s267 + $0x80] sm:$0xff]
      %v319 = vld [vmem:[%s267 + $0x88] sm:$0xff]
      %v320 = vld [vmem:[%s267 + $0x90] sm:$0xff]
      %v321 = vld [vmem:[%s267 + $0x98] sm:$0xff]
      %v322 = vld [vmem:[%s267 + $0xa0] sm:$0xff]
      %v323 = vld [vmem:[%s267 + $0xa8] sm:$0xff]
      %v324 = vld [vmem:[%s267 + $0xb0] sm:$0xff]
      %v325 = vld [vmem:[%s267 + $0xb8] sm:$0xff]
      %v326 = vld [vmem:[%s267 + $0xc0] sm:$0xff]
      %v327 = vld [vmem:[%s267 + $0xc8] sm:$0xff]
      %v328 = vld [vmem:[%s267 + $0xd0] sm:$0xff]
      %v329 = vld [vmem:[%s267 + $0xd8] sm:$0xff]
      %v330 = vld [vmem:[%s267 + $0xe0] sm:$0xff]
      %v331 = vld [vmem:[%s267 + $0xe8] sm:$0xff]
      %v332 = vld [vmem:[%s267 + $0xf0] sm:$0xff]
      %v333 = vld [vmem:[%s267 + $0xf8] sm:$0xff]
      %334 = vmatpush.msra.mxu0 %v317
      %335 = vmatpush.msra.mxu0 %v316
      %336 = vmatpush.msra.mxu0 %v315
      %337 = vmatpush.msra.mxu0 %v314
      %338 = vmatpush.msra.mxu0 %v313
      %339 = vmatpush.msra.mxu0 %v312
      %340 = vmatpush.msra.mxu0 %v311
      %341 = vmatpush.msra.mxu0 %v310
      %342 = vmatpush.msra.mxu0 %v309
      %343 = vmatpush.msra.mxu0 %v308
      %344 = vmatpush.msra.mxu0 %v307
      %345 = vmatpush.msra.mxu0 %v306
      %346 = vmatpush.msra.mxu0 %v305
      %347 = vmatpush.msra.mxu0 %v304
      %348 = vmatpush.msra.mxu0 %v303
      %349 = vmatpush.msra.mxu0 %v302
      %350 = vmatmul.f32.gmra.mxu0 %v294
      %v351 = vpop.f32.mrf.mxu0
      %v352 = vadd.f32 0.0, %v351
      %353 = vmatmul.f32.gmra.mxu0 %v296
      %v354 = vpop.f32.mrf.mxu0
      %v355 = vadd.f32 0.0, %v354
      %356 = vmatmul.f32.gmra.mxu0 %v298
      %v357 = vpop.f32.mrf.mxu0
      %v358 = vadd.f32 0.0, %v357
      %359 = vmatmul.f32.gmra.mxu0 %v300
      %v360 = vpop.f32.mrf.mxu0
      %v361 = vadd.f32 0.0, %v360
      %362 = vdwg.mxu0
      %363 = vmatpush.msra.mxu0 %v333
      %364 = vmatpush.msra.mxu0 %v332
      %365 = vmatpush.msra.mxu0 %v331
      %366 = vmatpush.msra.mxu0 %v330
      %367 = vmatpush.msra.mxu0 %v329
      %368 = vmatpush.msra.mxu0 %v328
      %369 = vmatpush.msra.mxu0 %v327
      %370 = vmatpush.msra.mxu0 %v326
      %371 = vmatpush.msra.mxu0 %v325
      %372 = vmatpush.msra.mxu0 %v324
      %373 = vmatpush.msra.mxu0 %v323
      %374 = vmatpush.msra.mxu0 %v322
      %375 = vmatpush.msra.mxu0 %v321
      %376 = vmatpush.msra.mxu0 %v320
      %377 = vmatpush.msra.mxu0 %v319
      %378 = vmatpush.msra.mxu0 %v318
      %379 = vmatmul.f32.gmra.mxu0 %v295
      %v380 = vpop.f32.mrf.mxu0
      %v381 = vadd.f32 %v352, %v380
      %382 = vmatmul.f32.gmra.mxu0 %v297
      %v383 = vpop.f32.mrf.mxu0
      %v384 = vadd.f32 %v355, %v383
      %385 = vmatmul.f32.gmra.mxu0 %v299
      %v386 = vpop.f32.mrf.mxu0
      %v387 = vadd.f32 %v358, %v386
      %388 = vmatmul.f32.gmra.mxu0 %v301
      %v389 = vpop.f32.mrf.mxu0
      %v390 = vadd.f32 %v361, %v389
      %391 = vdwg.mxu0
      %392 = vst [vmem:[%s275] sm:$0xff] %v381
      %393 = vst [vmem:[%s275 + $0x8] sm:$0xff] %v384
      %394 = vst [vmem:[%s275 + $0x10] sm:$0xff] %v387
      %395 = vst [vmem:[%s275 + $0x18] sm:$0xff] %v390
      %396 = vadd.xlane.f32.xlu0 %v381
      %v397 = vpop.xlane.xlu0 %396
      %398 = vadd.xlane.f32.xlu0 %v384
      %v399 = vpop.xlane.xlu0 %398
      %400 = vadd.xlane.f32.xlu0 %v387
      %v401 = vpop.xlane.xlu0 %400
      %402 = vadd.xlane.f32.xlu0 %v390
      %v403 = vpop.xlane.xlu0 %402
      %vm404 = vcmask 7168
      %405 = vst.msk [vmem:[%s284] sm:$0xff] %vm404, %v397
      %406 = vst.msk [vmem:[%s284 + $0x8] sm:$0xff] %vm404, %v399
      %407 = vst.msk [vmem:[%s284 + $0x10] sm:$0xff] %vm404, %v401
      %408 = vst.msk [vmem:[%s284 + $0x18] sm:$0xff] %vm404, %v403
      %v409 = vmul.f32 %v381, %v381
      %v410 = vmul.f32 %v384, %v384
      %v411 = vmul.f32 %v387, %v387
      %v412 = vmul.f32 %v390, %v390
      %413 = vadd.xlane.f32.xlu0 %v409
      %v414 = vpop.xlane.xlu0 %413
      %415 = vadd.xlane.f32.xlu0 %v410
      %v416 = vpop.xlane.xlu0 %415
      %417 = vadd.xlane.f32.xlu0 %v411
      %v418 = vpop.xlane.xlu0 %417
      %419 = vadd.xlane.f32.xlu0 %v412
      %v420 = vpop.xlane.xlu0 %419
      %421 = vst.msk [vmem:[%s293] sm:$0xff] %vm404, %v414
      %422 = vst.msk [vmem:[%s293 + $0x8] sm:$0xff] %vm404, %v416
      %423 = vst.msk [vmem:[%s293 + $0x10] sm:$0xff] %vm404, %v418
      %424 = vst.msk [vmem:[%s293 + $0x18] sm:$0xff] %vm404, %v420
      %p425 = scmp.lt.s32.totalorder %s20, 3
      %s426 = scalar_select %p425, %s20, 3
      %p427 = scmp.lt.s32.totalorder %s21, 0
      %s428 = scalar_select %p427, %s21, 0
      %s429 = smul.addr %s426, 4
      %s430 = sadd.s32 %s428, %s429
      %s431 = smul.addr %s430, 8
      %s432 = scalar_lea.vmem %s2, %s431
      %p433 = scmp.lt.s32.totalorder %s20, 3
      %s434 = scalar_select %p433, %s20, 3
      %p435 = scmp.lt.s32.totalorder %s21, 0
      %s436 = scalar_select %p435, %s21, 0
      %s437 = smul.addr %s436, 4
      %s438 = smul.addr %s434, 4
      %s439 = sadd.s32 %s437, %s438
      %s440 = smul.addr %s439, 8
      %s441 = scalar_lea.vmem %s3, %s440
      %p442 = scmp.lt.s32.totalorder %s20, 3
      %s443 = scalar_select %p442, %s20, 3
      %p444 = scmp.lt.s32.totalorder %s21, 0
      %s445 = scalar_select %p444, %s21, 0
      %s446 = smul.addr %s445, 4
      %s447 = smul.addr %s443, 4
      %s448 = sadd.s32 %s446, %s447
      %s449 = smul.addr %s448, 8
      %s450 = scalar_lea.vmem %s4, %s449
      // Predicated region
      $region29: #{generator_forward.9} parent=27 // pred_check
        %p451 = pneg %p102
      $region30: #{generator_forward.9} parent=27 // pred_check_branch
        %453 = sbr.rel (%p451) target = $region32
      $region31: #{generator_forward.9} parent=27 // pred_region
        _
      $region32: #{generator_forward.9} parent=27 // pred_fallthru
        _
      // Predicated region
      $region33: #{generator_forward.9} parent=27 // pred_check
        %p454 = pneg %p130
      $region34: #{generator_forward.9} parent=27 // pred_check_branch
        %456 = sbr.rel (%p454) target = $region36
      $region35: #{generator_forward.9} parent=27 // pred_region
        _
      $region36: #{generator_forward.9} parent=27 // pred_fallthru
        _
      // Predicated region
      $region37: #{generator_forward.9} parent=27 // pred_check
        %p457 = pneg %p158
      $region38: #{generator_forward.9} parent=27 // pred_check_branch
        %459 = sbr.rel (%p457) target = $region40
      $region39: #{generator_forward.9} parent=27 // pred_region
        _
      $region40: #{generator_forward.9} parent=27 // pred_fallthru
        _
    $region28: #{generator_forward.9} parent=5 // pred_fallthru
      _
    %p460 = scmp.le.s32.totalorder 2, %s11
    // Predicated region
    $region41: #{generator_forward.9} parent=5 // pred_check
      %p461 = pneg %p460
    $region42: #{generator_forward.9} parent=5 // pred_check_branch
      %463 = sbr.rel (%p461) target = $region44
    $region43: #{generator_forward.9} parent=5 // pred_region
      %s464 = ssub.s32 %s11, 2
      // Predicated region
      $region45: #{generator_forward.9} parent=43 // pred_check
        %p465 = pneg %p108
      $region46: #{generator_forward.9} parent=43 // pred_check_branch
        %467 = sbr.rel (%p465) target = $region48
      $region47: #{generator_forward.9} parent=43 // pred_region
        %p468 = scmp.lt.s32.totalorder %s22, 3
        %s469 = scalar_select %p468, %s22, 3
        %p470 = scmp.lt.s32.totalorder %s23, 0
        %s471 = scalar_select %p470, %s23, 0
        %s472 = smul.addr %s469, 4
        %s473 = sadd.s32 %s471, %s472
        %s474 = smul.addr %s473, 8
        %s475 = scalar_lea.vmem %s2, %s474
      $region48: #{generator_forward.9} parent=43 // pred_fallthru
        _
      // Predicated region
      $region49: #{generator_forward.9} parent=43 // pred_check
        %p476 = pneg %p136
      $region50: #{generator_forward.9} parent=43 // pred_check_branch
        %478 = sbr.rel (%p476) target = $region52
      $region51: #{generator_forward.9} parent=43 // pred_region
        %p479 = scmp.lt.s32.totalorder %s22, 3
        %s480 = scalar_select %p479, %s22, 3
        %p481 = scmp.lt.s32.totalorder %s23, 0
        %s482 = scalar_select %p481, %s23, 0
        %s483 = smul.addr %s482, 4
        %s484 = smul.addr %s480, 4
        %s485 = sadd.s32 %s483, %s484
        %s486 = smul.addr %s485, 8
        %s487 = scalar_lea.vmem %s3, %s486
      $region52: #{generator_forward.9} parent=43 // pred_fallthru
        _
      // Predicated region
      $region53: #{generator_forward.9} parent=43 // pred_check
        %p488 = pneg %p164
      $region54: #{generator_forward.9} parent=43 // pred_check_branch
        %490 = sbr.rel (%p488) target = $region56
      $region55: #{generator_forward.9} parent=43 // pred_region
        %p491 = scmp.lt.s32.totalorder %s22, 3
        %s492 = scalar_select %p491, %s22, 3
        %p493 = scmp.lt.s32.totalorder %s23, 0
        %s494 = scalar_select %p493, %s23, 0
        %s495 = smul.addr %s494, 4
        %s496 = smul.addr %s492, 4
        %s497 = sadd.s32 %s495, %s496
        %s498 = smul.addr %s497, 8
        %s499 = scalar_lea.vmem %s4, %s498
      $region56: #{generator_forward.9} parent=43 // pred_fallthru
        _
    $region44: #{generator_forward.9} parent=5 // pred_fallthru
      _
  $region6: #{generator_forward.9} parent=0 // loop_footer
    %s15 = sadd.s32 1, %s11
  $region7: #{generator_forward.9} parent=0 // loop_footer_branch
    %10 = sbr.rel target = $region3
  $region8: #{generator_forward.9} parent=0 // loop_exit
    _

// kernel: generator_forward.10
$region0: #{generator_forward.10}
  #allocation0 [shape = 'u32[]', space=smem, size = 0x4, offset = 0x4, fixed_abs, tag = 'smem constant byte address 0x4 - core index']
  #allocation1 [shape = 'u32[72,128]{1,0:T(1,128)}', space=vmem, size = 0x9000, scoped, tag = 'internal scratch']
  %s0 = inlined_call_operand.vmem [shape: f32[4,32,128], index: 0, kind: input, shape index: {}]
  %s1 = inlined_call_operand.vmem [shape: f32[32,1], index: 1, kind: input, shape index: {}]
  %s2 = inlined_call_operand.vmem [shape: f32[32,1], index: 2, kind: input, shape index: {}]
  %s3 = inlined_call_operand.vmem [shape: f32[4,32,128], index: 3, kind: output, shape index: {}]
  %s4 = sld [smem:[#allocation0]]
  $region45: #{generator_forward.10} parent=0
    _
  %s6 = ssub.s32 1, %s4
  %s7 = scalar_select 0, %s6, %s4
  loop: start=0, step=1, limit=6
  $region2: #{generator_forward.10} parent=0 // loop_pre_header
    _
  $region3: #{generator_forward.10} parent=0 // loop_header
    %s9 = sphi 0, %s13
    %p10 = scmp.ge.s32.totalorder %s9, 6
    %s16 = sphi 0, %s28
    %s17 = sphi 0, %s24
    %s18 = sphi 0, %s16
    %s19 = sphi 0, %s17
    %s20 = sphi 0, %s18
    %s21 = sphi 0, %s19
    %s33 = sphi 0, %s35
    %s36 = sphi 0, %s33
    %s37 = sphi 0, %s36
    %s53 = sphi 0, %s37
    %s57 = sphi 0, %s57
    %s59 = sphi 0, %s57
    %s60 = sphi 0, %s59
    %s74 = sphi 0, %s60
    %s78 = sphi 0, %s78
    %s80 = sphi 0, %s78
    %s81 = sphi 0, %s80
    %s95 = sphi 0, %s81
    %s103 = sphi 0, %s105
    %s106 = sphi 0, %s103
    %s107 = sphi 0, %s106
    %s123 = sphi 0, %s107
  $region4: #{generator_forward.10} parent=0 // loop_header_branch
    %12 = sbr.rel (%p10) target = $region8
  $region5: #{generator_forward.10} parent=0 // loop_body
    %s14 = ssub.s32 %s9, 1
    %s15 = ssub.s32 %s9, 2
    %s22 = sadd.s32 1, %s17
    %p23 = scmp.ge.s32.totalorder %s22, 1
    %s24 = scalar_select %p23, 0, %s22
    %s25 = sadd.s32 1, %s16
    %s26 = scalar_select %p23, %s25, %s16
    %p27 = scmp.ge.s32.totalorder %s26, 4
    %s28 = scalar_select %p27, 0, %s26
    %s29 = ssub.s32 %s16, %s28
    %s30 = ssub.s32 %s17, %s24
    %s31 = sor.u32 %s29, %s30
    %p32 = scmp.eq.s32.totalorder %s31, 0
    %s34 = sadd.s32 %s33, 1
    %s35 = scalar_select %p32, %s33, %s34
    %p38 = pneg %p32
    %p39 = scmp.eq.s32.totalorder %s9, 3
    %p40 = por %p38, %p39
    %p41 = scmp.ne.s32.totalorder %s33, %s36
    %p42 = scmp.eq.s32.totalorder %s9, 0
    %p43 = por %p41, %p42
    %p44 = scmp.ne.s32.totalorder %s33, %s36
    %p45 = scmp.eq.s32.totalorder %s14, 3
    %p46 = por %p44, %p45
    %p47 = scmp.ne.s32.totalorder %s36, %s37
    %p48 = scmp.eq.s32.totalorder %s14, 0
    %p49 = por %p47, %p48
    %p50 = scmp.ne.s32.totalorder %s36, %s37
    %p51 = scmp.eq.s32.totalorder %s15, 3
    %p52 = por %p50, %p51
    %p54 = scmp.ne.s32.totalorder %s37, %s53
    %p55 = scmp.eq.s32.totalorder %s15, 0
    %p56 = por %p54, %p55
    %s58 = sadd.s32 %s57, 1
    %p61 = scmp.eq.s32.totalorder %s9, 3
    %p62 = scmp.ne.s32.totalorder %s57, %s59
    %p63 = scmp.eq.s32.totalorder %s9, 0
    %p64 = por %p62, %p63
    %p65 = scmp.ne.s32.totalorder %s57, %s59
    %p66 = scmp.eq.s32.totalorder %s14, 3
    %p67 = por %p65, %p66
    %p68 = scmp.ne.s32.totalorder %s59, %s60
    %p69 = scmp.eq.s32.totalorder %s14, 0
    %p70 = por %p68, %p69
    %p71 = scmp.ne.s32.totalorder %s59, %s60
    %p72 = scmp.eq.s32.totalorder %s15, 3
    %p73 = por %p71, %p72
    %p75 = scmp.ne.s32.totalorder %s60, %s74
    %p76 = scmp.eq.s32.totalorder %s15, 0
    %p77 = por %p75, %p76
    %s79 = sadd.s32 %s78, 1
    %p82 = scmp.eq.s32.totalorder %s9, 3
    %p83 = scmp.ne.s32.totalorder %s78, %s80
    %p84 = scmp.eq.s32.totalorder %s9, 0
    %p85 = por %p83, %p84
    %p86 = scmp.ne.s32.totalorder %s78, %s80
    %p87 = scmp.eq.s32.totalorder %s14, 3
    %p88 = por %p86, %p87
    %p89 = scmp.ne.s32.totalorder %s80, %s81
    %p90 = scmp.eq.s32.totalorder %s14, 0
    %p91 = por %p89, %p90
    %p92 = scmp.ne.s32.totalorder %s80, %s81
    %p93 = scmp.eq.s32.totalorder %s15, 3
    %p94 = por %p92, %p93
    %p96 = scmp.ne.s32.totalorder %s81, %s95
    %p97 = scmp.eq.s32.totalorder %s15, 0
    %p98 = por %p96, %p97
    %s99 = ssub.s32 %s16, %s28
    %s100 = ssub.s32 %s17, %s24
    %s101 = sor.u32 %s99, %s100
    %p102 = scmp.eq.s32.totalorder %s101, 0
    %s104 = sadd.s32 %s103, 1
    %s105 = scalar_select %p102, %s103, %s104
    %p108 = pneg %p102
    %p109 = scmp.eq.s32.totalorder %s9, 3
    %p110 = por %p108, %p109
    %p111 = scmp.ne.s32.totalorder %s103, %s106
    %p112 = scmp.eq.s32.totalorder %s9, 0
    %p113 = por %p111, %p112
    %p114 = scmp.ne.s32.totalorder %s103, %s106
    %p115 = scmp.eq.s32.totalorder %s14, 3
    %p116 = por %p114, %p115
    %p117 = scmp.ne.s32.totalorder %s106, %s107
    %p118 = scmp.eq.s32.totalorder %s14, 0
    %p119 = por %p117, %p118
    %p120 = scmp.ne.s32.totalorder %s106, %s107
    %p121 = scmp.eq.s32.totalorder %s15, 3
    %p122 = por %p120, %p121
    %p124 = scmp.ne.s32.totalorder %s107, %s123
    %p125 = scmp.eq.s32.totalorder %s15, 0
    %p126 = por %p124, %p125
    %p127 = scmp.le.s32.totalorder 1, %s9
    %p128 = scmp.lt.s32.totalorder %s9, 5
    %p129 = pnand %p127, %p128
    %p130 = pneg %p129
    // Predicated region
    $region9: #{generator_forward.10} parent=5 // pred_check
      _
    $region10: #{generator_forward.10} parent=5 // pred_check_branch
      %132 = sbr.rel (%p129) target = $region12
    $region11: #{generator_forward.10} parent=5 // pred_region
      %s133 = ssub.s32 %s9, 1
      // Predicated region
      $region13: #{generator_forward.10} parent=11 // pred_check
        %p134 = pneg %p70
      $region14: #{generator_forward.10} parent=11 // pred_check_branch
        %136 = sbr.rel (%p134) target = $region16
      $region15: #{generator_forward.10} parent=11 // pred_region
        _
      $region16: #{generator_forward.10} parent=11 // pred_fallthru
        _
      // Predicated region
      $region17: #{generator_forward.10} parent=11 // pred_check
        %p137 = pneg %p91
      $region18: #{generator_forward.10} parent=11 // pred_check_branch
        %139 = sbr.rel (%p137) target = $region20
      $region19: #{generator_forward.10} parent=11 // pred_region
        _
      $region20: #{generator_forward.10} parent=11 // pred_fallthru
        _
    $region12: #{generator_forward.10} parent=5 // pred_fallthru
      _
    %p140 = scmp.lt.s32.totalorder %s9, 4
    // Predicated region
    $region21: #{generator_forward.10} parent=5 // pred_check
      %p141 = pneg %p140
    $region22: #{generator_forward.10} parent=5 // pred_check_branch
      %143 = sbr.rel (%p141) target = $region24
    $region23: #{generator_forward.10} parent=5 // pred_region
      // Predicated region
      $region25: #{generator_forward.10} parent=23 // pred_check
        %p144 = pneg %p43
      $region26: #{generator_forward.10} parent=23 // pred_check_branch
        %146 = sbr.rel (%p144) target = $region28
      $region27: #{generator_forward.10} parent=23 // pred_region
        %p147 = scmp.lt.s32.totalorder %s16, 3
        %s148 = scalar_select %p147, %s16, 3
        %p149 = scmp.lt.s32.totalorder %s17, 0
        %s150 = scalar_select %p149, %s17, 0
        %s151 = smul.addr %s148, 4
        %s152 = sadd.s32 %s150, %s151
        %s153 = smul.addr %s152, 8
        %s154 = scalar_lea.vmem %s0, %s153
      $region28: #{generator_forward.10} parent=23 // pred_fallthru
        _
    $region24: #{generator_forward.10} parent=5 // pred_fallthru
      _
    %p155 = scmp.le.s32.totalorder 1, %s9
    %p156 = scmp.lt.s32.totalorder %s9, 5
    %p157 = pnand %p155, %p156
    %p158 = pneg %p157
    // Predicated region
    $region29: #{generator_forward.10} parent=5 // pred_check
      _
    $region30: #{generator_forward.10} parent=5 // pred_check_branch
      %160 = sbr.rel (%p157) target = $region32
    $region31: #{generator_forward.10} parent=5 // pred_region
      %s161 = ssub.s32 %s9, 1
      %p162 = scmp.lt.s32.totalorder %s18, 3
      %s163 = scalar_select %p162, %s18, 3
      %p164 = scmp.lt.s32.totalorder %s19, 0
      %s165 = scalar_select %p164, %s19, 0
      %s166 = smul.addr %s163, 4
      %s167 = sadd.s32 %s165, %s166
      %s168 = smul.addr %s167, 8
      %s169 = scalar_lea.vmem %s0, %s168
      %p170 = pneg %p49
      %p171 = pneg %p46
      %p172 = pneg %p70
      %p173 = pneg %p67
      %p174 = pneg %p91
      %p175 = pneg %p88
      %p176 = pneg %p119
      %p177 = pneg %p116
      %p178 = scmp.lt.s32.totalorder %s18, 3
      %s179 = scalar_select %p178, %s18, 3
      %p180 = scmp.lt.s32.totalorder %s19, 0
      %s181 = scalar_select %p180, %s19, 0
      %s182 = smul.addr %s179, 4
      %s183 = sadd.s32 %s181, %s182
      %s184 = smul.addr %s183, 8
      %s185 = scalar_lea.vmem %s3, %s184
      %p186 = scmp.lt.s32.totalorder %s18, 3
      %s187 = scalar_select %p186, %s18, 3
      %p188 = scmp.lt.s32.totalorder %s19, 0
      %s189 = scalar_select %p188, %s19, 0
      %s190 = smul.addr %s187, 4
      %s191 = sadd.s32 %s189, %s190
      %s192 = smul.addr %s191, 8
      %s193 = scalar_lea.vmem %s0, %s192
      %p194 = scmp.lt.s32.totalorder %s18, 3
      %s195 = scalar_select %p194, %s18, 3
      %p196 = scmp.lt.s32.totalorder %s19, 0
      %s197 = scalar_select %p196, %s19, 0
      %s198 = smul.addr %s195, 4
      %s199 = sadd.s32 %s197, %s198
      %s200 = smul.addr %s199, 8
      %s201 = scalar_lea.vmem %s3, %s200
      %v202 = vld [vmem:[%s193] sm:$0xff]
      %v203 = vld [vmem:[%s193 + $0x8] sm:$0xff]
      %v204 = vld [vmem:[%s193 + $0x10] sm:$0xff]
      %v205 = vld [vmem:[%s193 + $0x18] sm:$0xff]
      %v206 = vld [vmem:[%s1] sm:$0xff]
      %v207 = vld [vmem:[%s1 + $0x8] sm:$0xff]
      %v208 = vld [vmem:[%s1 + $0x10] sm:$0xff]
      %v209 = vld [vmem:[%s1 + $0x18] sm:$0xff]
      %211 = vset.pattern.permute.xlu0 0
      %212 = vperm.xlu0 %211, %v206
      %v213 = vpop.permute.xlu0 %212
      %216 = vset.pattern.permute.xlu0 0
      %217 = vperm.xlu0 %216, %v207
      %v218 = vpop.permute.xlu0 %217
      %221 = vset.pattern.permute.xlu0 0
      %222 = vperm.xlu0 %221, %v208
      %v223 = vpop.permute.xlu0 %222
      %226 = vset.pattern.permute.xlu0 0
      %227 = vperm.xlu0 %226, %v209
      %v228 = vpop.permute.xlu0 %227
      %v230 = vmul.f32 %v202, %v213
      %v231 = vmul.f32 %v203, %v218
      %v232 = vmul.f32 %v204, %v223
      %v233 = vmul.f32 %v205, %v228
      %v234 = vld [vmem:[%s2] sm:$0xff]
      %v235 = vld [vmem:[%s2 + $0x8] sm:$0xff]
      %v236 = vld [vmem:[%s2 + $0x10] sm:$0xff]
      %v237 = vld [vmem:[%s2 + $0x18] sm:$0xff]
      %239 = vset.pattern.permute.xlu0 0
      %240 = vperm.xlu0 %239, %v234
      %v241 = vpop.permute.xlu0 %240
      %244 = vset.pattern.permute.xlu0 0
      %245 = vperm.xlu0 %244, %v235
      %v246 = vpop.permute.xlu0 %245
      %249 = vset.pattern.permute.xlu0 0
      %250 = vperm.xlu0 %249, %v236
      %v251 = vpop.permute.xlu0 %250
      %254 = vset.pattern.permute.xlu0 0
      %255 = vperm.xlu0 %254, %v237
      %v256 = vpop.permute.xlu0 %255
      %v258 = vadd.f32 %v230, %v241
      %v259 = vadd.f32 %v231, %v246
      %v260 = vadd.f32 %v232, %v251
      %v261 = vadd.f32 %v233, %v256
      %v262 = vmax.f32 %v258, 0.0
      %v263 = vmax.f32 %v259, 0.0
      %v264 = vmax.f32 %v260, 0.0
      %v265 = vmax.f32 %v261, 0.0
      %266 = vst [vmem:[%s201] sm:$0xff] %v262
      %267 = vst [vmem:[%s201 + $0x8] sm:$0xff] %v263
      %268 = vst [vmem:[%s201 + $0x10] sm:$0xff] %v264
      %269 = vst [vmem:[%s201 + $0x18] sm:$0xff] %v265
      %p270 = scmp.lt.s32.totalorder %s18, 3
      %s271 = scalar_select %p270, %s18, 3
      %p272 = scmp.lt.s32.totalorder %s19, 0
      %s273 = scalar_select %p272, %s19, 0
      %s274 = smul.addr %s271, 4
      %s275 = sadd.s32 %s273, %s274
      %s276 = smul.addr %s275, 8
      %s277 = scalar_lea.vmem %s3, %s276
      // Predicated region
      $region33: #{generator_forward.10} parent=31 // pred_check
        %p278 = pneg %p116
      $region34: #{generator_forward.10} parent=31 // pred_check_branch
        %280 = sbr.rel (%p278) target = $region36
      $region35: #{generator_forward.10} parent=31 // pred_region
        _
      $region36: #{generator_forward.10} parent=31 // pred_fallthru
        _
    $region32: #{generator_forward.10} parent=5 // pred_fallthru
      _
    %p281 = scmp.le.s32.totalorder 2, %s9
    // Predicated region
    $region37: #{generator_forward.10} parent=5 // pred_check
      %p282 = pneg %p281
    $region38: #{generator_forward.10} parent=5 // pred_check_branch
      %284 = sbr.rel (%p282) target = $region40
    $region39: #{generator_forward.10} parent=5 // pred_region
      %s285 = ssub.s32 %s9, 2
      // Predicated region
      $region41: #{generator_forward.10} parent=39 // pred_check
        %p286 = pneg %p122
      $region42: #{generator_forward.10} parent=39 // pred_check_branch
        %288 = sbr.rel (%p286) target = $region44
      $region43: #{generator_forward.10} parent=39 // pred_region
        %p289 = scmp.lt.s32.totalorder %s20, 3
        %s290 = scalar_select %p289, %s20, 3
        %p291 = scmp.lt.s32.totalorder %s21, 0
        %s292 = scalar_select %p291, %s21, 0
        %s293 = smul.addr %s290, 4
        %s294 = sadd.s32 %s292, %s293
        %s295 = smul.addr %s294, 8
        %s296 = scalar_lea.vmem %s3, %s295
      $region44: #{generator_forward.10} parent=39 // pred_fallthru
        _
    $region40: #{generator_forward.10} parent=5 // pred_fallthru
      _
  $region6: #{generator_forward.10} parent=0 // loop_footer
    %s13 = sadd.s32 1, %s9
  $region7: #{generator_forward.10} parent=0 // loop_footer_branch
    %8 = sbr.rel target = $region3
  $region8: #{generator_forward.10} parent=0 // loop_exit
    _

// kernel: generator_forward.12
$region0: #{generator_forward.12}
  #allocation0 [shape = 'u32[]', space=smem, size = 0x4, offset = 0x4, fixed_abs, tag = 'smem constant byte address 0x4 - core index']
  #allocation1 [shape = 'u32[72,128]{1,0:T(1,128)}', space=vmem, size = 0x9000, scoped, tag = 'internal scratch']
  %s0 = inlined_call_operand.vmem [shape: f32[4,16,128], index: 0, kind: input, shape index: {}]
  %s1 = inlined_call_operand.vmem [shape: f32[16,1], index: 1, kind: input, shape index: {}]
  %s2 = inlined_call_operand.vmem [shape: f32[16,1], index: 2, kind: input, shape index: {}]
  %s3 = inlined_call_operand.vmem [shape: f32[4,16,128], index: 3, kind: output, shape index: {}]
  %s4 = sld [smem:[#allocation0]]
  $region45: #{generator_forward.12} parent=0
    _
  %s6 = ssub.s32 1, %s4
  %s7 = scalar_select 0, %s6, %s4
  loop: start=0, step=1, limit=6
  $region2: #{generator_forward.12} parent=0 // loop_pre_header
    _
  $region3: #{generator_forward.12} parent=0 // loop_header
    %s9 = sphi 0, %s13
    %p10 = scmp.ge.s32.totalorder %s9, 6
    %s16 = sphi 0, %s28
    %s17 = sphi 0, %s24
    %s18 = sphi 0, %s16
    %s19 = sphi 0, %s17
    %s20 = sphi 0, %s18
    %s21 = sphi 0, %s19
    %s33 = sphi 0, %s35
    %s36 = sphi 0, %s33
    %s37 = sphi 0, %s36
    %s53 = sphi 0, %s37
    %s57 = sphi 0, %s57
    %s59 = sphi 0, %s57
    %s60 = sphi 0, %s59
    %s74 = sphi 0, %s60
    %s78 = sphi 0, %s78
    %s80 = sphi 0, %s78
    %s81 = sphi 0, %s80
    %s95 = sphi 0, %s81
    %s103 = sphi 0, %s105
    %s106 = sphi 0, %s103
    %s107 = sphi 0, %s106
    %s123 = sphi 0, %s107
  $region4: #{generator_forward.12} parent=0 // loop_header_branch
    %12 = sbr.rel (%p10) target = $region8
  $region5: #{generator_forward.12} parent=0 // loop_body
    %s14 = ssub.s32 %s9, 1
    %s15 = ssub.s32 %s9, 2
    %s22 = sadd.s32 1, %s17
    %p23 = scmp.ge.s32.totalorder %s22, 1
    %s24 = scalar_select %p23, 0, %s22
    %s25 = sadd.s32 1, %s16
    %s26 = scalar_select %p23, %s25, %s16
    %p27 = scmp.ge.s32.totalorder %s26, 4
    %s28 = scalar_select %p27, 0, %s26
    %s29 = ssub.s32 %s16, %s28
    %s30 = ssub.s32 %s17, %s24
    %s31 = sor.u32 %s29, %s30
    %p32 = scmp.eq.s32.totalorder %s31, 0
    %s34 = sadd.s32 %s33, 1
    %s35 = scalar_select %p32, %s33, %s34
    %p38 = pneg %p32
    %p39 = scmp.eq.s32.totalorder %s9, 3
    %p40 = por %p38, %p39
    %p41 = scmp.ne.s32.totalorder %s33, %s36
    %p42 = scmp.eq.s32.totalorder %s9, 0
    %p43 = por %p41, %p42
    %p44 = scmp.ne.s32.totalorder %s33, %s36
    %p45 = scmp.eq.s32.totalorder %s14, 3
    %p46 = por %p44, %p45
    %p47 = scmp.ne.s32.totalorder %s36, %s37
    %p48 = scmp.eq.s32.totalorder %s14, 0
    %p49 = por %p47, %p48
    %p50 = scmp.ne.s32.totalorder %s36, %s37
    %p51 = scmp.eq.s32.totalorder %s15, 3
    %p52 = por %p50, %p51
    %p54 = scmp.ne.s32.totalorder %s37, %s53
    %p55 = scmp.eq.s32.totalorder %s15, 0
    %p56 = por %p54, %p55
    %s58 = sadd.s32 %s57, 1
    %p61 = scmp.eq.s32.totalorder %s9, 3
    %p62 = scmp.ne.s32.totalorder %s57, %s59
    %p63 = scmp.eq.s32.totalorder %s9, 0
    %p64 = por %p62, %p63
    %p65 = scmp.ne.s32.totalorder %s57, %s59
    %p66 = scmp.eq.s32.totalorder %s14, 3
    %p67 = por %p65, %p66
    %p68 = scmp.ne.s32.totalorder %s59, %s60
    %p69 = scmp.eq.s32.totalorder %s14, 0
    %p70 = por %p68, %p69
    %p71 = scmp.ne.s32.totalorder %s59, %s60
    %p72 = scmp.eq.s32.totalorder %s15, 3
    %p73 = por %p71, %p72
    %p75 = scmp.ne.s32.totalorder %s60, %s74
    %p76 = scmp.eq.s32.totalorder %s15, 0
    %p77 = por %p75, %p76
    %s79 = sadd.s32 %s78, 1
    %p82 = scmp.eq.s32.totalorder %s9, 3
    %p83 = scmp.ne.s32.totalorder %s78, %s80
    %p84 = scmp.eq.s32.totalorder %s9, 0
    %p85 = por %p83, %p84
    %p86 = scmp.ne.s32.totalorder %s78, %s80
    %p87 = scmp.eq.s32.totalorder %s14, 3
    %p88 = por %p86, %p87
    %p89 = scmp.ne.s32.totalorder %s80, %s81
    %p90 = scmp.eq.s32.totalorder %s14, 0
    %p91 = por %p89, %p90
    %p92 = scmp.ne.s32.totalorder %s80, %s81
    %p93 = scmp.eq.s32.totalorder %s15, 3
    %p94 = por %p92, %p93
    %p96 = scmp.ne.s32.totalorder %s81, %s95
    %p97 = scmp.eq.s32.totalorder %s15, 0
    %p98 = por %p96, %p97
    %s99 = ssub.s32 %s16, %s28
    %s100 = ssub.s32 %s17, %s24
    %s101 = sor.u32 %s99, %s100
    %p102 = scmp.eq.s32.totalorder %s101, 0
    %s104 = sadd.s32 %s103, 1
    %s105 = scalar_select %p102, %s103, %s104
    %p108 = pneg %p102
    %p109 = scmp.eq.s32.totalorder %s9, 3
    %p110 = por %p108, %p109
    %p111 = scmp.ne.s32.totalorder %s103, %s106
    %p112 = scmp.eq.s32.totalorder %s9, 0
    %p113 = por %p111, %p112
    %p114 = scmp.ne.s32.totalorder %s103, %s106
    %p115 = scmp.eq.s32.totalorder %s14, 3
    %p116 = por %p114, %p115
    %p117 = scmp.ne.s32.totalorder %s106, %s107
    %p118 = scmp.eq.s32.totalorder %s14, 0
    %p119 = por %p117, %p118
    %p120 = scmp.ne.s32.totalorder %s106, %s107
    %p121 = scmp.eq.s32.totalorder %s15, 3
    %p122 = por %p120, %p121
    %p124 = scmp.ne.s32.totalorder %s107, %s123
    %p125 = scmp.eq.s32.totalorder %s15, 0
    %p126 = por %p124, %p125
    %p127 = scmp.le.s32.totalorder 1, %s9
    %p128 = scmp.lt.s32.totalorder %s9, 5
    %p129 = pnand %p127, %p128
    %p130 = pneg %p129
    // Predicated region
    $region9: #{generator_forward.12} parent=5 // pred_check
      _
    $region10: #{generator_forward.12} parent=5 // pred_check_branch
      %132 = sbr.rel (%p129) target = $region12
    $region11: #{generator_forward.12} parent=5 // pred_region
      %s133 = ssub.s32 %s9, 1
      // Predicated region
      $region13: #{generator_forward.12} parent=11 // pred_check
        %p134 = pneg %p70
      $region14: #{generator_forward.12} parent=11 // pred_check_branch
        %136 = sbr.rel (%p134) target = $region16
      $region15: #{generator_forward.12} parent=11 // pred_region
        _
      $region16: #{generator_forward.12} parent=11 // pred_fallthru
        _
      // Predicated region
      $region17: #{generator_forward.12} parent=11 // pred_check
        %p137 = pneg %p91
      $region18: #{generator_forward.12} parent=11 // pred_check_branch
        %139 = sbr.rel (%p137) target = $region20
      $region19: #{generator_forward.12} parent=11 // pred_region
        _
      $region20: #{generator_forward.12} parent=11 // pred_fallthru
        _
    $region12: #{generator_forward.12} parent=5 // pred_fallthru
      _
    %p140 = scmp.lt.s32.totalorder %s9, 4
    // Predicated region
    $region21: #{generator_forward.12} parent=5 // pred_check
      %p141 = pneg %p140
    $region22: #{generator_forward.12} parent=5 // pred_check_branch
      %143 = sbr.rel (%p141) target = $region24
    $region23: #{generator_forward.12} parent=5 // pred_region
      // Predicated region
      $region25: #{generator_forward.12} parent=23 // pred_check
        %p144 = pneg %p43
      $region26: #{generator_forward.12} parent=23 // pred_check_branch
        %146 = sbr.rel (%p144) target = $region28
      $region27: #{generator_forward.12} parent=23 // pred_region
        %p147 = scmp.lt.s32.totalorder %s16, 3
        %s148 = scalar_select %p147, %s16, 3
        %p149 = scmp.lt.s32.totalorder %s17, 0
        %s150 = scalar_select %p149, %s17, 0
        %s151 = smul.addr %s148, 2
        %s152 = sadd.s32 %s150, %s151
        %s153 = smul.addr %s152, 8
        %s154 = scalar_lea.vmem %s0, %s153
      $region28: #{generator_forward.12} parent=23 // pred_fallthru
        _
    $region24: #{generator_forward.12} parent=5 // pred_fallthru
      _
    %p155 = scmp.le.s32.totalorder 1, %s9
    %p156 = scmp.lt.s32.totalorder %s9, 5
    %p157 = pnand %p155, %p156
    %p158 = pneg %p157
    // Predicated region
    $region29: #{generator_forward.12} parent=5 // pred_check
      _
    $region30: #{generator_forward.12} parent=5 // pred_check_branch
      %160 = sbr.rel (%p157) target = $region32
    $region31: #{generator_forward.12} parent=5 // pred_region
      %s161 = ssub.s32 %s9, 1
      %p162 = scmp.lt.s32.totalorder %s18, 3
      %s163 = scalar_select %p162, %s18, 3
      %p164 = scmp.lt.s32.totalorder %s19, 0
      %s165 = scalar_select %p164, %s19, 0
      %s166 = smul.addr %s163, 2
      %s167 = sadd.s32 %s165, %s166
      %s168 = smul.addr %s167, 8
      %s169 = scalar_lea.vmem %s0, %s168
      %p170 = pneg %p49
      %p171 = pneg %p46
      %p172 = pneg %p70
      %p173 = pneg %p67
      %p174 = pneg %p91
      %p175 = pneg %p88
      %p176 = pneg %p119
      %p177 = pneg %p116
      %p178 = scmp.lt.s32.totalorder %s18, 3
      %s179 = scalar_select %p178, %s18, 3
      %p180 = scmp.lt.s32.totalorder %s19, 0
      %s181 = scalar_select %p180, %s19, 0
      %s182 = smul.addr %s179, 2
      %s183 = sadd.s32 %s181, %s182
      %s184 = smul.addr %s183, 8
      %s185 = scalar_lea.vmem %s3, %s184
      %p186 = scmp.lt.s32.totalorder %s18, 3
      %s187 = scalar_select %p186, %s18, 3
      %p188 = scmp.lt.s32.totalorder %s19, 0
      %s189 = scalar_select %p188, %s19, 0
      %s190 = smul.addr %s187, 2
      %s191 = sadd.s32 %s189, %s190
      %s192 = smul.addr %s191, 8
      %s193 = scalar_lea.vmem %s0, %s192
      %p194 = scmp.lt.s32.totalorder %s18, 3
      %s195 = scalar_select %p194, %s18, 3
      %p196 = scmp.lt.s32.totalorder %s19, 0
      %s197 = scalar_select %p196, %s19, 0
      %s198 = smul.addr %s195, 2
      %s199 = sadd.s32 %s197, %s198
      %s200 = smul.addr %s199, 8
      %s201 = scalar_lea.vmem %s3, %s200
      %v202 = vld [vmem:[%s193] sm:$0xff]
      %v203 = vld [vmem:[%s193 + $0x8] sm:$0xff]
      %v204 = vld [vmem:[%s1] sm:$0xff]
      %v205 = vld [vmem:[%s1 + $0x8] sm:$0xff]
      %207 = vset.pattern.permute.xlu0 0
      %208 = vperm.xlu0 %207, %v204
      %v209 = vpop.permute.xlu0 %208
      %212 = vset.pattern.permute.xlu0 0
      %213 = vperm.xlu0 %212, %v205
      %v214 = vpop.permute.xlu0 %213
      %v216 = vmul.f32 %v202, %v209
      %v217 = vmul.f32 %v203, %v214
      %v218 = vld [vmem:[%s2] sm:$0xff]
      %v219 = vld [vmem:[%s2 + $0x8] sm:$0xff]
      %221 = vset.pattern.permute.xlu0 0
      %222 = vperm.xlu0 %221, %v218
      %v223 = vpop.permute.xlu0 %222
      %226 = vset.pattern.permute.xlu0 0
      %227 = vperm.xlu0 %226, %v219
      %v228 = vpop.permute.xlu0 %227
      %v230 = vadd.f32 %v216, %v223
      %v231 = vadd.f32 %v217, %v228
      %v232 = vmax.f32 %v230, 0.0
      %v233 = vmax.f32 %v231, 0.0
      %234 = vst [vmem:[%s201] sm:$0xff] %v232
      %235 = vst [vmem:[%s201 + $0x8] sm:$0xff] %v233
      %p236 = scmp.lt.s32.totalorder %s18, 3
      %s237 = scalar_select %p236, %s18, 3
      %p238 = scmp.lt.s32.totalorder %s19, 0
      %s239 = scalar_select %p238, %s19, 0
      %s240 = smul.addr %s237, 2
      %s241 = sadd.s32 %s239, %s240
      %s242 = smul.addr %s241, 8
      %s243 = scalar_lea.vmem %s3, %s242
      // Predicated region
      $region33: #{generator_forward.12} parent=31 // pred_check
        %p244 = pneg %p116
      $region34: #{generator_forward.12} parent=31 // pred_check_branch
        %246 = sbr.rel (%p244) target = $region36
      $region35: #{generator_forward.12} parent=31 // pred_region
        _
      $region36: #{generator_forward.12} parent=31 // pred_fallthru
        _
    $region32: #{generator_forward.12} parent=5 // pred_fallthru
      _
    %p247 = scmp.le.s32.totalorder 2, %s9
    // Predicated region
    $region37: #{generator_forward.12} parent=5 // pred_check
      %p248 = pneg %p247
    $region38: #{generator_forward.12} parent=5 // pred_check_branch
      %250 = sbr.rel (%p248) target = $region40
    $region39: #{generator_forward.12} parent=5 // pred_region
      %s251 = ssub.s32 %s9, 2
      // Predicated region
      $region41: #{generator_forward.12} parent=39 // pred_check
        %p252 = pneg %p122
      $region42: #{generator_forward.12} parent=39 // pred_check_branch
        %254 = sbr.rel (%p252) target = $region44
      $region43: #{generator_forward.12} parent=39 // pred_region
        %p255 = scmp.lt.s32.totalorder %s20, 3
        %s256 = scalar_select %p255, %s20, 3
        %p257 = scmp.lt.s32.totalorder %s21, 0
        %s258 = scalar_select %p257, %s21, 0
        %s259 = smul.addr %s256, 2
        %s260 = sadd.s32 %s258, %s259
        %s261 = smul.addr %s260, 8
        %s262 = scalar_lea.vmem %s3, %s261
      $region44: #{generator_forward.12} parent=39 // pred_fallthru
        _
    $region40: #{generator_forward.12} parent=5 // pred_fallthru
      _
  $region6: #{generator_forward.12} parent=0 // loop_footer
    %s13 = sadd.s32 1, %s9
  $region7: #{generator_forward.12} parent=0 // loop_footer_branch
    %8 = sbr.rel target = $region3
  $region8: #{generator_forward.12} parent=0 // loop_exit
    _

// kernel: generator_forward.11
$region0: #{generator_forward.11}
  #allocation0 [shape = 'u32[]', space=smem, size = 0x4, offset = 0x4, fixed_abs, tag = 'smem constant byte address 0x4 - core index']
  #allocation1 [shape = 'u32[72,128]{1,0:T(1,128)}', space=vmem, size = 0x9000, scoped, tag = 'internal scratch']
  %s0 = inlined_call_operand.vmem [shape: f32[4,16,128], index: 0, kind: input, shape index: {}]
  %s1 = inlined_call_operand.vmem [shape: f32[4,128,128], index: 1, kind: input, shape index: {}]
  %s2 = inlined_call_operand.vmem [shape: f32[4,16,128], index: 2, kind: output, shape index: {0}]
  %s3 = inlined_call_operand.vmem [shape: f32[4,1,16,1], index: 3, kind: output, shape index: {1}]
  %s4 = inlined_call_operand.vmem [shape: f32[4,1,16,1], index: 4, kind: output, shape index: {2}]
  %5 = xla_tuple %s2, %s3, %s4
  %s6 = sld [smem:[#allocation0]]
  $region57: #{generator_forward.11} parent=0
    _
  %s8 = ssub.s32 1, %s6
  %s9 = scalar_select 0, %s8, %s6
  loop: start=0, step=1, limit=6
  $region2: #{generator_forward.11} parent=0 // loop_pre_header
    _
  $region3: #{generator_forward.11} parent=0 // loop_header
    %s11 = sphi 0, %s15
    %p12 = scmp.ge.s32.totalorder %s11, 6
    %s18 = sphi 0, %s30
    %s19 = sphi 0, %s26
    %s20 = sphi 0, %s18
    %s21 = sphi 0, %s19
    %s22 = sphi 0, %s20
    %s23 = sphi 0, %s21
    %s33 = sphi 0, %s35
    %s36 = sphi 0, %s33
    %s37 = sphi 0, %s36
    %s53 = sphi 0, %s37
    %s61 = sphi 0, %s63
    %s64 = sphi 0, %s61
    %s65 = sphi 0, %s64
    %s81 = sphi 0, %s65
    %s89 = sphi 0, %s91
    %s92 = sphi 0, %s89
    %s93 = sphi 0, %s92
    %s109 = sphi 0, %s93
    %s117 = sphi 0, %s119
    %s120 = sphi 0, %s117
    %s121 = sphi 0, %s120
    %s137 = sphi 0, %s121
    %s145 = sphi 0, %s147
    %s148 = sphi 0, %s145
    %s149 = sphi 0, %s148
    %s165 = sphi 0, %s149
  $region4: #{generator_forward.11} parent=0 // loop_header_branch
    %14 = sbr.rel (%p12) target = $region8
  $region5: #{generator_forward.11} parent=0 // loop_body
    %s16 = ssub.s32 %s11, 1
    %s17 = ssub.s32 %s11, 2
    %s24 = sadd.s32 1, %s19
    %p25 = scmp.ge.s32.totalorder %s24, 1
    %s26 = scalar_select %p25, 0, %s24
    %s27 = sadd.s32 1, %s18
    %s28 = scalar_select %p25, %s27, %s18
    %p29 = scmp.ge.s32.totalorder %s28, 4
    %s30 = scalar_select %p29, 0, %s28
    %s31 = ssub.s32 %s18, %s30
    %p32 = scmp.eq.s32.totalorder %s31, 0
    %s34 = sadd.s32 %s33, 1
    %s35 = scalar_select %p32, %s33, %s34
    %p38 = pneg %p32
    %p39 = scmp.eq.s32.totalorder %s11, 3
    %p40 = por %p38, %p39
    %p41 = scmp.ne.s32.totalorder %s33, %s36
    %p42 = scmp.eq.s32.totalorder %s11, 0
    %p43 = por %p41, %p42
    %p44 = scmp.ne.s32.totalorder %s33, %s36
    %p45 = scmp.eq.s32.totalorder %s16, 3
    %p46 = por %p44, %p45
    %p47 = scmp.ne.s32.totalorder %s36, %s37
    %p48 = scmp.eq.s32.totalorder %s16, 0
    %p49 = por %p47, %p48
    %p50 = scmp.ne.s32.totalorder %s36, %s37
    %p51 = scmp.eq.s32.totalorder %s17, 3
    %p52 = por %p50, %p51
    %p54 = scmp.ne.s32.totalorder %s37, %s53
    %p55 = scmp.eq.s32.totalorder %s17, 0
    %p56 = por %p54, %p55
    %s57 = ssub.s32 %s18, %s30
    %s58 = ssub.s32 %s19, %s26
    %s59 = sor.u32 %s57, %s58
    %p60 = scmp.eq.s32.totalorder %s59, 0
    %s62 = sadd.s32 %s61, 1
    %s63 = scalar_select %p60, %s61, %s62
    %p66 = pneg %p60
    %p67 = scmp.eq.s32.totalorder %s11, 3
    %p68 = por %p66, %p67
    %p69 = scmp.ne.s32.totalorder %s61, %s64
    %p70 = scmp.eq.s32.totalorder %s11, 0
    %p71 = por %p69, %p70
    %p72 = scmp.ne.s32.totalorder %s61, %s64
    %p73 = scmp.eq.s32.totalorder %s16, 3
    %p74 = por %p72, %p73
    %p75 = scmp.ne.s32.totalorder %s64, %s65
    %p76 = scmp.eq.s32.totalorder %s16, 0
    %p77 = por %p75, %p76
    %p78 = scmp.ne.s32.totalorder %s64, %s65
    %p79 = scmp.eq.s32.totalorder %s17, 3
    %p80 = por %p78, %p79
    %p82 = scmp.ne.s32.totalorder %s65, %s81
    %p83 = scmp.eq.s32.totalorder %s17, 0
    %p84 = por %p82, %p83
    %s85 = ssub.s32 %s18, %s30
    %s86 = ssub.s32 %s19, %s26
    %s87 = sor.u32 %s85, %s86
    %p88 = scmp.eq.s32.totalorder %s87, 0
    %s90 = sadd.s32 %s89, 1
    %s91 = scalar_select %p88, %s89, %s90
    %p94 = pneg %p88
    %p95 = scmp.eq.s32.totalorder %s11, 3
    %p96 = por %p94, %p95
    %p97 = scmp.ne.s32.totalorder %s89, %s92
    %p98 = scmp.eq.s32.totalorder %s11, 0
    %p99 = por %p97, %p98
    %p100 = scmp.ne.s32.totalorder %s89, %s92
    %p101 = scmp.eq.s32.totalorder %s16, 3
    %p102 = por %p100, %p101
    %p103 = scmp.ne.s32.totalorder %s92, %s93
    %p104 = scmp.eq.s32.totalorder %s16, 0
    %p105 = por %p103, %p104
    %p106 = scmp.ne.s32.totalorder %s92, %s93
    %p107 = scmp.eq.s32.totalorder %s17, 3
    %p108 = por %p106, %p107
    %p110 = scmp.ne.s32.totalorder %s93, %s109
    %p111 = scmp.eq.s32.totalorder %s17, 0
    %p112 = por %p110, %p111
    %s113 = ssub.s32 %s18, %s30
    %s114 = ssub.s32 %s19, %s26
    %s115 = sor.u32 %s113, %s114
    %p116 = scmp.eq.s32.totalorder %s115, 0
    %s118 = sadd.s32 %s117, 1
    %s119 = scalar_select %p116, %s117, %s118
    %p122 = pneg %p116
    %p123 = scmp.eq.s32.totalorder %s11, 3
    %p124 = por %p122, %p123
    %p125 = scmp.ne.s32.totalorder %s117, %s120
    %p126 = scmp.eq.s32.totalorder %s11, 0
    %p127 = por %p125, %p126
    %p128 = scmp.ne.s32.totalorder %s117, %s120
    %p129 = scmp.eq.s32.totalorder %s16, 3
    %p130 = por %p128, %p129
    %p131 = scmp.ne.s32.totalorder %s120, %s121
    %p132 = scmp.eq.s32.totalorder %s16, 0
    %p133 = por %p131, %p132
    %p134 = scmp.ne.s32.totalorder %s120, %s121
    %p135 = scmp.eq.s32.totalorder %s17, 3
    %p136 = por %p134, %p135
    %p138 = scmp.ne.s32.totalorder %s121, %s137
    %p139 = scmp.eq.s32.totalorder %s17, 0
    %p140 = por %p138, %p139
    %s141 = ssub.s32 %s18, %s30
    %s142 = ssub.s32 %s19, %s26
    %s143 = sor.u32 %s141, %s142
    %p144 = scmp.eq.s32.totalorder %s143, 0
    %s146 = sadd.s32 %s145, 1
    %s147 = scalar_select %p144, %s145, %s146
    %p150 = pneg %p144
    %p151 = scmp.eq.s32.totalorder %s11, 3
    %p152 = por %p150, %p151
    %p153 = scmp.ne.s32.totalorder %s145, %s148
    %p154 = scmp.eq.s32.totalorder %s11, 0
    %p155 = por %p153, %p154
    %p156 = scmp.ne.s32.totalorder %s145, %s148
    %p157 = scmp.eq.s32.totalorder %s16, 3
    %p158 = por %p156, %p157
    %p159 = scmp.ne.s32.totalorder %s148, %s149
    %p160 = scmp.eq.s32.totalorder %s16, 0
    %p161 = por %p159, %p160
    %p162 = scmp.ne.s32.totalorder %s148, %s149
    %p163 = scmp.eq.s32.totalorder %s17, 3
    %p164 = por %p162, %p163
    %p166 = scmp.ne.s32.totalorder %s149, %s165
    %p167 = scmp.eq.s32.totalorder %s17, 0
    %p168 = por %p166, %p167
    %p169 = scmp.le.s32.totalorder 1, %s11
    %p170 = scmp.lt.s32.totalorder %s11, 5
    %p171 = pnand %p169, %p170
    %p172 = pneg %p171
    // Predicated region
    $region9: #{generator_forward.11} parent=5 // pred_check
      _
    $region10: #{generator_forward.11} parent=5 // pred_check_branch
      %174 = sbr.rel (%p171) target = $region12
    $region11: #{generator_forward.11} parent=5 // pred_region
      %s175 = ssub.s32 %s11, 1
    $region12: #{generator_forward.11} parent=5 // pred_fallthru
      _
    %p176 = scmp.lt.s32.totalorder %s11, 4
    // Predicated region
    $region13: #{generator_forward.11} parent=5 // pred_check
      %p177 = pneg %p176
    $region14: #{generator_forward.11} parent=5 // pred_check_branch
      %179 = sbr.rel (%p177) target = $region16
    $region15: #{generator_forward.11} parent=5 // pred_region
      // Predicated region
      $region17: #{generator_forward.11} parent=15 // pred_check
        %p180 = pneg %p43
      $region18: #{generator_forward.11} parent=15 // pred_check_branch
        %182 = sbr.rel (%p180) target = $region20
      $region19: #{generator_forward.11} parent=15 // pred_region
        %p183 = scmp.lt.s32.totalorder %s18, 3
        %s184 = scalar_select %p183, %s18, 3
        %s185 = smul.addr %s184, 2
        %s186 = smul.addr %s185, 8
        %s187 = scalar_lea.vmem %s0, %s186
      $region20: #{generator_forward.11} parent=15 // pred_fallthru
        _
      // Predicated region
      $region21: #{generator_forward.11} parent=15 // pred_check
        %p188 = pneg %p71
      $region22: #{generator_forward.11} parent=15 // pred_check_branch
        %190 = sbr.rel (%p188) target = $region24
      $region23: #{generator_forward.11} parent=15 // pred_region
        %p191 = scmp.lt.s32.totalorder %s18, 3
        %s192 = scalar_select %p191, %s18, 3
        %p193 = scmp.lt.s32.totalorder %s19, 0
        %s194 = scalar_select %p193, %s19, 0
        %s195 = smul.addr %s192, 16
        %s196 = sadd.s32 %s194, %s195
        %s197 = smul.addr %s196, 8
        %s198 = scalar_lea.vmem %s1, %s197
      $region24: #{generator_forward.11} parent=15 // pred_fallthru
        _
    $region16: #{generator_forward.11} parent=5 // pred_fallthru
      _
    %p199 = scmp.le.s32.totalorder 1, %s11
    %p200 = scmp.lt.s32.totalorder %s11, 5
    %p201 = pnand %p199, %p200
    %p202 = pneg %p201
    // Predicated region
    $region25: #{generator_forward.11} parent=5 // pred_check
      _
    $region26: #{generator_forward.11} parent=5 // pred_check_branch
      %204 = sbr.rel (%p201) target = $region28
    $region27: #{generator_forward.11} parent=5 // pred_region
      %s205 = ssub.s32 %s11, 1
      %p206 = scmp.lt.s32.totalorder %s20, 3
      %s207 = scalar_select %p206, %s20, 3
      %s208 = smul.addr %s207, 2
      %s209 = smul.addr %s208, 8
      %s210 = scalar_lea.vmem %s0, %s209
      %p211 = pneg %p49
      %p212 = pneg %p46
      %p213 = scmp.lt.s32.totalorder %s20, 3
      %s214 = scalar_select %p213, %s20, 3
      %p215 = scmp.lt.s32.totalorder %s21, 0
      %s216 = scalar_select %p215, %s21, 0
      %s217 = smul.addr %s214, 16
      %s218 = sadd.s32 %s216, %s217
      %s219 = smul.addr %s218, 8
      %s220 = scalar_lea.vmem %s1, %s219
      %p221 = pneg %p77
      %p222 = pneg %p74
      %p223 = pneg %p105
      %p224 = pneg %p102
      %p225 = scmp.lt.s32.totalorder %s20, 3
      %s226 = scalar_select %p225, %s20, 3
      %p227 = scmp.lt.s32.totalorder %s21, 0
      %s228 = scalar_select %p227, %s21, 0
      %s229 = smul.addr %s226, 2
      %s230 = sadd.s32 %s228, %s229
      %s231 = smul.addr %s230, 8
      %s232 = scalar_lea.vmem %s2, %s231
      %p233 = pneg %p133
      %p234 = pneg %p130
      %p235 = scmp.lt.s32.totalorder %s20, 3
      %s236 = scalar_select %p235, %s20, 3
      %p237 = scmp.lt.s32.totalorder %s21, 0
      %s238 = scalar_select %p237, %s21, 0
      %s239 = smul.addr %s238, 2
      %s240 = smul.addr %s236, 2
      %s241 = sadd.s32 %s239, %s240
      %s242 = smul.addr %s241, 8
      %s243 = scalar_lea.vmem %s3, %s242
      %p244 = pneg %p161
      %p245 = pneg %p158
      %p246 = scmp.lt.s32.totalorder %s20, 3
      %s247 = scalar_select %p246, %s20, 3
      %p248 = scmp.lt.s32.totalorder %s21, 0
      %s249 = scalar_select %p248, %s21, 0
      %s250 = smul.addr %s249, 2
      %s251 = smul.addr %s247, 2
      %s252 = sadd.s32 %s250, %s251
      %s253 = smul.addr %s252, 8
      %s254 = scalar_lea.vmem %s4, %s253
      %p255 = scmp.lt.s32.totalorder %s20, 3
      %s256 = scalar_select %p255, %s20, 3
      %s257 = smul.addr %s256, 2
      %s258 = smul.addr %s257, 8
      %s259 = scalar_lea.vmem %s0, %s258
      %p260 = scmp.lt.s32.totalorder %s20, 3
      %s261 = scalar_select %p260, %s20, 3
      %p262 = scmp.lt.s32.totalorder %s21, 0
      %s263 = scalar_select %p262, %s21, 0
      %s264 = smul.addr %s261, 16
      %s265 = sadd.s32 %s263, %s264
      %s266 = smul.addr %s265, 8
      %s267 = scalar_lea.vmem %s1, %s266
      %p268 = scmp.lt.s32.totalorder %s20, 3
      %s269 = scalar_select %p268, %s20, 3
      %p270 = scmp.lt.s32.totalorder %s21, 0
      %s271 = scalar_select %p270, %s21, 0
      %s272 = smul.addr %s269, 2
      %s273 = sadd.s32 %s271, %s272
      %s274 = smul.addr %s273, 8
      %s275 = scalar_lea.vmem %s2, %s274
      %p276 = scmp.lt.s32.totalorder %s20, 3
      %s277 = scalar_select %p276, %s20, 3
      %p278 = scmp.lt.s32.totalorder %s21, 0
      %s279 = scalar_select %p278, %s21, 0
      %s280 = smul.addr %s279, 2
      %s281 = smul.addr %s277, 2
      %s282 = sadd.s32 %s280, %s281
      %s283 = smul.addr %s282, 8
      %s284 = scalar_lea.vmem %s3, %s283
      %p285 = scmp.lt.s32.totalorder %s20, 3
      %s286 = scalar_select %p285, %s20, 3
      %p287 = scmp.lt.s32.totalorder %s21, 0
      %s288 = scalar_select %p287, %s21, 0
      %s289 = smul.addr %s288, 2
      %s290 = smul.addr %s286, 2
      %s291 = sadd.s32 %s289, %s290
      %s292 = smul.addr %s291, 8
      %s293 = scalar_lea.vmem %s4, %s292
      %v294 = vld [vmem:[%s259] sm:$0xff]
      %v295 = vld [vmem:[%s259 + $0x8] sm:$0xff]
      %v296 = vld [vmem:[%s267] sm:$0xff]
      %v297 = vld [vmem:[%s267 + $0x8] sm:$0xff]
      %v298 = vld [vmem:[%s267 + $0x10] sm:$0xff]
      %v299 = vld [vmem:[%s267 + $0x18] sm:$0xff]
      %v300 = vld [vmem:[%s267 + $0x20] sm:$0xff]
      %v301 = vld [vmem:[%s267 + $0x28] sm:$0xff]
      %v302 = vld [vmem:[%s267 + $0x30] sm:$0xff]
      %v303 = vld [vmem:[%s267 + $0x38] sm:$0xff]
      %v304 = vld [vmem:[%s267 + $0x40] sm:$0xff]
      %v305 = vld [vmem:[%s267 + $0x48] sm:$0xff]
      %v306 = vld [vmem:[%s267 + $0x50] sm:$0xff]
      %v307 = vld [vmem:[%s267 + $0x58] sm:$0xff]
      %v308 = vld [vmem:[%s267 + $0x60] sm:$0xff]
      %v309 = vld [vmem:[%s267 + $0x68] sm:$0xff]
      %v310 = vld [vmem:[%s267 + $0x70] sm:$0xff]
      %v311 = vld [vmem:[%s267 + $0x78] sm:$0xff]
      %312 = vmatpush.msra.mxu0 %v311
      %313 = vmatpush.msra.mxu0 %v310
      %314 = vmatpush.msra.mxu0 %v309
      %315 = vmatpush.msra.mxu0 %v308
      %316 = vmatpush.msra.mxu0 %v307
      %317 = vmatpush.msra.mxu0 %v306
      %318 = vmatpush.msra.mxu0 %v305
      %319 = vmatpush.msra.mxu0 %v304
      %320 = vmatpush.msra.mxu0 %v303
      %321 = vmatpush.msra.mxu0 %v302
      %322 = vmatpush.msra.mxu0 %v301
      %323 = vmatpush.msra.mxu0 %v300
      %324 = vmatpush.msra.mxu0 %v299
      %325 = vmatpush.msra.mxu0 %v298
      %326 = vmatpush.msra.mxu0 %v297
      %327 = vmatpush.msra.mxu0 %v296
      %328 = vmatmul.f32.gmra.mxu0 %v294
      %v329 = vpop.f32.mrf.mxu0
      %v330 = vadd.f32 0.0, %v329
      %331 = vmatmul.f32.gmra.mxu0 %v295
      %v332 = vpop.f32.mrf.mxu0
      %v333 = vadd.f32 0.0, %v332
      %334 = vdwg.mxu0
      %335 = vst [vmem:[%s275] sm:$0xff] %v330
      %336 = vst [vmem:[%s275 + $0x8] sm:$0xff] %v333
      %337 = vadd.xlane.f32.xlu0 %v330
      %v338 = vpop.xlane.xlu0 %337
      %339 = vadd.xlane.f32.xlu0 %v333
      %v340 = vpop.xlane.xlu0 %339
      %vm341 = vcmask 7168
      %342 = vst.msk [vmem:[%s284] sm:$0xff] %vm341, %v338
      %343 = vst.msk [vmem:[%s284 + $0x8] sm:$0xff] %vm341, %v340
      %v344 = vmul.f32 %v330, %v330
      %v345 = vmul.f32 %v333, %v333
      %346 = vadd.xlane.f32.xlu0 %v344
      %v347 = vpop.xlane.xlu0 %346
      %348 = vadd.xlane.f32.xlu0 %v345
      %v349 = vpop.xlane.xlu0 %348
      %350 = vst.msk [vmem:[%s293] sm:$0xff] %vm341, %v347
      %351 = vst.msk [vmem:[%s293 + $0x8] sm:$0xff] %vm341, %v349
      %p352 = scmp.lt.s32.totalorder %s20, 3
      %s353 = scalar_select %p352, %s20, 3
      %p354 = scmp.lt.s32.totalorder %s21, 0
      %s355 = scalar_select %p354, %s21, 0
      %s356 = smul.addr %s353, 2
      %s357 = sadd.s32 %s355, %s356
      %s358 = smul.addr %s357, 8
      %s359 = scalar_lea.vmem %s2, %s358
      %p360 = scmp.lt.s32.totalorder %s20, 3
      %s361 = scalar_select %p360, %s20, 3
      %p362 = scmp.lt.s32.totalorder %s21, 0
      %s363 = scalar_select %p362, %s21, 0
      %s364 = smul.addr %s363, 2
      %s365 = smul.addr %s361, 2
      %s366 = sadd.s32 %s364, %s365
      %s367 = smul.addr %s366, 8
      %s368 = scalar_lea.vmem %s3, %s367
      %p369 = scmp.lt.s32.totalorder %s20, 3
      %s370 = scalar_select %p369, %s20, 3
      %p371 = scmp.lt.s32.totalorder %s21, 0
      %s372 = scalar_select %p371, %s21, 0
      %s373 = smul.addr %s372, 2
      %s374 = smul.addr %s370, 2
      %s375 = sadd.s32 %s373, %s374
      %s376 = smul.addr %s375, 8
      %s377 = scalar_lea.vmem %s4, %s376
      // Predicated region
      $region29: #{generator_forward.11} parent=27 // pred_check
        %p378 = pneg %p102
      $region30: #{generator_forward.11} parent=27 // pred_check_branch
        %380 = sbr.rel (%p378) target = $region32
      $region31: #{generator_forward.11} parent=27 // pred_region
        _
      $region32: #{generator_forward.11} parent=27 // pred_fallthru
        _
      // Predicated region
      $region33: #{generator_forward.11} parent=27 // pred_check
        %p381 = pneg %p130
      $region34: #{generator_forward.11} parent=27 // pred_check_branch
        %383 = sbr.rel (%p381) target = $region36
      $region35: #{generator_forward.11} parent=27 // pred_region
        _
      $region36: #{generator_forward.11} parent=27 // pred_fallthru
        _
      // Predicated region
      $region37: #{generator_forward.11} parent=27 // pred_check
        %p384 = pneg %p158
      $region38: #{generator_forward.11} parent=27 // pred_check_branch
        %386 = sbr.rel (%p384) target = $region40
      $region39: #{generator_forward.11} parent=27 // pred_region
        _
      $region40: #{generator_forward.11} parent=27 // pred_fallthru
        _
    $region28: #{generator_forward.11} parent=5 // pred_fallthru
      _
    %p387 = scmp.le.s32.totalorder 2, %s11
    // Predicated region
    $region41: #{generator_forward.11} parent=5 // pred_check
      %p388 = pneg %p387
    $region42: #{generator_forward.11} parent=5 // pred_check_branch
      %390 = sbr.rel (%p388) target = $region44
    $region43: #{generator_forward.11} parent=5 // pred_region
      %s391 = ssub.s32 %s11, 2
      // Predicated region
      $region45: #{generator_forward.11} parent=43 // pred_check
        %p392 = pneg %p108
      $region46: #{generator_forward.11} parent=43 // pred_check_branch
        %394 = sbr.rel (%p392) target = $region48
      $region47: #{generator_forward.11} parent=43 // pred_region
        %p395 = scmp.lt.s32.totalorder %s22, 3
        %s396 = scalar_select %p395, %s22, 3
        %p397 = scmp.lt.s32.totalorder %s23, 0
        %s398 = scalar_select %p397, %s23, 0
        %s399 = smul.addr %s396, 2
        %s400 = sadd.s32 %s398, %s399
        %s401 = smul.addr %s400, 8
        %s402 = scalar_lea.vmem %s2, %s401
      $region48: #{generator_forward.11} parent=43 // pred_fallthru
        _
      // Predicated region
      $region49: #{generator_forward.11} parent=43 // pred_check
        %p403 = pneg %p136
      $region50: #{generator_forward.11} parent=43 // pred_check_branch
        %405 = sbr.rel (%p403) target = $region52
      $region51: #{generator_forward.11} parent=43 // pred_region
        %p406 = scmp.lt.s32.totalorder %s22, 3
        %s407 = scalar_select %p406, %s22, 3
        %p408 = scmp.lt.s32.totalorder %s23, 0
        %s409 = scalar_select %p408, %s23, 0
        %s410 = smul.addr %s409, 2
        %s411 = smul.addr %s407, 2
        %s412 = sadd.s32 %s410, %s411
        %s413 = smul.addr %s412, 8
        %s414 = scalar_lea.vmem %s3, %s413
      $region52: #{generator_forward.11} parent=43 // pred_fallthru
        _
      // Predicated region
      $region53: #{generator_forward.11} parent=43 // pred_check
        %p415 = pneg %p164
      $region54: #{generator_forward.11} parent=43 // pred_check_branch
        %417 = sbr.rel (%p415) target = $region56
      $region55: #{generator_forward.11} parent=43 // pred_region
        %p418 = scmp.lt.s32.totalorder %s22, 3
        %s419 = scalar_select %p418, %s22, 3
        %p420 = scmp.lt.s32.totalorder %s23, 0
        %s421 = scalar_select %p420, %s23, 0
        %s422 = smul.addr %s421, 2
        %s423 = smul.addr %s419, 2
        %s424 = sadd.s32 %s422, %s423
        %s425 = smul.addr %s424, 8
        %s426 = scalar_lea.vmem %s4, %s425
      $region56: #{generator_forward.11} parent=43 // pred_fallthru
        _
    $region44: #{generator_forward.11} parent=5 // pred_fallthru
      _
  $region6: #{generator_forward.11} parent=0 // loop_footer
    %s15 = sadd.s32 1, %s11
  $region7: #{generator_forward.11} parent=0 // loop_footer_branch
    %10 = sbr.rel target = $region3
  $region8: #{generator_forward.11} parent=0 // loop_exit
    _

// kernel: generator_forward.13
$region0: #{generator_forward.13}
  #allocation0 [shape = 'u32[]', space=smem, size = 0x4, offset = 0x4, fixed_abs, tag = 'smem constant byte address 0x4 - core index']
  #allocation1 [shape = 'u32[72,128]{1,0:T(1,128)}', space=vmem, size = 0x9000, scoped, tag = 'internal scratch']
  %s0 = inlined_call_operand.vmem [shape: f32[4,8,64], index: 0, kind: input, shape index: {}]
  %s1 = inlined_call_operand.vmem [shape: f32[4,64,512], index: 1, kind: input, shape index: {}]
  %s2 = inlined_call_operand.vmem [shape: f32[4,8,512], index: 2, kind: output, shape index: {0}]
  %s3 = inlined_call_operand.vmem [shape: f32[4,1,8,1], index: 3, kind: output, shape index: {1}]
  %s4 = inlined_call_operand.vmem [shape: f32[4,1,8,1], index: 4, kind: output, shape index: {2}]
  %5 = xla_tuple %s2, %s3, %s4
  %s6 = sld [smem:[#allocation0]]
  $region57: #{generator_forward.13} parent=0
    _
  %s8 = ssub.s32 1, %s6
  %s9 = scalar_select 0, %s8, %s6
  loop: start=0, step=1, limit=6
  $region2: #{generator_forward.13} parent=0 // loop_pre_header
    _
  $region3: #{generator_forward.13} parent=0 // loop_header
    %s11 = sphi 0, %s15
    %p12 = scmp.ge.s32.totalorder %s11, 6
    %s18 = sphi 0, %s30
    %s19 = sphi 0, %s26
    %s20 = sphi 0, %s18
    %s21 = sphi 0, %s19
    %s22 = sphi 0, %s20
    %s23 = sphi 0, %s21
    %s33 = sphi 0, %s35
    %s36 = sphi 0, %s33
    %s37 = sphi 0, %s36
    %s53 = sphi 0, %s37
    %s61 = sphi 0, %s63
    %s64 = sphi 0, %s61
    %s65 = sphi 0, %s64
    %s81 = sphi 0, %s65
    %s89 = sphi 0, %s91
    %s92 = sphi 0, %s89
    %s93 = sphi 0, %s92
    %s109 = sphi 0, %s93
    %s117 = sphi 0, %s119
    %s120 = sphi 0, %s117
    %s121 = sphi 0, %s120
    %s137 = sphi 0, %s121
    %s145 = sphi 0, %s147
    %s148 = sphi 0, %s145
    %s149 = sphi 0, %s148
    %s165 = sphi 0, %s149
  $region4: #{generator_forward.13} parent=0 // loop_header_branch
    %14 = sbr.rel (%p12) target = $region8
  $region5: #{generator_forward.13} parent=0 // loop_body
    %s16 = ssub.s32 %s11, 1
    %s17 = ssub.s32 %s11, 2
    %s24 = sadd.s32 1, %s19
    %p25 = scmp.ge.s32.totalorder %s24, 1
    %s26 = scalar_select %p25, 0, %s24
    %s27 = sadd.s32 1, %s18
    %s28 = scalar_select %p25, %s27, %s18
    %p29 = scmp.ge.s32.totalorder %s28, 4
    %s30 = scalar_select %p29, 0, %s28
    %s31 = ssub.s32 %s18, %s30
    %p32 = scmp.eq.s32.totalorder %s31, 0
    %s34 = sadd.s32 %s33, 1
    %s35 = scalar_select %p32, %s33, %s34
    %p38 = pneg %p32
    %p39 = scmp.eq.s32.totalorder %s11, 3
    %p40 = por %p38, %p39
    %p41 = scmp.ne.s32.totalorder %s33, %s36
    %p42 = scmp.eq.s32.totalorder %s11, 0
    %p43 = por %p41, %p42
    %p44 = scmp.ne.s32.totalorder %s33, %s36
    %p45 = scmp.eq.s32.totalorder %s16, 3
    %p46 = por %p44, %p45
    %p47 = scmp.ne.s32.totalorder %s36, %s37
    %p48 = scmp.eq.s32.totalorder %s16, 0
    %p49 = por %p47, %p48
    %p50 = scmp.ne.s32.totalorder %s36, %s37
    %p51 = scmp.eq.s32.totalorder %s17, 3
    %p52 = por %p50, %p51
    %p54 = scmp.ne.s32.totalorder %s37, %s53
    %p55 = scmp.eq.s32.totalorder %s17, 0
    %p56 = por %p54, %p55
    %s57 = ssub.s32 %s18, %s30
    %s58 = ssub.s32 %s19, %s26
    %s59 = sor.u32 %s57, %s58
    %p60 = scmp.eq.s32.totalorder %s59, 0
    %s62 = sadd.s32 %s61, 1
    %s63 = scalar_select %p60, %s61, %s62
    %p66 = pneg %p60
    %p67 = scmp.eq.s32.totalorder %s11, 3
    %p68 = por %p66, %p67
    %p69 = scmp.ne.s32.totalorder %s61, %s64
    %p70 = scmp.eq.s32.totalorder %s11, 0
    %p71 = por %p69, %p70
    %p72 = scmp.ne.s32.totalorder %s61, %s64
    %p73 = scmp.eq.s32.totalorder %s16, 3
    %p74 = por %p72, %p73
    %p75 = scmp.ne.s32.totalorder %s64, %s65
    %p76 = scmp.eq.s32.totalorder %s16, 0
    %p77 = por %p75, %p76
    %p78 = scmp.ne.s32.totalorder %s64, %s65
    %p79 = scmp.eq.s32.totalorder %s17, 3
    %p80 = por %p78, %p79
    %p82 = scmp.ne.s32.totalorder %s65, %s81
    %p83 = scmp.eq.s32.totalorder %s17, 0
    %p84 = por %p82, %p83
    %s85 = ssub.s32 %s18, %s30
    %s86 = ssub.s32 %s19, %s26
    %s87 = sor.u32 %s85, %s86
    %p88 = scmp.eq.s32.totalorder %s87, 0
    %s90 = sadd.s32 %s89, 1
    %s91 = scalar_select %p88, %s89, %s90
    %p94 = pneg %p88
    %p95 = scmp.eq.s32.totalorder %s11, 3
    %p96 = por %p94, %p95
    %p97 = scmp.ne.s32.totalorder %s89, %s92
    %p98 = scmp.eq.s32.totalorder %s11, 0
    %p99 = por %p97, %p98
    %p100 = scmp.ne.s32.totalorder %s89, %s92
    %p101 = scmp.eq.s32.totalorder %s16, 3
    %p102 = por %p100, %p101
    %p103 = scmp.ne.s32.totalorder %s92, %s93
    %p104 = scmp.eq.s32.totalorder %s16, 0
    %p105 = por %p103, %p104
    %p106 = scmp.ne.s32.totalorder %s92, %s93
    %p107 = scmp.eq.s32.totalorder %s17, 3
    %p108 = por %p106, %p107
    %p110 = scmp.ne.s32.totalorder %s93, %s109
    %p111 = scmp.eq.s32.totalorder %s17, 0
    %p112 = por %p110, %p111
    %s113 = ssub.s32 %s18, %s30
    %s114 = ssub.s32 %s19, %s26
    %s115 = sor.u32 %s113, %s114
    %p116 = scmp.eq.s32.totalorder %s115, 0
    %s118 = sadd.s32 %s117, 1
    %s119 = scalar_select %p116, %s117, %s118
    %p122 = pneg %p116
    %p123 = scmp.eq.s32.totalorder %s11, 3
    %p124 = por %p122, %p123
    %p125 = scmp.ne.s32.totalorder %s117, %s120
    %p126 = scmp.eq.s32.totalorder %s11, 0
    %p127 = por %p125, %p126
    %p128 = scmp.ne.s32.totalorder %s117, %s120
    %p129 = scmp.eq.s32.totalorder %s16, 3
    %p130 = por %p128, %p129
    %p131 = scmp.ne.s32.totalorder %s120, %s121
    %p132 = scmp.eq.s32.totalorder %s16, 0
    %p133 = por %p131, %p132
    %p134 = scmp.ne.s32.totalorder %s120, %s121
    %p135 = scmp.eq.s32.totalorder %s17, 3
    %p136 = por %p134, %p135
    %p138 = scmp.ne.s32.totalorder %s121, %s137
    %p139 = scmp.eq.s32.totalorder %s17, 0
    %p140 = por %p138, %p139
    %s141 = ssub.s32 %s18, %s30
    %s142 = ssub.s32 %s19, %s26
    %s143 = sor.u32 %s141, %s142
    %p144 = scmp.eq.s32.totalorder %s143, 0
    %s146 = sadd.s32 %s145, 1
    %s147 = scalar_select %p144, %s145, %s146
    %p150 = pneg %p144
    %p151 = scmp.eq.s32.totalorder %s11, 3
    %p152 = por %p150, %p151
    %p153 = scmp.ne.s32.totalorder %s145, %s148
    %p154 = scmp.eq.s32.totalorder %s11, 0
    %p155 = por %p153, %p154
    %p156 = scmp.ne.s32.totalorder %s145, %s148
    %p157 = scmp.eq.s32.totalorder %s16, 3
    %p158 = por %p156, %p157
    %p159 = scmp.ne.s32.totalorder %s148, %s149
    %p160 = scmp.eq.s32.totalorder %s16, 0
    %p161 = por %p159, %p160
    %p162 = scmp.ne.s32.totalorder %s148, %s149
    %p163 = scmp.eq.s32.totalorder %s17, 3
    %p164 = por %p162, %p163
    %p166 = scmp.ne.s32.totalorder %s149, %s165
    %p167 = scmp.eq.s32.totalorder %s17, 0
    %p168 = por %p166, %p167
    %p169 = scmp.le.s32.totalorder 1, %s11
    %p170 = scmp.lt.s32.totalorder %s11, 5
    %p171 = pnand %p169, %p170
    %p172 = pneg %p171
    // Predicated region
    $region9: #{generator_forward.13} parent=5 // pred_check
      _
    $region10: #{generator_forward.13} parent=5 // pred_check_branch
      %174 = sbr.rel (%p171) target = $region12
    $region11: #{generator_forward.13} parent=5 // pred_region
      %s175 = ssub.s32 %s11, 1
    $region12: #{generator_forward.13} parent=5 // pred_fallthru
      _
    %p176 = scmp.lt.s32.totalorder %s11, 4
    // Predicated region
    $region13: #{generator_forward.13} parent=5 // pred_check
      %p177 = pneg %p176
    $region14: #{generator_forward.13} parent=5 // pred_check_branch
      %179 = sbr.rel (%p177) target = $region16
    $region15: #{generator_forward.13} parent=5 // pred_region
      // Predicated region
      $region17: #{generator_forward.13} parent=15 // pred_check
        %p180 = pneg %p43
      $region18: #{generator_forward.13} parent=15 // pred_check_branch
        %182 = sbr.rel (%p180) target = $region20
      $region19: #{generator_forward.13} parent=15 // pred_region
        %p183 = scmp.lt.s32.totalorder %s18, 3
        %s184 = scalar_select %p183, %s18, 3
        %s185 = smul.addr %s184, 8
        %s186 = scalar_lea.vmem %s0, %s185
      $region20: #{generator_forward.13} parent=15 // pred_fallthru
        _
      // Predicated region
      $region21: #{generator_forward.13} parent=15 // pred_check
        %p187 = pneg %p71
      $region22: #{generator_forward.13} parent=15 // pred_check_branch
        %189 = sbr.rel (%p187) target = $region24
      $region23: #{generator_forward.13} parent=15 // pred_region
        %s190 = smul.u32 4, %s19
        %p191 = scmp.lt.s32.totalorder %s18, 3
        %s192 = scalar_select %p191, %s18, 3
        %p193 = scmp.lt.s32.totalorder %s190, 3
        %s194 = scalar_select %p193, %s190, 3
        %s195 = smul.addr %s192, 32
        %s196 = sadd.s32 %s194, %s195
        %s197 = smul.addr %s196, 8
        %s198 = scalar_lea.vmem %s1, %s197
        %s199 = smul.u32 4, %s19
      $region24: #{generator_forward.13} parent=15 // pred_fallthru
        _
    $region16: #{generator_forward.13} parent=5 // pred_fallthru
      _
    %p200 = scmp.le.s32.totalorder 1, %s11
    %p201 = scmp.lt.s32.totalorder %s11, 5
    %p202 = pnand %p200, %p201
    %p203 = pneg %p202
    // Predicated region
    $region25: #{generator_forward.13} parent=5 // pred_check
      _
    $region26: #{generator_forward.13} parent=5 // pred_check_branch
      %205 = sbr.rel (%p202) target = $region28
    $region27: #{generator_forward.13} parent=5 // pred_region
      %s206 = ssub.s32 %s11, 1
      %p207 = scmp.lt.s32.totalorder %s20, 3
      %s208 = scalar_select %p207, %s20, 3
      %s209 = smul.addr %s208, 8
      %s210 = scalar_lea.vmem %s0, %s209
      %p211 = pneg %p49
      %p212 = pneg %p46
      %s213 = smul.u32 4, %s21
      %p214 = scmp.lt.s32.totalorder %s20, 3
      %s215 = scalar_select %p214, %s20, 3
      %p216 = scmp.lt.s32.totalorder %s213, 3
      %s217 = scalar_select %p216, %s213, 3
      %s218 = smul.addr %s215, 32
      %s219 = sadd.s32 %s217, %s218
      %s220 = smul.addr %s219, 8
      %s221 = scalar_lea.vmem %s1, %s220
      %p222 = pneg %p77
      %p223 = pneg %p74
      %p224 = pneg %p105
      %p225 = pneg %p102
      %s226 = smul.u32 4, %s21
      %p227 = scmp.lt.s32.totalorder %s20, 3
      %s228 = scalar_select %p227, %s20, 3
      %p229 = scmp.lt.s32.totalorder %s226, 3
      %s230 = scalar_select %p229, %s226, 3
      %s231 = smul.addr %s228, 4
      %s232 = sadd.s32 %s230, %s231
      %s233 = smul.addr %s232, 8
      %s234 = scalar_lea.vmem %s2, %s233
      %p235 = pneg %p133
      %p236 = pneg %p130
      %p237 = scmp.lt.s32.totalorder %s20, 3
      %s238 = scalar_select %p237, %s20, 3
      %p239 = scmp.lt.s32.totalorder %s21, 0
      %s240 = scalar_select %p239, %s21, 0
      %s241 = sadd.s32 %s240, %s238
      %s242 = smul.addr %s241, 8
      %s243 = scalar_lea.vmem %s3, %s242
      %p244 = pneg %p161
      %p245 = pneg %p158
      %p246 = scmp.lt.s32.totalorder %s20, 3
      %s247 = scalar_select %p246, %s20, 3
      %p248 = scmp.lt.s32.totalorder %s21, 0
      %s249 = scalar_select %p248, %s21, 0
      %s250 = sadd.s32 %s249, %s247
      %s251 = smul.addr %s250, 8
      %s252 = scalar_lea.vmem %s4, %s251
      %p253 = scmp.lt.s32.totalorder %s20, 3
      %s254 = scalar_select %p253, %s20, 3
      %s255 = smul.addr %s254, 8
      %s256 = scalar_lea.vmem %s0, %s255
      %s257 = smul.u32 4, %s21
      %p258 = scmp.lt.s32.totalorder %s20, 3
      %s259 = scalar_select %p258, %s20, 3
      %p260 = scmp.lt.s32.totalorder %s257, 3
      %s261 = scalar_select %p260, %s257, 3
      %s262 = smul.addr %s259, 32
      %s263 = sadd.s32 %s261, %s262
      %s264 = smul.addr %s263, 8
      %s265 = scalar_lea.vmem %s1, %s264
      %s266 = smul.u32 4, %s21
      %s267 = smul.u32 4, %s21
      %p268 = scmp.lt.s32.totalorder %s20, 3
      %s269 = scalar_select %p268, %s20, 3
      %p270 = scmp.lt.s32.totalorder %s267, 3
      %s271 = scalar_select %p270, %s267, 3
      %s272 = smul.addr %s269, 4
      %s273 = sadd.s32 %s271, %s272
      %s274 = smul.addr %s273, 8
      %s275 = scalar_lea.vmem %s2, %s274
      %s276 = smul.u32 4, %s21
      %p277 = scmp.lt.s32.totalorder %s20, 3
      %s278 = scalar_select %p277, %s20, 3
      %p279 = scmp.lt.s32.totalorder %s21, 0
      %s280 = scalar_select %p279, %s21, 0
      %s281 = sadd.s32 %s280, %s278
      %s282 = smul.addr %s281, 8
      %s283 = scalar_lea.vmem %s3, %s282
      %p284 = scmp.lt.s32.totalorder %s20, 3
      %s285 = scalar_select %p284, %s20, 3
      %p286 = scmp.lt.s32.totalorder %s21, 0
      %s287 = scalar_select %p286, %s21, 0
      %s288 = sadd.s32 %s287, %s285
      %s289 = smul.addr %s288, 8
      %s290 = scalar_lea.vmem %s4, %s289
      %v291 = vld [vmem:[%s256] sm:$0xff]
      %v292 = vld [vmem:[%s265] sm:$0xff]
      %v293 = vld [vmem:[%s265 + $0x8] sm:$0xff]
      %v294 = vld [vmem:[%s265 + $0x10] sm:$0xff]
      %v295 = vld [vmem:[%s265 + $0x18] sm:$0xff]
      %v296 = vld [vmem:[%s265 + $0x20] sm:$0xff]
      %v297 = vld [vmem:[%s265 + $0x28] sm:$0xff]
      %v298 = vld [vmem:[%s265 + $0x30] sm:$0xff]
      %v299 = vld [vmem:[%s265 + $0x38] sm:$0xff]
      %v300 = vld [vmem:[%s265 + $0x40] sm:$0xff]
      %v301 = vld [vmem:[%s265 + $0x48] sm:$0xff]
      %v302 = vld [vmem:[%s265 + $0x50] sm:$0xff]
      %v303 = vld [vmem:[%s265 + $0x58] sm:$0xff]
      %v304 = vld [vmem:[%s265 + $0x60] sm:$0xff]
      %v305 = vld [vmem:[%s265 + $0x68] sm:$0xff]
      %v306 = vld [vmem:[%s265 + $0x70] sm:$0xff]
      %v307 = vld [vmem:[%s265 + $0x78] sm:$0xff]
      %v308 = vld [vmem:[%s265 + $0x80] sm:$0xff]
      %v309 = vld [vmem:[%s265 + $0x88] sm:$0xff]
      %v310 = vld [vmem:[%s265 + $0x90] sm:$0xff]
      %v311 = vld [vmem:[%s265 + $0x98] sm:$0xff]
      %v312 = vld [vmem:[%s265 + $0xa0] sm:$0xff]
      %v313 = vld [vmem:[%s265 + $0xa8] sm:$0xff]
      %v314 = vld [vmem:[%s265 + $0xb0] sm:$0xff]
      %v315 = vld [vmem:[%s265 + $0xb8] sm:$0xff]
      %v316 = vld [vmem:[%s265 + $0xc0] sm:$0xff]
      %v317 = vld [vmem:[%s265 + $0xc8] sm:$0xff]
      %v318 = vld [vmem:[%s265 + $0xd0] sm:$0xff]
      %v319 = vld [vmem:[%s265 + $0xd8] sm:$0xff]
      %v320 = vld [vmem:[%s265 + $0xe0] sm:$0xff]
      %v321 = vld [vmem:[%s265 + $0xe8] sm:$0xff]
      %v322 = vld [vmem:[%s265 + $0xf0] sm:$0xff]
      %v323 = vld [vmem:[%s265 + $0xf8] sm:$0xff]
      %vm324 = vcmask 523264
      %v326 = vsel %vm324, %v291, 0
      %328 = vmatpush.msra.mxu0 0.0
      %329 = vmatpush.msra.mxu0 0.0
      %330 = vmatpush.msra.mxu0 0.0
      %331 = vmatpush.msra.mxu0 0.0
      %332 = vmatpush.msra.mxu0 0.0
      %333 = vmatpush.msra.mxu0 0.0
      %334 = vmatpush.msra.mxu0 0.0
      %335 = vmatpush.msra.mxu0 0.0
      %336 = vmatpush.msra.mxu0 %v320
      %337 = vmatpush.msra.mxu0 %v316
      %338 = vmatpush.msra.mxu0 %v312
      %339 = vmatpush.msra.mxu0 %v308
      %340 = vmatpush.msra.mxu0 %v304
      %341 = vmatpush.msra.mxu0 %v300
      %342 = vmatpush.msra.mxu0 %v296
      %343 = vmatpush.msra.mxu0 %v292
      %344 = vmatmul.f32.gmra.mxu0 %v326
      %v345 = vpop.f32.mrf.mxu0
      %v346 = vadd.f32 0.0, %v345
      %347 = vdwg.mxu0
      %348 = vmatpush.msra.mxu0 0.0
      %349 = vmatpush.msra.mxu0 0.0
      %350 = vmatpush.msra.mxu0 0.0
      %351 = vmatpush.msra.mxu0 0.0
      %352 = vmatpush.msra.mxu0 0.0
      %353 = vmatpush.msra.mxu0 0.0
      %354 = vmatpush.msra.mxu0 0.0
      %355 = vmatpush.msra.mxu0 0.0
      %356 = vmatpush.msra.mxu0 %v321
      %357 = vmatpush.msra.mxu0 %v317
      %358 = vmatpush.msra.mxu0 %v313
      %359 = vmatpush.msra.mxu0 %v309
      %360 = vmatpush.msra.mxu0 %v305
      %361 = vmatpush.msra.mxu0 %v301
      %362 = vmatpush.msra.mxu0 %v297
      %363 = vmatpush.msra.mxu0 %v293
      %364 = vmatmul.f32.gmra.mxu0 %v326
      %v365 = vpop.f32.mrf.mxu0
      %v366 = vadd.f32 0.0, %v365
      %367 = vdwg.mxu0
      %368 = vmatpush.msra.mxu0 0.0
      %369 = vmatpush.msra.mxu0 0.0
      %370 = vmatpush.msra.mxu0 0.0
      %371 = vmatpush.msra.mxu0 0.0
      %372 = vmatpush.msra.mxu0 0.0
      %373 = vmatpush.msra.mxu0 0.0
      %374 = vmatpush.msra.mxu0 0.0
      %375 = vmatpush.msra.mxu0 0.0
      %376 = vmatpush.msra.mxu0 %v322
      %377 = vmatpush.msra.mxu0 %v318
      %378 = vmatpush.msra.mxu0 %v314
      %379 = vmatpush.msra.mxu0 %v310
      %380 = vmatpush.msra.mxu0 %v306
      %381 = vmatpush.msra.mxu0 %v302
      %382 = vmatpush.msra.mxu0 %v298
      %383 = vmatpush.msra.mxu0 %v294
      %384 = vmatmul.f32.gmra.mxu0 %v326
      %v385 = vpop.f32.mrf.mxu0
      %v386 = vadd.f32 0.0, %v385
      %387 = vdwg.mxu0
      %388 = vmatpush.msra.mxu0 0.0
      %389 = vmatpush.msra.mxu0 0.0
      %390 = vmatpush.msra.mxu0 0.0
      %391 = vmatpush.msra.mxu0 0.0
      %392 = vmatpush.msra.mxu0 0.0
      %393 = vmatpush.msra.mxu0 0.0
      %394 = vmatpush.msra.mxu0 0.0
      %395 = vmatpush.msra.mxu0 0.0
      %396 = vmatpush.msra.mxu0 %v323
      %397 = vmatpush.msra.mxu0 %v319
      %398 = vmatpush.msra.mxu0 %v315
      %399 = vmatpush.msra.mxu0 %v311
      %400 = vmatpush.msra.mxu0 %v307
      %401 = vmatpush.msra.mxu0 %v303
      %402 = vmatpush.msra.mxu0 %v299
      %403 = vmatpush.msra.mxu0 %v295
      %404 = vmatmul.f32.gmra.mxu0 %v326
      %v405 = vpop.f32.mrf.mxu0
      %v406 = vadd.f32 0.0, %v405
      %407 = vdwg.mxu0
      %408 = vst [vmem:[%s275] sm:$0xff] %v346
      %409 = vst [vmem:[%s275 + $0x8] sm:$0xff] %v366
      %410 = vst [vmem:[%s275 + $0x10] sm:$0xff] %v386
      %411 = vst [vmem:[%s275 + $0x18] sm:$0xff] %v406
      %v412 = vadd.f32 %v346, %v366
      %v413 = vadd.f32 %v412, %v386
      %v414 = vadd.f32 %v413, %v406
      %415 = vadd.xlane.f32.xlu0 %v414
      %v416 = vpop.xlane.xlu0 %415
      %vm417 = vcmask 7168
      %418 = vst.msk [vmem:[%s283] sm:$0xff] %vm417, %v416
      %v419 = vmul.f32 %v346, %v346
      %v420 = vmul.f32 %v366, %v366
      %v421 = vmul.f32 %v386, %v386
      %v422 = vmul.f32 %v406, %v406
      %v423 = vadd.f32 %v419, %v420
      %v424 = vadd.f32 %v423, %v421
      %v425 = vadd.f32 %v424, %v422
      %426 = vadd.xlane.f32.xlu0 %v425
      %v427 = vpop.xlane.xlu0 %426
      %428 = vst.msk [vmem:[%s290] sm:$0xff] %vm417, %v427
      %s429 = smul.u32 4, %s21
      %p430 = scmp.lt.s32.totalorder %s20, 3
      %s431 = scalar_select %p430, %s20, 3
      %p432 = scmp.lt.s32.totalorder %s429, 3
      %s433 = scalar_select %p432, %s429, 3
      %s434 = smul.addr %s431, 4
      %s435 = sadd.s32 %s433, %s434
      %s436 = smul.addr %s435, 8
      %s437 = scalar_lea.vmem %s2, %s436
      %p438 = scmp.lt.s32.totalorder %s20, 3
      %s439 = scalar_select %p438, %s20, 3
      %p440 = scmp.lt.s32.totalorder %s21, 0
      %s441 = scalar_select %p440, %s21, 0
      %s442 = sadd.s32 %s441, %s439
      %s443 = smul.addr %s442, 8
      %s444 = scalar_lea.vmem %s3, %s443
      %p445 = scmp.lt.s32.totalorder %s20, 3
      %s446 = scalar_select %p445, %s20, 3
      %p447 = scmp.lt.s32.totalorder %s21, 0
      %s448 = scalar_select %p447, %s21, 0
      %s449 = sadd.s32 %s448, %s446
      %s450 = smul.addr %s449, 8
      %s451 = scalar_lea.vmem %s4, %s450
      // Predicated region
      $region29: #{generator_forward.13} parent=27 // pred_check
        %p452 = pneg %p102
      $region30: #{generator_forward.13} parent=27 // pred_check_branch
        %454 = sbr.rel (%p452) target = $region32
      $region31: #{generator_forward.13} parent=27 // pred_region
        %s455 = smul.u32 4, %s21
      $region32: #{generator_forward.13} parent=27 // pred_fallthru
        _
      // Predicated region
      $region33: #{generator_forward.13} parent=27 // pred_check
        %p456 = pneg %p130
      $region34: #{generator_forward.13} parent=27 // pred_check_branch
        %458 = sbr.rel (%p456) target = $region36
      $region35: #{generator_forward.13} parent=27 // pred_region
        _
      $region36: #{generator_forward.13} parent=27 // pred_fallthru
        _
      // Predicated region
      $region37: #{generator_forward.13} parent=27 // pred_check
        %p459 = pneg %p158
      $region38: #{generator_forward.13} parent=27 // pred_check_branch
        %461 = sbr.rel (%p459) target = $region40
      $region39: #{generator_forward.13} parent=27 // pred_region
        _
      $region40: #{generator_forward.13} parent=27 // pred_fallthru
        _
    $region28: #{generator_forward.13} parent=5 // pred_fallthru
      _
    %p462 = scmp.le.s32.totalorder 2, %s11
    // Predicated region
    $region41: #{generator_forward.13} parent=5 // pred_check
      %p463 = pneg %p462
    $region42: #{generator_forward.13} parent=5 // pred_check_branch
      %465 = sbr.rel (%p463) target = $region44
    $region43: #{generator_forward.13} parent=5 // pred_region
      %s466 = ssub.s32 %s11, 2
      // Predicated region
      $region45: #{generator_forward.13} parent=43 // pred_check
        %p467 = pneg %p108
      $region46: #{generator_forward.13} parent=43 // pred_check_branch
        %469 = sbr.rel (%p467) target = $region48
      $region47: #{generator_forward.13} parent=43 // pred_region
        %s470 = smul.u32 4, %s23
        %p471 = scmp.lt.s32.totalorder %s22, 3
        %s472 = scalar_select %p471, %s22, 3
        %p473 = scmp.lt.s32.totalorder %s470, 3
        %s474 = scalar_select %p473, %s470, 3
        %s475 = smul.addr %s472, 4
        %s476 = sadd.s32 %s474, %s475
        %s477 = smul.addr %s476, 8
        %s478 = scalar_lea.vmem %s2, %s477
      $region48: #{generator_forward.13} parent=43 // pred_fallthru
        _
      // Predicated region
      $region49: #{generator_forward.13} parent=43 // pred_check
        %p479 = pneg %p136
      $region50: #{generator_forward.13} parent=43 // pred_check_branch
        %481 = sbr.rel (%p479) target = $region52
      $region51: #{generator_forward.13} parent=43 // pred_region
        %p482 = scmp.lt.s32.totalorder %s22, 3
        %s483 = scalar_select %p482, %s22, 3
        %p484 = scmp.lt.s32.totalorder %s23, 0
        %s485 = scalar_select %p484, %s23, 0
        %s486 = sadd.s32 %s485, %s483
        %s487 = smul.addr %s486, 8
        %s488 = scalar_lea.vmem %s3, %s487
      $region52: #{generator_forward.13} parent=43 // pred_fallthru
        _
      // Predicated region
      $region53: #{generator_forward.13} parent=43 // pred_check
        %p489 = pneg %p164
      $region54: #{generator_forward.13} parent=43 // pred_check_branch
        %491 = sbr.rel (%p489) target = $region56
      $region55: #{generator_forward.13} parent=43 // pred_region
        %p492 = scmp.lt.s32.totalorder %s22, 3
        %s493 = scalar_select %p492, %s22, 3
        %p494 = scmp.lt.s32.totalorder %s23, 0
        %s495 = scalar_select %p494, %s23, 0
        %s496 = sadd.s32 %s495, %s493
        %s497 = smul.addr %s496, 8
        %s498 = scalar_lea.vmem %s4, %s497
      $region56: #{generator_forward.13} parent=43 // pred_fallthru
        _
    $region44: #{generator_forward.13} parent=5 // pred_fallthru
      _
  $region6: #{generator_forward.13} parent=0 // loop_footer
    %s15 = sadd.s32 1, %s11
  $region7: #{generator_forward.13} parent=0 // loop_footer_branch
    %10 = sbr.rel target = $region3
  $region8: #{generator_forward.13} parent=0 // loop_exit
    _

// kernel: generator_forward.14
$region0: #{generator_forward.14}
  #allocation0 [shape = 'u32[]', space=smem, size = 0x4, offset = 0x4, fixed_abs, tag = 'smem constant byte address 0x4 - core index']
  #allocation1 [shape = 'u32[72,128]{1,0:T(1,128)}', space=vmem, size = 0x9000, scoped, tag = 'internal scratch']
  %s0 = inlined_call_operand.vmem [shape: f32[4,8,512], index: 0, kind: input, shape index: {}]
  %s1 = inlined_call_operand.vmem [shape: f32[8,1], index: 1, kind: input, shape index: {}]
  %s2 = inlined_call_operand.vmem [shape: f32[8,1], index: 2, kind: input, shape index: {}]
  %s3 = inlined_call_operand.vmem [shape: f32[4,8,512], index: 3, kind: output, shape index: {}]
  %s4 = sld [smem:[#allocation0]]
  $region45: #{generator_forward.14} parent=0
    _
  %s6 = ssub.s32 1, %s4
  %s7 = scalar_select 0, %s6, %s4
  loop: start=0, step=1, limit=6
  $region2: #{generator_forward.14} parent=0 // loop_pre_header
    _
  $region3: #{generator_forward.14} parent=0 // loop_header
    %s9 = sphi 0, %s13
    %p10 = scmp.ge.s32.totalorder %s9, 6
    %s16 = sphi 0, %s28
    %s17 = sphi 0, %s24
    %s18 = sphi 0, %s16
    %s19 = sphi 0, %s17
    %s20 = sphi 0, %s18
    %s21 = sphi 0, %s19
    %s33 = sphi 0, %s35
    %s36 = sphi 0, %s33
    %s37 = sphi 0, %s36
    %s53 = sphi 0, %s37
    %s57 = sphi 0, %s57
    %s59 = sphi 0, %s57
    %s60 = sphi 0, %s59
    %s74 = sphi 0, %s60
    %s78 = sphi 0, %s78
    %s80 = sphi 0, %s78
    %s81 = sphi 0, %s80
    %s95 = sphi 0, %s81
    %s103 = sphi 0, %s105
    %s106 = sphi 0, %s103
    %s107 = sphi 0, %s106
    %s123 = sphi 0, %s107
  $region4: #{generator_forward.14} parent=0 // loop_header_branch
    %12 = sbr.rel (%p10) target = $region8
  $region5: #{generator_forward.14} parent=0 // loop_body
    %s14 = ssub.s32 %s9, 1
    %s15 = ssub.s32 %s9, 2
    %s22 = sadd.s32 1, %s17
    %p23 = scmp.ge.s32.totalorder %s22, 1
    %s24 = scalar_select %p23, 0, %s22
    %s25 = sadd.s32 1, %s16
    %s26 = scalar_select %p23, %s25, %s16
    %p27 = scmp.ge.s32.totalorder %s26, 4
    %s28 = scalar_select %p27, 0, %s26
    %s29 = ssub.s32 %s16, %s28
    %s30 = ssub.s32 %s17, %s24
    %s31 = sor.u32 %s29, %s30
    %p32 = scmp.eq.s32.totalorder %s31, 0
    %s34 = sadd.s32 %s33, 1
    %s35 = scalar_select %p32, %s33, %s34
    %p38 = pneg %p32
    %p39 = scmp.eq.s32.totalorder %s9, 3
    %p40 = por %p38, %p39
    %p41 = scmp.ne.s32.totalorder %s33, %s36
    %p42 = scmp.eq.s32.totalorder %s9, 0
    %p43 = por %p41, %p42
    %p44 = scmp.ne.s32.totalorder %s33, %s36
    %p45 = scmp.eq.s32.totalorder %s14, 3
    %p46 = por %p44, %p45
    %p47 = scmp.ne.s32.totalorder %s36, %s37
    %p48 = scmp.eq.s32.totalorder %s14, 0
    %p49 = por %p47, %p48
    %p50 = scmp.ne.s32.totalorder %s36, %s37
    %p51 = scmp.eq.s32.totalorder %s15, 3
    %p52 = por %p50, %p51
    %p54 = scmp.ne.s32.totalorder %s37, %s53
    %p55 = scmp.eq.s32.totalorder %s15, 0
    %p56 = por %p54, %p55
    %s58 = sadd.s32 %s57, 1
    %p61 = scmp.eq.s32.totalorder %s9, 3
    %p62 = scmp.ne.s32.totalorder %s57, %s59
    %p63 = scmp.eq.s32.totalorder %s9, 0
    %p64 = por %p62, %p63
    %p65 = scmp.ne.s32.totalorder %s57, %s59
    %p66 = scmp.eq.s32.totalorder %s14, 3
    %p67 = por %p65, %p66
    %p68 = scmp.ne.s32.totalorder %s59, %s60
    %p69 = scmp.eq.s32.totalorder %s14, 0
    %p70 = por %p68, %p69
    %p71 = scmp.ne.s32.totalorder %s59, %s60
    %p72 = scmp.eq.s32.totalorder %s15, 3
    %p73 = por %p71, %p72
    %p75 = scmp.ne.s32.totalorder %s60, %s74
    %p76 = scmp.eq.s32.totalorder %s15, 0
    %p77 = por %p75, %p76
    %s79 = sadd.s32 %s78, 1
    %p82 = scmp.eq.s32.totalorder %s9, 3
    %p83 = scmp.ne.s32.totalorder %s78, %s80
    %p84 = scmp.eq.s32.totalorder %s9, 0
    %p85 = por %p83, %p84
    %p86 = scmp.ne.s32.totalorder %s78, %s80
    %p87 = scmp.eq.s32.totalorder %s14, 3
    %p88 = por %p86, %p87
    %p89 = scmp.ne.s32.totalorder %s80, %s81
    %p90 = scmp.eq.s32.totalorder %s14, 0
    %p91 = por %p89, %p90
    %p92 = scmp.ne.s32.totalorder %s80, %s81
    %p93 = scmp.eq.s32.totalorder %s15, 3
    %p94 = por %p92, %p93
    %p96 = scmp.ne.s32.totalorder %s81, %s95
    %p97 = scmp.eq.s32.totalorder %s15, 0
    %p98 = por %p96, %p97
    %s99 = ssub.s32 %s16, %s28
    %s100 = ssub.s32 %s17, %s24
    %s101 = sor.u32 %s99, %s100
    %p102 = scmp.eq.s32.totalorder %s101, 0
    %s104 = sadd.s32 %s103, 1
    %s105 = scalar_select %p102, %s103, %s104
    %p108 = pneg %p102
    %p109 = scmp.eq.s32.totalorder %s9, 3
    %p110 = por %p108, %p109
    %p111 = scmp.ne.s32.totalorder %s103, %s106
    %p112 = scmp.eq.s32.totalorder %s9, 0
    %p113 = por %p111, %p112
    %p114 = scmp.ne.s32.totalorder %s103, %s106
    %p115 = scmp.eq.s32.totalorder %s14, 3
    %p116 = por %p114, %p115
    %p117 = scmp.ne.s32.totalorder %s106, %s107
    %p118 = scmp.eq.s32.totalorder %s14, 0
    %p119 = por %p117, %p118
    %p120 = scmp.ne.s32.totalorder %s106, %s107
    %p121 = scmp.eq.s32.totalorder %s15, 3
    %p122 = por %p120, %p121
    %p124 = scmp.ne.s32.totalorder %s107, %s123
    %p125 = scmp.eq.s32.totalorder %s15, 0
    %p126 = por %p124, %p125
    %p127 = scmp.le.s32.totalorder 1, %s9
    %p128 = scmp.lt.s32.totalorder %s9, 5
    %p129 = pnand %p127, %p128
    %p130 = pneg %p129
    // Predicated region
    $region9: #{generator_forward.14} parent=5 // pred_check
      _
    $region10: #{generator_forward.14} parent=5 // pred_check_branch
      %132 = sbr.rel (%p129) target = $region12
    $region11: #{generator_forward.14} parent=5 // pred_region
      %s133 = ssub.s32 %s9, 1
      // Predicated region
      $region13: #{generator_forward.14} parent=11 // pred_check
        %p134 = pneg %p70
      $region14: #{generator_forward.14} parent=11 // pred_check_branch
        %136 = sbr.rel (%p134) target = $region16
      $region15: #{generator_forward.14} parent=11 // pred_region
        _
      $region16: #{generator_forward.14} parent=11 // pred_fallthru
        _
      // Predicated region
      $region17: #{generator_forward.14} parent=11 // pred_check
        %p137 = pneg %p91
      $region18: #{generator_forward.14} parent=11 // pred_check_branch
        %139 = sbr.rel (%p137) target = $region20
      $region19: #{generator_forward.14} parent=11 // pred_region
        _
      $region20: #{generator_forward.14} parent=11 // pred_fallthru
        _
    $region12: #{generator_forward.14} parent=5 // pred_fallthru
      _
    %p140 = scmp.lt.s32.totalorder %s9, 4
    // Predicated region
    $region21: #{generator_forward.14} parent=5 // pred_check
      %p141 = pneg %p140
    $region22: #{generator_forward.14} parent=5 // pred_check_branch
      %143 = sbr.rel (%p141) target = $region24
    $region23: #{generator_forward.14} parent=5 // pred_region
      // Predicated region
      $region25: #{generator_forward.14} parent=23 // pred_check
        %p144 = pneg %p43
      $region26: #{generator_forward.14} parent=23 // pred_check_branch
        %146 = sbr.rel (%p144) target = $region28
      $region27: #{generator_forward.14} parent=23 // pred_region
        %s147 = smul.u32 4, %s17
        %p148 = scmp.lt.s32.totalorder %s16, 3
        %s149 = scalar_select %p148, %s16, 3
        %p150 = scmp.lt.s32.totalorder %s147, 3
        %s151 = scalar_select %p150, %s147, 3
        %s152 = smul.addr %s149, 4
        %s153 = sadd.s32 %s151, %s152
        %s154 = smul.addr %s153, 8
        %s155 = scalar_lea.vmem %s0, %s154
        %s156 = smul.u32 4, %s17
      $region28: #{generator_forward.14} parent=23 // pred_fallthru
        _
    $region24: #{generator_forward.14} parent=5 // pred_fallthru
      _
    %p157 = scmp.le.s32.totalorder 1, %s9
    %p158 = scmp.lt.s32.totalorder %s9, 5
    %p159 = pnand %p157, %p158
    %p160 = pneg %p159
    // Predicated region
    $region29: #{generator_forward.14} parent=5 // pred_check
      _
    $region30: #{generator_forward.14} parent=5 // pred_check_branch
      %162 = sbr.rel (%p159) target = $region32
    $region31: #{generator_forward.14} parent=5 // pred_region
      %s163 = ssub.s32 %s9, 1
      %s164 = smul.u32 4, %s19
      %p165 = scmp.lt.s32.totalorder %s18, 3
      %s166 = scalar_select %p165, %s18, 3
      %p167 = scmp.lt.s32.totalorder %s164, 3
      %s168 = scalar_select %p167, %s164, 3
      %s169 = smul.addr %s166, 4
      %s170 = sadd.s32 %s168, %s169
      %s171 = smul.addr %s170, 8
      %s172 = scalar_lea.vmem %s0, %s171
      %p173 = pneg %p49
      %p174 = pneg %p46
      %p175 = pneg %p70
      %p176 = pneg %p67
      %p177 = pneg %p91
      %p178 = pneg %p88
      %p179 = pneg %p119
      %p180 = pneg %p116
      %s181 = smul.u32 4, %s19
      %p182 = scmp.lt.s32.totalorder %s18, 3
      %s183 = scalar_select %p182, %s18, 3
      %p184 = scmp.lt.s32.totalorder %s181, 3
      %s185 = scalar_select %p184, %s181, 3
      %s186 = smul.addr %s183, 4
      %s187 = sadd.s32 %s185, %s186
      %s188 = smul.addr %s187, 8
      %s189 = scalar_lea.vmem %s3, %s188
      %s190 = smul.u32 4, %s19
      %p191 = scmp.lt.s32.totalorder %s18, 3
      %s192 = scalar_select %p191, %s18, 3
      %p193 = scmp.lt.s32.totalorder %s190, 3
      %s194 = scalar_select %p193, %s190, 3
      %s195 = smul.addr %s192, 4
      %s196 = sadd.s32 %s194, %s195
      %s197 = smul.addr %s196, 8
      %s198 = scalar_lea.vmem %s0, %s197
      %s199 = smul.u32 4, %s19
      %s200 = smul.u32 4, %s19
      %p201 = scmp.lt.s32.totalorder %s18, 3
      %s202 = scalar_select %p201, %s18, 3
      %p203 = scmp.lt.s32.totalorder %s200, 3
      %s204 = scalar_select %p203, %s200, 3
      %s205 = smul.addr %s202, 4
      %s206 = sadd.s32 %s204, %s205
      %s207 = smul.addr %s206, 8
      %s208 = scalar_lea.vmem %s3, %s207
      %s209 = smul.u32 4, %s19
      %v210 = vld [vmem:[%s198] sm:$0xff]
      %v211 = vld [vmem:[%s198 + $0x8] sm:$0xff]
      %v212 = vld [vmem:[%s198 + $0x10] sm:$0xff]
      %v213 = vld [vmem:[%s198 + $0x18] sm:$0xff]
      %v214 = vld [vmem:[%s1] sm:$0xff]
      %216 = vset.pattern.permute.xlu0 0
      %217 = vperm.xlu0 %216, %v214
      %v218 = vpop.permute.xlu0 %217
      %v220 = vmul.f32 %v210, %v218
      %v221 = vmul.f32 %v211, %v218
      %v222 = vmul.f32 %v212, %v218
      %v223 = vmul.f32 %v213, %v218
      %v224 = vld [vmem:[%s2] sm:$0xff]
      %226 = vset.pattern.permute.xlu0 0
      %227 = vperm.xlu0 %226, %v224
      %v228 = vpop.permute.xlu0 %227
      %v230 = vadd.f32 %v220, %v228
      %v231 = vadd.f32 %v221, %v228
      %v232 = vadd.f32 %v222, %v228
      %v233 = vadd.f32 %v223, %v228
      %v234 = vmax.f32 %v230, 0.0
      %v235 = vmax.f32 %v231, 0.0
      %v236 = vmax.f32 %v232, 0.0
      %v237 = vmax.f32 %v233, 0.0
      %238 = vst [vmem:[%s208] sm:$0xff] %v234
      %239 = vst [vmem:[%s208 + $0x8] sm:$0xff] %v235
      %240 = vst [vmem:[%s208 + $0x10] sm:$0xff] %v236
      %241 = vst [vmem:[%s208 + $0x18] sm:$0xff] %v237
      %s242 = smul.u32 4, %s19
      %p243 = scmp.lt.s32.totalorder %s18, 3
      %s244 = scalar_select %p243, %s18, 3
      %p245 = scmp.lt.s32.totalorder %s242, 3
      %s246 = scalar_select %p245, %s242, 3
      %s247 = smul.addr %s244, 4
      %s248 = sadd.s32 %s246, %s247
      %s249 = smul.addr %s248, 8
      %s250 = scalar_lea.vmem %s3, %s249
      // Predicated region
      $region33: #{generator_forward.14} parent=31 // pred_check
        %p251 = pneg %p116
      $region34: #{generator_forward.14} parent=31 // pred_check_branch
        %253 = sbr.rel (%p251) target = $region36
      $region35: #{generator_forward.14} parent=31 // pred_region
        %s254 = smul.u32 4, %s19
      $region36: #{generator_forward.14} parent=31 // pred_fallthru
        _
    $region32: #{generator_forward.14} parent=5 // pred_fallthru
      _
    %p255 = scmp.le.s32.totalorder 2, %s9
    // Predicated region
    $region37: #{generator_forward.14} parent=5 // pred_check
      %p256 = pneg %p255
    $region38: #{generator_forward.14} parent=5 // pred_check_branch
      %258 = sbr.rel (%p256) target = $region40
    $region39: #{generator_forward.14} parent=5 // pred_region
      %s259 = ssub.s32 %s9, 2
      // Predicated region
      $region41: #{generator_forward.14} parent=39 // pred_check
        %p260 = pneg %p122
      $region42: #{generator_forward.14} parent=39 // pred_check_branch
        %262 = sbr.rel (%p260) target = $region44
      $region43: #{generator_forward.14} parent=39 // pred_region
        %s263 = smul.u32 4, %s21
        %p264 = scmp.lt.s32.totalorder %s20, 3
        %s265 = scalar_select %p264, %s20, 3
        %p266 = scmp.lt.s32.totalorder %s263, 3
        %s267 = scalar_select %p266, %s263, 3
        %s268 = smul.addr %s265, 4
        %s269 = sadd.s32 %s267, %s268
        %s270 = smul.addr %s269, 8
        %s271 = scalar_lea.vmem %s3, %s270
      $region44: #{generator_forward.14} parent=39 // pred_fallthru
        _
    $region40: #{generator_forward.14} parent=5 // pred_fallthru
      _
  $region6: #{generator_forward.14} parent=0 // loop_footer
    %s13 = sadd.s32 1, %s9
  $region7: #{generator_forward.14} parent=0 // loop_footer_branch
    %8 = sbr.rel target = $region3
  $region8: #{generator_forward.14} parent=0 // loop_exit
    _

// kernel: generator_forward.15
$region0: #{generator_forward.15}
  #allocation0 [shape = 'u32[]', space=smem, size = 0x4, offset = 0x4, fixed_abs, tag = 'smem constant byte address 0x4 - core index']
  #allocation1 [shape = 'u32[72,128]{1,0:T(1,128)}', space=vmem, size = 0x9000, scoped, tag = 'internal scratch']
  %s0 = inlined_call_operand.vmem [shape: f32[4,8,32], index: 0, kind: input, shape index: {}]
  %s1 = inlined_call_operand.vmem [shape: f32[4,32,2048], index: 1, kind: input, shape index: {}]
  %s2 = inlined_call_operand.vmem [shape: f32[8,1], index: 2, kind: input, shape index: {}]
  %s3 = inlined_call_operand.vmem [shape: f32[4,8,2048], index: 3, kind: output, shape index: {}]
  %s4 = sld [smem:[#allocation0]]
  $region45: #{generator_forward.15} parent=0
    _
  %s6 = ssub.s32 1, %s4
  %s7 = scalar_select 0, %s6, %s4
  loop: start=0, step=1, limit=6
  $region2: #{generator_forward.15} parent=0 // loop_pre_header
    _
  $region3: #{generator_forward.15} parent=0 // loop_header
    %s9 = sphi 0, %s13
    %p10 = scmp.ge.s32.totalorder %s9, 6
    %s16 = sphi 0, %s28
    %s17 = sphi 0, %s24
    %s18 = sphi 0, %s16
    %s19 = sphi 0, %s17
    %s20 = sphi 0, %s18
    %s21 = sphi 0, %s19
    %s31 = sphi 0, %s33
    %s34 = sphi 0, %s31
    %s35 = sphi 0, %s34
    %s51 = sphi 0, %s35
    %s59 = sphi 0, %s61
    %s62 = sphi 0, %s59
    %s63 = sphi 0, %s62
    %s79 = sphi 0, %s63
    %s83 = sphi 0, %s83
    %s85 = sphi 0, %s83
    %s86 = sphi 0, %s85
    %s100 = sphi 0, %s86
    %s108 = sphi 0, %s110
    %s111 = sphi 0, %s108
    %s112 = sphi 0, %s111
    %s128 = sphi 0, %s112
  $region4: #{generator_forward.15} parent=0 // loop_header_branch
    %12 = sbr.rel (%p10) target = $region8
  $region5: #{generator_forward.15} parent=0 // loop_body
    %s14 = ssub.s32 %s9, 1
    %s15 = ssub.s32 %s9, 2
    %s22 = sadd.s32 1, %s17
    %p23 = scmp.ge.s32.totalorder %s22, 1
    %s24 = scalar_select %p23, 0, %s22
    %s25 = sadd.s32 1, %s16
    %s26 = scalar_select %p23, %s25, %s16
    %p27 = scmp.ge.s32.totalorder %s26, 4
    %s28 = scalar_select %p27, 0, %s26
    %s29 = ssub.s32 %s16, %s28
    %p30 = scmp.eq.s32.totalorder %s29, 0
    %s32 = sadd.s32 %s31, 1
    %s33 = scalar_select %p30, %s31, %s32
    %p36 = pneg %p30
    %p37 = scmp.eq.s32.totalorder %s9, 3
    %p38 = por %p36, %p37
    %p39 = scmp.ne.s32.totalorder %s31, %s34
    %p40 = scmp.eq.s32.totalorder %s9, 0
    %p41 = por %p39, %p40
    %p42 = scmp.ne.s32.totalorder %s31, %s34
    %p43 = scmp.eq.s32.totalorder %s14, 3
    %p44 = por %p42, %p43
    %p45 = scmp.ne.s32.totalorder %s34, %s35
    %p46 = scmp.eq.s32.totalorder %s14, 0
    %p47 = por %p45, %p46
    %p48 = scmp.ne.s32.totalorder %s34, %s35
    %p49 = scmp.eq.s32.totalorder %s15, 3
    %p50 = por %p48, %p49
    %p52 = scmp.ne.s32.totalorder %s35, %s51
    %p53 = scmp.eq.s32.totalorder %s15, 0
    %p54 = por %p52, %p53
    %s55 = ssub.s32 %s16, %s28
    %s56 = ssub.s32 %s17, %s24
    %s57 = sor.u32 %s55, %s56
    %p58 = scmp.eq.s32.totalorder %s57, 0
    %s60 = sadd.s32 %s59, 1
    %s61 = scalar_select %p58, %s59, %s60
    %p64 = pneg %p58
    %p65 = scmp.eq.s32.totalorder %s9, 3
    %p66 = por %p64, %p65
    %p67 = scmp.ne.s32.totalorder %s59, %s62
    %p68 = scmp.eq.s32.totalorder %s9, 0
    %p69 = por %p67, %p68
    %p70 = scmp.ne.s32.totalorder %s59, %s62
    %p71 = scmp.eq.s32.totalorder %s14, 3
    %p72 = por %p70, %p71
    %p73 = scmp.ne.s32.totalorder %s62, %s63
    %p74 = scmp.eq.s32.totalorder %s14, 0
    %p75 = por %p73, %p74
    %p76 = scmp.ne.s32.totalorder %s62, %s63
    %p77 = scmp.eq.s32.totalorder %s15, 3
    %p78 = por %p76, %p77
    %p80 = scmp.ne.s32.totalorder %s63, %s79
    %p81 = scmp.eq.s32.totalorder %s15, 0
    %p82 = por %p80, %p81
    %s84 = sadd.s32 %s83, 1
    %p87 = scmp.eq.s32.totalorder %s9, 3
    %p88 = scmp.ne.s32.totalorder %s83, %s85
    %p89 = scmp.eq.s32.totalorder %s9, 0
    %p90 = por %p88, %p89
    %p91 = scmp.ne.s32.totalorder %s83, %s85
    %p92 = scmp.eq.s32.totalorder %s14, 3
    %p93 = por %p91, %p92
    %p94 = scmp.ne.s32.totalorder %s85, %s86
    %p95 = scmp.eq.s32.totalorder %s14, 0
    %p96 = por %p94, %p95
    %p97 = scmp.ne.s32.totalorder %s85, %s86
    %p98 = scmp.eq.s32.totalorder %s15, 3
    %p99 = por %p97, %p98
    %p101 = scmp.ne.s32.totalorder %s86, %s100
    %p102 = scmp.eq.s32.totalorder %s15, 0
    %p103 = por %p101, %p102
    %s104 = ssub.s32 %s16, %s28
    %s105 = ssub.s32 %s17, %s24
    %s106 = sor.u32 %s104, %s105
    %p107 = scmp.eq.s32.totalorder %s106, 0
    %s109 = sadd.s32 %s108, 1
    %s110 = scalar_select %p107, %s108, %s109
    %p113 = pneg %p107
    %p114 = scmp.eq.s32.totalorder %s9, 3
    %p115 = por %p113, %p114
    %p116 = scmp.ne.s32.totalorder %s108, %s111
    %p117 = scmp.eq.s32.totalorder %s9, 0
    %p118 = por %p116, %p117
    %p119 = scmp.ne.s32.totalorder %s108, %s111
    %p120 = scmp.eq.s32.totalorder %s14, 3
    %p121 = por %p119, %p120
    %p122 = scmp.ne.s32.totalorder %s111, %s112
    %p123 = scmp.eq.s32.totalorder %s14, 0
    %p124 = por %p122, %p123
    %p125 = scmp.ne.s32.totalorder %s111, %s112
    %p126 = scmp.eq.s32.totalorder %s15, 3
    %p127 = por %p125, %p126
    %p129 = scmp.ne.s32.totalorder %s112, %s128
    %p130 = scmp.eq.s32.totalorder %s15, 0
    %p131 = por %p129, %p130
    %p132 = scmp.le.s32.totalorder 1, %s9
    %p133 = scmp.lt.s32.totalorder %s9, 5
    %p134 = pnand %p132, %p133
    %p135 = pneg %p134
    // Predicated region
    $region9: #{generator_forward.15} parent=5 // pred_check
      _
    $region10: #{generator_forward.15} parent=5 // pred_check_branch
      %137 = sbr.rel (%p134) target = $region12
    $region11: #{generator_forward.15} parent=5 // pred_region
      %s138 = ssub.s32 %s9, 1
      // Predicated region
      $region13: #{generator_forward.15} parent=11 // pred_check
        %p139 = pneg %p96
      $region14: #{generator_forward.15} parent=11 // pred_check_branch
        %141 = sbr.rel (%p139) target = $region16
      $region15: #{generator_forward.15} parent=11 // pred_region
        _
      $region16: #{generator_forward.15} parent=11 // pred_fallthru
        _
    $region12: #{generator_forward.15} parent=5 // pred_fallthru
      _
    %p142 = scmp.lt.s32.totalorder %s9, 4
    // Predicated region
    $region17: #{generator_forward.15} parent=5 // pred_check
      %p143 = pneg %p142
    $region18: #{generator_forward.15} parent=5 // pred_check_branch
      %145 = sbr.rel (%p143) target = $region20
    $region19: #{generator_forward.15} parent=5 // pred_region
      // Predicated region
      $region21: #{generator_forward.15} parent=19 // pred_check
        %p146 = pneg %p41
      $region22: #{generator_forward.15} parent=19 // pred_check_branch
        %148 = sbr.rel (%p146) target = $region24
      $region23: #{generator_forward.15} parent=19 // pred_region
        %p149 = scmp.lt.s32.totalorder %s16, 3
        %s150 = scalar_select %p149, %s16, 3
        %s151 = smul.addr %s150, 8
        %s152 = scalar_lea.vmem %s0, %s151
      $region24: #{generator_forward.15} parent=19 // pred_fallthru
        _
      // Predicated region
      $region25: #{generator_forward.15} parent=19 // pred_check
        %p153 = pneg %p69
      $region26: #{generator_forward.15} parent=19 // pred_check_branch
        %155 = sbr.rel (%p153) target = $region28
      $region27: #{generator_forward.15} parent=19 // pred_region
        %s156 = smul.u32 16, %s17
        %p157 = scmp.lt.s32.totalorder %s16, 3
        %s158 = scalar_select %p157, %s16, 3
        %p159 = scmp.lt.s32.totalorder %s156, 15
        %s160 = scalar_select %p159, %s156, 15
        %s161 = smul.addr %s158, 64
        %s162 = sadd.s32 %s160, %s161
        %s163 = smul.addr %s162, 8
        %s164 = scalar_lea.vmem %s1, %s163
        %s165 = smul.u32 16, %s17
      $region28: #{generator_forward.15} parent=19 // pred_fallthru
        _
    $region20: #{generator_forward.15} parent=5 // pred_fallthru
      _
    %p166 = scmp.le.s32.totalorder 1, %s9
    %p167 = scmp.lt.s32.totalorder %s9, 5
    %p168 = pnand %p166, %p167
    %p169 = pneg %p168
    // Predicated region
    $region29: #{generator_forward.15} parent=5 // pred_check
      _
    $region30: #{generator_forward.15} parent=5 // pred_check_branch
      %171 = sbr.rel (%p168) target = $region32
    $region31: #{generator_forward.15} parent=5 // pred_region
      %s172 = ssub.s32 %s9, 1
      %p173 = scmp.lt.s32.totalorder %s18, 3
      %s174 = scalar_select %p173, %s18, 3
      %s175 = smul.addr %s174, 8
      %s176 = scalar_lea.vmem %s0, %s175
      %p177 = pneg %p47
      %p178 = pneg %p44
      %s179 = smul.u32 16, %s19
      %p180 = scmp.lt.s32.totalorder %s18, 3
      %s181 = scalar_select %p180, %s18, 3
      %p182 = scmp.lt.s32.totalorder %s179, 15
      %s183 = scalar_select %p182, %s179, 15
      %s184 = smul.addr %s181, 64
      %s185 = sadd.s32 %s183, %s184
      %s186 = smul.addr %s185, 8
      %s187 = scalar_lea.vmem %s1, %s186
      %p188 = pneg %p75
      %p189 = pneg %p72
      %p190 = pneg %p96
      %p191 = pneg %p93
      %p192 = pneg %p124
      %p193 = pneg %p121
      %s194 = smul.u32 16, %s19
      %p195 = scmp.lt.s32.totalorder %s18, 3
      %s196 = scalar_select %p195, %s18, 3
      %p197 = scmp.lt.s32.totalorder %s194, 15
      %s198 = scalar_select %p197, %s194, 15
      %s199 = smul.addr %s196, 16
      %s200 = sadd.s32 %s198, %s199
      %s201 = smul.addr %s200, 8
      %s202 = scalar_lea.vmem %s3, %s201
      %p203 = scmp.lt.s32.totalorder %s18, 3
      %s204 = scalar_select %p203, %s18, 3
      %s205 = smul.addr %s204, 8
      %s206 = scalar_lea.vmem %s0, %s205
      %s207 = smul.u32 16, %s19
      %p208 = scmp.lt.s32.totalorder %s18, 3
      %s209 = scalar_select %p208, %s18, 3
      %p210 = scmp.lt.s32.totalorder %s207, 15
      %s211 = scalar_select %p210, %s207, 15
      %s212 = smul.addr %s209, 64
      %s213 = sadd.s32 %s211, %s212
      %s214 = smul.addr %s213, 8
      %s215 = scalar_lea.vmem %s1, %s214
      %s216 = smul.u32 16, %s19
      %s217 = smul.u32 16, %s19
      %p218 = scmp.lt.s32.totalorder %s18, 3
      %s219 = scalar_select %p218, %s18, 3
      %p220 = scmp.lt.s32.totalorder %s217, 15
      %s221 = scalar_select %p220, %s217, 15
      %s222 = smul.addr %s219, 16
      %s223 = sadd.s32 %s221, %s222
      %s224 = smul.addr %s223, 8
      %s225 = scalar_lea.vmem %s3, %s224
      %s226 = smul.u32 16, %s19
      %v227 = vld [vmem:[%s206] sm:$0xff]
      %v228 = vld [vmem:[%s215] sm:$0xff]
      %v229 = vld [vmem:[%s215 + $0x8] sm:$0xff]
      %v230 = vld [vmem:[%s215 + $0x10] sm:$0xff]
      %v231 = vld [vmem:[%s215 + $0x18] sm:$0xff]
      %v232 = vld [vmem:[%s215 + $0x20] sm:$0xff]
      %v233 = vld [vmem:[%s215 + $0x28] sm:$0xff]
      %v234 = vld [vmem:[%s215 + $0x30] sm:$0xff]
      %v235 = vld [vmem:[%s215 + $0x38] sm:$0xff]
      %v236 = vld [vmem:[%s215 + $0x40] sm:$0xff]
      %v237 = vld [vmem:[%s215 + $0x48] sm:$0xff]
      %v238 = vld [vmem:[%s215 + $0x50] sm:$0xff]
      %v239 = vld [vmem:[%s215 + $0x58] sm:$0xff]
      %v240 = vld [vmem:[%s215 + $0x60] sm:$0xff]
      %v241 = vld [vmem:[%s215 + $0x68] sm:$0xff]
      %v242 = vld [vmem:[%s215 + $0x70] sm:$0xff]
      %v243 = vld [vmem:[%s215 + $0x78] sm:$0xff]
      %v244 = vld [vmem:[%s215 + $0x80] sm:$0xff]
      %v245 = vld [vmem:[%s215 + $0x88] sm:$0xff]
      %v246 = vld [vmem:[%s215 + $0x90] sm:$0xff]
      %v247 = vld [vmem:[%s215 + $0x98] sm:$0xff]
      %v248 = vld [vmem:[%s215 + $0xa0] sm:$0xff]
      %v249 = vld [vmem:[%s215 + $0xa8] sm:$0xff]
      %v250 = vld [vmem:[%s215 + $0xb0] sm:$0xff]
      %v251 = vld [vmem:[%s215 + $0xb8] sm:$0xff]
      %v252 = vld [vmem:[%s215 + $0xc0] sm:$0xff]
      %v253 = vld [vmem:[%s215 + $0xc8] sm:$0xff]
      %v254 = vld [vmem:[%s215 + $0xd0] sm:$0xff]
      %v255 = vld [vmem:[%s215 + $0xd8] sm:$0xff]
      %v256 = vld [vmem:[%s215 + $0xe0] sm:$0xff]
      %v257 = vld [vmem:[%s215 + $0xe8] sm:$0xff]
      %v258 = vld [vmem:[%s215 + $0xf0] sm:$0xff]
      %v259 = vld [vmem:[%s215 + $0xf8] sm:$0xff]
      %v260 = vld [vmem:[%s215 + $0x100] sm:$0xff]
      %v261 = vld [vmem:[%s215 + $0x108] sm:$0xff]
      %v262 = vld [vmem:[%s215 + $0x110] sm:$0xff]
      %v263 = vld [vmem:[%s215 + $0x118] sm:$0xff]
      %v264 = vld [vmem:[%s215 + $0x120] sm:$0xff]
      %v265 = vld [vmem:[%s215 + $0x128] sm:$0xff]
      %v266 = vld [vmem:[%s215 + $0x130] sm:$0xff]
      %v267 = vld [vmem:[%s215 + $0x138] sm:$0xff]
      %v268 = vld [vmem:[%s215 + $0x140] sm:$0xff]
      %v269 = vld [vmem:[%s215 + $0x148] sm:$0xff]
      %v270 = vld [vmem:[%s215 + $0x150] sm:$0xff]
      %v271 = vld [vmem:[%s215 + $0x158] sm:$0xff]
      %v272 = vld [vmem:[%s215 + $0x160] sm:$0xff]
      %v273 = vld [vmem:[%s215 + $0x168] sm:$0xff]
      %v274 = vld [vmem:[%s215 + $0x170] sm:$0xff]
      %v275 = vld [vmem:[%s215 + $0x178] sm:$0xff]
      %v276 = vld [vmem:[%s215 + $0x180] sm:$0xff]
      %v277 = vld [vmem:[%s215 + $0x188] sm:$0xff]
      %v278 = vld [vmem:[%s215 + $0x190] sm:$0xff]
      %v279 = vld [vmem:[%s215 + $0x198] sm:$0xff]
      %v280 = vld [vmem:[%s215 + $0x1a0] sm:$0xff]
      %v281 = vld [vmem:[%s215 + $0x1a8] sm:$0xff]
      %v282 = vld [vmem:[%s215 + $0x1b0] sm:$0xff]
      %v283 = vld [vmem:[%s215 + $0x1b8] sm:$0xff]
      %v284 = vld [vmem:[%s215 + $0x1c0] sm:$0xff]
      %v285 = vld [vmem:[%s215 + $0x1c8] sm:$0xff]
      %v286 = vld [vmem:[%s215 + $0x1d0] sm:$0xff]
      %v287 = vld [vmem:[%s215 + $0x1d8] sm:$0xff]
      %v288 = vld [vmem:[%s215 + $0x1e0] sm:$0xff]
      %v289 = vld [vmem:[%s215 + $0x1e8] sm:$0xff]
      %v290 = vld [vmem:[%s215 + $0x1f0] sm:$0xff]
      %v291 = vld [vmem:[%s215 + $0x1f8] sm:$0xff]
      %v292 = vld [vmem:[%s2] sm:$0xff]
      %294 = vset.pattern.permute.xlu0 0
      %295 = vperm.xlu0 %294, %v292
      %v296 = vpop.permute.xlu0 %295
      %vm298 = vcmask 261120
      %v300 = vsel %vm298, %v227, 0
      %302 = vmatpush.msra.mxu0 0.0
      %303 = vmatpush.msra.mxu0 0.0
      %304 = vmatpush.msra.mxu0 0.0
      %305 = vmatpush.msra.mxu0 0.0
      %306 = vmatpush.msra.mxu0 0.0
      %307 = vmatpush.msra.mxu0 0.0
      %308 = vmatpush.msra.mxu0 0.0
      %309 = vmatpush.msra.mxu0 0.0
      %310 = vmatpush.msra.mxu0 0.0
      %311 = vmatpush.msra.mxu0 0.0
      %312 = vmatpush.msra.mxu0 0.0
      %313 = vmatpush.msra.mxu0 0.0
      %314 = vmatpush.msra.mxu0 %v276
      %315 = vmatpush.msra.mxu0 %v260
      %316 = vmatpush.msra.mxu0 %v244
      %317 = vmatpush.msra.mxu0 %v228
      %318 = vmatmul.f32.gmra.mxu0 %v300
      %v319 = vpop.f32.mrf.mxu0
      %v320 = vadd.f32 %v296, %v319
      %321 = vdwg.mxu0
      %322 = vmatpush.msra.mxu0 0.0
      %323 = vmatpush.msra.mxu0 0.0
      %324 = vmatpush.msra.mxu0 0.0
      %325 = vmatpush.msra.mxu0 0.0
      %326 = vmatpush.msra.mxu0 0.0
      %327 = vmatpush.msra.mxu0 0.0
      %328 = vmatpush.msra.mxu0 0.0
      %329 = vmatpush.msra.mxu0 0.0
      %330 = vmatpush.msra.mxu0 0.0
      %331 = vmatpush.msra.mxu0 0.0
      %332 = vmatpush.msra.mxu0 0.0
      %333 = vmatpush.msra.mxu0 0.0
      %334 = vmatpush.msra.mxu0 %v277
      %335 = vmatpush.msra.mxu0 %v261
      %336 = vmatpush.msra.mxu0 %v245
      %337 = vmatpush.msra.mxu0 %v229
      %338 = vmatmul.f32.gmra.mxu0 %v300
      %v339 = vpop.f32.mrf.mxu0
      %v340 = vadd.f32 %v296, %v339
      %341 = vdwg.mxu0
      %342 = vmatpush.msra.mxu0 0.0
      %343 = vmatpush.msra.mxu0 0.0
      %344 = vmatpush.msra.mxu0 0.0
      %345 = vmatpush.msra.mxu0 0.0
      %346 = vmatpush.msra.mxu0 0.0
      %347 = vmatpush.msra.mxu0 0.0
      %348 = vmatpush.msra.mxu0 0.0
      %349 = vmatpush.msra.mxu0 0.0
      %350 = vmatpush.msra.mxu0 0.0
      %351 = vmatpush.msra.mxu0 0.0
      %352 = vmatpush.msra.mxu0 0.0
      %353 = vmatpush.msra.mxu0 0.0
      %354 = vmatpush.msra.mxu0 %v278
      %355 = vmatpush.msra.mxu0 %v262
      %356 = vmatpush.msra.mxu0 %v246
      %357 = vmatpush.msra.mxu0 %v230
      %358 = vmatmul.f32.gmra.mxu0 %v300
      %v359 = vpop.f32.mrf.mxu0
      %v360 = vadd.f32 %v296, %v359
      %361 = vdwg.mxu0
      %362 = vmatpush.msra.mxu0 0.0
      %363 = vmatpush.msra.mxu0 0.0
      %364 = vmatpush.msra.mxu0 0.0
      %365 = vmatpush.msra.mxu0 0.0
      %366 = vmatpush.msra.mxu0 0.0
      %367 = vmatpush.msra.mxu0 0.0
      %368 = vmatpush.msra.mxu0 0.0
      %369 = vmatpush.msra.mxu0 0.0
      %370 = vmatpush.msra.mxu0 0.0
      %371 = vmatpush.msra.mxu0 0.0
      %372 = vmatpush.msra.mxu0 0.0
      %373 = vmatpush.msra.mxu0 0.0
      %374 = vmatpush.msra.mxu0 %v279
      %375 = vmatpush.msra.mxu0 %v263
      %376 = vmatpush.msra.mxu0 %v247
      %377 = vmatpush.msra.mxu0 %v231
      %378 = vmatmul.f32.gmra.mxu0 %v300
      %v379 = vpop.f32.mrf.mxu0
      %v380 = vadd.f32 %v296, %v379
      %381 = vdwg.mxu0
      %382 = vmatpush.msra.mxu0 0.0
      %383 = vmatpush.msra.mxu0 0.0
      %384 = vmatpush.msra.mxu0 0.0
      %385 = vmatpush.msra.mxu0 0.0
      %386 = vmatpush.msra.mxu0 0.0
      %387 = vmatpush.msra.mxu0 0.0
      %388 = vmatpush.msra.mxu0 0.0
      %389 = vmatpush.msra.mxu0 0.0
      %390 = vmatpush.msra.mxu0 0.0
      %391 = vmatpush.msra.mxu0 0.0
      %392 = vmatpush.msra.mxu0 0.0
      %393 = vmatpush.msra.mxu0 0.0
      %394 = vmatpush.msra.mxu0 %v280
      %395 = vmatpush.msra.mxu0 %v264
      %396 = vmatpush.msra.mxu0 %v248
      %397 = vmatpush.msra.mxu0 %v232
      %398 = vmatmul.f32.gmra.mxu0 %v300
      %v399 = vpop.f32.mrf.mxu0
      %v400 = vadd.f32 %v296, %v399
      %401 = vdwg.mxu0
      %402 = vmatpush.msra.mxu0 0.0
      %403 = vmatpush.msra.mxu0 0.0
      %404 = vmatpush.msra.mxu0 0.0
      %405 = vmatpush.msra.mxu0 0.0
      %406 = vmatpush.msra.mxu0 0.0
      %407 = vmatpush.msra.mxu0 0.0
      %408 = vmatpush.msra.mxu0 0.0
      %409 = vmatpush.msra.mxu0 0.0
      %410 = vmatpush.msra.mxu0 0.0
      %411 = vmatpush.msra.mxu0 0.0
      %412 = vmatpush.msra.mxu0 0.0
      %413 = vmatpush.msra.mxu0 0.0
      %414 = vmatpush.msra.mxu0 %v281
      %415 = vmatpush.msra.mxu0 %v265
      %416 = vmatpush.msra.mxu0 %v249
      %417 = vmatpush.msra.mxu0 %v233
      %418 = vmatmul.f32.gmra.mxu0 %v300
      %v419 = vpop.f32.mrf.mxu0
      %v420 = vadd.f32 %v296, %v419
      %421 = vdwg.mxu0
      %422 = vmatpush.msra.mxu0 0.0
      %423 = vmatpush.msra.mxu0 0.0
      %424 = vmatpush.msra.mxu0 0.0
      %425 = vmatpush.msra.mxu0 0.0
      %426 = vmatpush.msra.mxu0 0.0
      %427 = vmatpush.msra.mxu0 0.0
      %428 = vmatpush.msra.mxu0 0.0
      %429 = vmatpush.msra.mxu0 0.0
      %430 = vmatpush.msra.mxu0 0.0
      %431 = vmatpush.msra.mxu0 0.0
      %432 = vmatpush.msra.mxu0 0.0
      %433 = vmatpush.msra.mxu0 0.0
      %434 = vmatpush.msra.mxu0 %v282
      %435 = vmatpush.msra.mxu0 %v266
      %436 = vmatpush.msra.mxu0 %v250
      %437 = vmatpush.msra.mxu0 %v234
      %438 = vmatmul.f32.gmra.mxu0 %v300
      %v439 = vpop.f32.mrf.mxu0
      %v440 = vadd.f32 %v296, %v439
      %441 = vdwg.mxu0
      %442 = vmatpush.msra.mxu0 0.0
      %443 = vmatpush.msra.mxu0 0.0
      %444 = vmatpush.msra.mxu0 0.0
      %445 = vmatpush.msra.mxu0 0.0
      %446 = vmatpush.msra.mxu0 0.0
      %447 = vmatpush.msra.mxu0 0.0
      %448 = vmatpush.msra.mxu0 0.0
      %449 = vmatpush.msra.mxu0 0.0
      %450 = vmatpush.msra.mxu0 0.0
      %451 = vmatpush.msra.mxu0 0.0
      %452 = vmatpush.msra.mxu0 0.0
      %453 = vmatpush.msra.mxu0 0.0
      %454 = vmatpush.msra.mxu0 %v283
      %455 = vmatpush.msra.mxu0 %v267
      %456 = vmatpush.msra.mxu0 %v251
      %457 = vmatpush.msra.mxu0 %v235
      %458 = vmatmul.f32.gmra.mxu0 %v300
      %v459 = vpop.f32.mrf.mxu0
      %v460 = vadd.f32 %v296, %v459
      %461 = vdwg.mxu0
      %462 = vmatpush.msra.mxu0 0.0
      %463 = vmatpush.msra.mxu0 0.0
      %464 = vmatpush.msra.mxu0 0.0
      %465 = vmatpush.msra.mxu0 0.0
      %466 = vmatpush.msra.mxu0 0.0
      %467 = vmatpush.msra.mxu0 0.0
      %468 = vmatpush.msra.mxu0 0.0
      %469 = vmatpush.msra.mxu0 0.0
      %470 = vmatpush.msra.mxu0 0.0
      %471 = vmatpush.msra.mxu0 0.0
      %472 = vmatpush.msra.mxu0 0.0
      %473 = vmatpush.msra.mxu0 0.0
      %474 = vmatpush.msra.mxu0 %v284
      %475 = vmatpush.msra.mxu0 %v268
      %476 = vmatpush.msra.mxu0 %v252
      %477 = vmatpush.msra.mxu0 %v236
      %478 = vmatmul.f32.gmra.mxu0 %v300
      %v479 = vpop.f32.mrf.mxu0
      %v480 = vadd.f32 %v296, %v479
      %481 = vdwg.mxu0
      %482 = vmatpush.msra.mxu0 0.0
      %483 = vmatpush.msra.mxu0 0.0
      %484 = vmatpush.msra.mxu0 0.0
      %485 = vmatpush.msra.mxu0 0.0
      %486 = vmatpush.msra.mxu0 0.0
      %487 = vmatpush.msra.mxu0 0.0
      %488 = vmatpush.msra.mxu0 0.0
      %489 = vmatpush.msra.mxu0 0.0
      %490 = vmatpush.msra.mxu0 0.0
      %491 = vmatpush.msra.mxu0 0.0
      %492 = vmatpush.msra.mxu0 0.0
      %493 = vmatpush.msra.mxu0 0.0
      %494 = vmatpush.msra.mxu0 %v285
      %495 = vmatpush.msra.mxu0 %v269
      %496 = vmatpush.msra.mxu0 %v253
      %497 = vmatpush.msra.mxu0 %v237
      %498 = vmatmul.f32.gmra.mxu0 %v300
      %v499 = vpop.f32.mrf.mxu0
      %v500 = vadd.f32 %v296, %v499
      %501 = vdwg.mxu0
      %502 = vmatpush.msra.mxu0 0.0
      %503 = vmatpush.msra.mxu0 0.0
      %504 = vmatpush.msra.mxu0 0.0
      %505 = vmatpush.msra.mxu0 0.0
      %506 = vmatpush.msra.mxu0 0.0
      %507 = vmatpush.msra.mxu0 0.0
      %508 = vmatpush.msra.mxu0 0.0
      %509 = vmatpush.msra.mxu0 0.0
      %510 = vmatpush.msra.mxu0 0.0
      %511 = vmatpush.msra.mxu0 0.0
      %512 = vmatpush.msra.mxu0 0.0
      %513 = vmatpush.msra.mxu0 0.0
      %514 = vmatpush.msra.mxu0 %v286
      %515 = vmatpush.msra.mxu0 %v270
      %516 = vmatpush.msra.mxu0 %v254
      %517 = vmatpush.msra.mxu0 %v238
      %518 = vmatmul.f32.gmra.mxu0 %v300
      %v519 = vpop.f32.mrf.mxu0
      %v520 = vadd.f32 %v296, %v519
      %521 = vdwg.mxu0
      %522 = vmatpush.msra.mxu0 0.0
      %523 = vmatpush.msra.mxu0 0.0
      %524 = vmatpush.msra.mxu0 0.0
      %525 = vmatpush.msra.mxu0 0.0
      %526 = vmatpush.msra.mxu0 0.0
      %527 = vmatpush.msra.mxu0 0.0
      %528 = vmatpush.msra.mxu0 0.0
      %529 = vmatpush.msra.mxu0 0.0
      %530 = vmatpush.msra.mxu0 0.0
      %531 = vmatpush.msra.mxu0 0.0
      %532 = vmatpush.msra.mxu0 0.0
      %533 = vmatpush.msra.mxu0 0.0
      %534 = vmatpush.msra.mxu0 %v287
      %535 = vmatpush.msra.mxu0 %v271
      %536 = vmatpush.msra.mxu0 %v255
      %537 = vmatpush.msra.mxu0 %v239
      %538 = vmatmul.f32.gmra.mxu0 %v300
      %v539 = vpop.f32.mrf.mxu0
      %v540 = vadd.f32 %v296, %v539
      %541 = vdwg.mxu0
      %542 = vmatpush.msra.mxu0 0.0
      %543 = vmatpush.msra.mxu0 0.0
      %544 = vmatpush.msra.mxu0 0.0
      %545 = vmatpush.msra.mxu0 0.0
      %546 = vmatpush.msra.mxu0 0.0
      %547 = vmatpush.msra.mxu0 0.0
      %548 = vmatpush.msra.mxu0 0.0
      %549 = vmatpush.msra.mxu0 0.0
      %550 = vmatpush.msra.mxu0 0.0
      %551 = vmatpush.msra.mxu0 0.0
      %552 = vmatpush.msra.mxu0 0.0
      %553 = vmatpush.msra.mxu0 0.0
      %554 = vmatpush.msra.mxu0 %v288
      %555 = vmatpush.msra.mxu0 %v272
      %556 = vmatpush.msra.mxu0 %v256
      %557 = vmatpush.msra.mxu0 %v240
      %558 = vmatmul.f32.gmra.mxu0 %v300
      %v559 = vpop.f32.mrf.mxu0
      %v560 = vadd.f32 %v296, %v559
      %561 = vdwg.mxu0
      %562 = vmatpush.msra.mxu0 0.0
      %563 = vmatpush.msra.mxu0 0.0
      %564 = vmatpush.msra.mxu0 0.0
      %565 = vmatpush.msra.mxu0 0.0
      %566 = vmatpush.msra.mxu0 0.0
      %567 = vmatpush.msra.mxu0 0.0
      %568 = vmatpush.msra.mxu0 0.0
      %569 = vmatpush.msra.mxu0 0.0
      %570 = vmatpush.msra.mxu0 0.0
      %571 = vmatpush.msra.mxu0 0.0
      %572 = vmatpush.msra.mxu0 0.0
      %573 = vmatpush.msra.mxu0 0.0
      %574 = vmatpush.msra.mxu0 %v289
      %575 = vmatpush.msra.mxu0 %v273
      %576 = vmatpush.msra.mxu0 %v257
      %577 = vmatpush.msra.mxu0 %v241
      %578 = vmatmul.f32.gmra.mxu0 %v300
      %v579 = vpop.f32.mrf.mxu0
      %v580 = vadd.f32 %v296, %v579
      %581 = vdwg.mxu0
      %582 = vmatpush.msra.mxu0 0.0
      %583 = vmatpush.msra.mxu0 0.0
      %584 = vmatpush.msra.mxu0 0.0
      %585 = vmatpush.msra.mxu0 0.0
      %586 = vmatpush.msra.mxu0 0.0
      %587 = vmatpush.msra.mxu0 0.0
      %588 = vmatpush.msra.mxu0 0.0
      %589 = vmatpush.msra.mxu0 0.0
      %590 = vmatpush.msra.mxu0 0.0
      %591 = vmatpush.msra.mxu0 0.0
      %592 = vmatpush.msra.mxu0 0.0
      %593 = vmatpush.msra.mxu0 0.0
      %594 = vmatpush.msra.mxu0 %v290
      %595 = vmatpush.msra.mxu0 %v274
      %596 = vmatpush.msra.mxu0 %v258
      %597 = vmatpush.msra.mxu0 %v242
      %598 = vmatmul.f32.gmra.mxu0 %v300
      %v599 = vpop.f32.mrf.mxu0
      %v600 = vadd.f32 %v296, %v599
      %601 = vdwg.mxu0
      %602 = vmatpush.msra.mxu0 0.0
      %603 = vmatpush.msra.mxu0 0.0
      %604 = vmatpush.msra.mxu0 0.0
      %605 = vmatpush.msra.mxu0 0.0
      %606 = vmatpush.msra.mxu0 0.0
      %607 = vmatpush.msra.mxu0 0.0
      %608 = vmatpush.msra.mxu0 0.0
      %609 = vmatpush.msra.mxu0 0.0
      %610 = vmatpush.msra.mxu0 0.0
      %611 = vmatpush.msra.mxu0 0.0
      %612 = vmatpush.msra.mxu0 0.0
      %613 = vmatpush.msra.mxu0 0.0
      %614 = vmatpush.msra.mxu0 %v291
      %615 = vmatpush.msra.mxu0 %v275
      %616 = vmatpush.msra.mxu0 %v259
      %617 = vmatpush.msra.mxu0 %v243
      %618 = vmatmul.f32.gmra.mxu0 %v300
      %v619 = vpop.f32.mrf.mxu0
      %v620 = vadd.f32 %v296, %v619
      %621 = vdwg.mxu0
      %v622 = vtanh.pop %v320
      %v623 = vtanh.pop %v340
      %v624 = vtanh.pop %v360
      %v625 = vtanh.pop %v380
      %v626 = vtanh.pop %v400
      %v627 = vtanh.pop %v420
      %v628 = vtanh.pop %v440
      %v629 = vtanh.pop %v460
      %v630 = vtanh.pop %v480
      %v631 = vtanh.pop %v500
      %v632 = vtanh.pop %v520
      %v633 = vtanh.pop %v540
      %v634 = vtanh.pop %v560
      %v635 = vtanh.pop %v580
      %v636 = vtanh.pop %v600
      %v637 = vtanh.pop %v620
      %638 = vst [vmem:[%s225] sm:$0xff] %v622
      %639 = vst [vmem:[%s225 + $0x8] sm:$0xff] %v623
      %640 = vst [vmem:[%s225 + $0x10] sm:$0xff] %v624
      %641 = vst [vmem:[%s225 + $0x18] sm:$0xff] %v625
      %642 = vst [vmem:[%s225 + $0x20] sm:$0xff] %v626
      %643 = vst [vmem:[%s225 + $0x28] sm:$0xff] %v627
      %644 = vst [vmem:[%s225 + $0x30] sm:$0xff] %v628
      %645 = vst [vmem:[%s225 + $0x38] sm:$0xff] %v629
      %646 = vst [vmem:[%s225 + $0x40] sm:$0xff] %v630
      %647 = vst [vmem:[%s225 + $0x48] sm:$0xff] %v631
      %648 = vst [vmem:[%s225 + $0x50] sm:$0xff] %v632
      %649 = vst [vmem:[%s225 + $0x58] sm:$0xff] %v633
      %650 = vst [vmem:[%s225 + $0x60] sm:$0xff] %v634
      %651 = vst [vmem:[%s225 + $0x68] sm:$0xff] %v635
      %652 = vst [vmem:[%s225 + $0x70] sm:$0xff] %v636
      %653 = vst [vmem:[%s225 + $0x78] sm:$0xff] %v637
      %s654 = smul.u32 16, %s19
      %p655 = scmp.lt.s32.totalorder %s18, 3
      %s656 = scalar_select %p655, %s18, 3
      %p657 = scmp.lt.s32.totalorder %s654, 15
      %s658 = scalar_select %p657, %s654, 15
      %s659 = smul.addr %s656, 16
      %s660 = sadd.s32 %s658, %s659
      %s661 = smul.addr %s660, 8
      %s662 = scalar_lea.vmem %s3, %s661
      // Predicated region
      $region33: #{generator_forward.15} parent=31 // pred_check
        %p663 = pneg %p121
      $region34: #{generator_forward.15} parent=31 // pred_check_branch
        %665 = sbr.rel (%p663) target = $region36
      $region35: #{generator_forward.15} parent=31 // pred_region
        %s666 = smul.u32 16, %s19
      $region36: #{generator_forward.15} parent=31 // pred_fallthru
        _
    $region32: #{generator_forward.15} parent=5 // pred_fallthru
      _
    %p667 = scmp.le.s32.totalorder 2, %s9
    // Predicated region
    $region37: #{generator_forward.15} parent=5 // pred_check
      %p668 = pneg %p667
    $region38: #{generator_forward.15} parent=5 // pred_check_branch
      %670 = sbr.rel (%p668) target = $region40
    $region39: #{generator_forward.15} parent=5 // pred_region
      %s671 = ssub.s32 %s9, 2
      // Predicated region
      $region41: #{generator_forward.15} parent=39 // pred_check
        %p672 = pneg %p127
      $region42: #{generator_forward.15} parent=39 // pred_check_branch
        %674 = sbr.rel (%p672) target = $region44
      $region43: #{generator_forward.15} parent=39 // pred_region
        %s675 = smul.u32 16, %s21
        %p676 = scmp.lt.s32.totalorder %s20, 3
        %s677 = scalar_select %p676, %s20, 3
        %p678 = scmp.lt.s32.totalorder %s675, 15
        %s679 = scalar_select %p678, %s675, 15
        %s680 = smul.addr %s677, 16
        %s681 = sadd.s32 %s679, %s680
        %s682 = smul.addr %s681, 8
        %s683 = scalar_lea.vmem %s3, %s682
      $region44: #{generator_forward.15} parent=39 // pred_fallthru
        _
    $region40: #{generator_forward.15} parent=5 // pred_fallthru
      _
  $region6: #{generator_forward.15} parent=0 // loop_footer
    %s13 = sadd.s32 1, %s9
  $region7: #{generator_forward.15} parent=0 // loop_footer_branch
    %8 = sbr.rel target = $region3
  $region8: #{generator_forward.15} parent=0 // loop_exit
    _

</llo_original>
